<compile_context>
chip_gen: v7x
topology: tpu7x:2x2x1
jax: 0.10.0
libtpu: 0.0.40
codegen_flags: <defaults>
</compile_context>

<pallas_src>
import jax
import jax.numpy as jnp
from jax import lax
from jax.experimental import pallas as pl
from jax.experimental.pallas import tpu as pltpu

# ----------------- synthetic mini-BERT config -----------------
VOCAB = 100
TYPE_VOCAB = 2
MAX_POS = 16
HIDDEN = 32
N_LAYERS = 2
N_HEADS = 4
HEAD_DIM = HIDDEN // N_HEADS
INTERMEDIATE = 128
N_CLASSES = 2
CLS_PAD = 128          # lane-padded classifier output width (avoid 2-wide masked stores)
LN_EPS = 1e-12


# ----------------- fused forward kernel -----------------
def _bert_fwd_kernel(emb_ref, mask_ref, eg_ref, eb_ref,
                     qkv_w_ref, qkv_b_ref, ow_ref, ob_ref,
                     ag_ref, ab_ref, iw_ref, ib_ref,
                     fw_ref, fb_ref, og_ref, ogb_ref,
                     pw_ref, pb_ref, cw_ref, cb_ref,
                     out_ref):
    """Entire mini-BERT forward in one kernel. Everything lives in VMEM."""
    BS, H = emb_ref.shape          # [batch*seq, hidden]
    dh = H // N_HEADS

    def ln(x, g, b):
        mu = jnp.mean(x, axis=-1, keepdims=True)
        var = jnp.mean((x - mu) ** 2, axis=-1, keepdims=True)
        return (x - mu) * lax.rsqrt(var + LN_EPS) * g + b

    def gelu(x):
        # TODO(synk): exact erf-GELU (HF BERT) replaced with tanh approximation.
        c = 0.7978845608028654  # sqrt(2/pi)
        return 0.5 * x * (1.0 + jnp.tanh(c * (x + 0.044715 * x * x * x)))

    # embedding LayerNorm
    h = ln(emb_ref[...], eg_ref[...], eb_ref[...])
    mask = mask_ref[...]                          # block-diag additive mask [B*S, B*S]

    # ----- encoder layers (unrolled) -----
    for l in range(N_LAYERS):
        # fused QKV projection -> [B*S, 3H]; 1/sqrt(dh) already folded into Q weights
        qkv = jnp.dot(h, qkv_w_ref[l], preferred_element_type=jnp.float32) + qkv_b_ref[l]
        ow_l = ow_ref[l]                          # [H, H]

        # attention: all batches at once via the block-diagonal mask, heads unrolled.
        # Per-head context is folded straight into the output projection (no scratch).
        attn = None
        for hd in range(N_HEADS):
            c0 = hd * dh
            q_h = qkv[:, c0:c0 + dh]                     # [B*S, dh]
            k_h = qkv[:, H + c0:H + c0 + dh]             # [B*S, dh]
            v_h = qkv[:, 2 * H + c0:2 * H + c0 + dh]     # [B*S, dh]
            s = lax.dot_general(q_h, k_h, (((1,), (1,)), ((), ())),
                                preferred_element_type=jnp.float32)   # [B*S, B*S]
            s = s + mask
            s = s - jnp.max(s, axis=-1, keepdims=True)
            p = jnp.exp(s)
            p = p * pl.reciprocal(jnp.sum(p, axis=-1, keepdims=True), approx=True)
            ctx_h = jnp.dot(p, v_h, preferred_element_type=jnp.float32)  # [B*S, dh]
            part = jnp.dot(ctx_h, ow_l[c0:c0 + dh, :],
                           preferred_element_type=jnp.float32)           # [B*S, H]
            attn = part if attn is None else attn + part
        attn = attn + ob_ref[l]

        # residual + LayerNorm
        h = ln(attn + h, ag_ref[l], ab_ref[l])

        # FFN (GELU) + residual + LayerNorm (intermediate never leaves VMEM)
        inter = gelu(jnp.dot(h, iw_ref[l],
                             preferred_element_type=jnp.float32) + ib_ref[l])
        ff = jnp.dot(inter, fw_ref[l],
                     preferred_element_type=jnp.float32) + fb_ref[l]
        h = ln(ff + h, og_ref[l], ogb_ref[l])

    # ----- pooler (tanh) + classifier head, fused -----
    # Computed for every token row (CLS rows selected outside); classifier weights are
    # lane-padded to CLS_PAD so the final store is lane-dense / unmasked.
    pooled = jnp.tanh(jnp.dot(h, pw_ref[...],
                              preferred_element_type=jnp.float32) + pb_ref[...])
    # Dropout(0.2) on pooled output: identity at inference (eval mode).
    out_ref[...] = jnp.dot(pooled, cw_ref[...],
                           preferred_element_type=jnp.float32) + cb_ref[...]


# ----------------- parameter init (deterministic, synthetic, pre-packed) -----------------
def init_params(key):
    # TODO(synk): BertModel.from_pretrained('bert-base-uncased') weights cannot be loaded;
    # replaced by a deterministic synthetic mini-BERT of the same structure.
    def nrm(k, shape):
        return jax.random.normal(k, shape, jnp.float32) * 0.02

    keys = iter(jax.random.split(key, 64))
    scale = 1.0 / (HEAD_DIM ** 0.5)

    qkv_w, qkv_b, o_w, o_b = [], [], [], []
    a_g, a_b, i_w, i_b, f_w, f_b, o_g, o_gb = [], [], [], [], [], [], [], []
    for _ in range(N_LAYERS):
        qw = nrm(next(keys), (HIDDEN, HIDDEN)) * scale   # fold attention scale into Q
        kw = nrm(next(keys), (HIDDEN, HIDDEN))
        vw = nrm(next(keys), (HIDDEN, HIDDEN))
        qkv_w.append(jnp.concatenate([qw, kw, vw], axis=1))          # [H, 3H]
        qkv_b.append(jnp.zeros((1, 3 * HIDDEN), jnp.float32))
        o_w.append(nrm(next(keys), (HIDDEN, HIDDEN)))
        o_b.append(jnp.zeros((1, HIDDEN), jnp.float32))
        a_g.append(jnp.ones((1, HIDDEN), jnp.float32))
        a_b.append(jnp.zeros((1, HIDDEN), jnp.float32))
        i_w.append(nrm(next(keys), (HIDDEN, INTERMEDIATE)))
        i_b.append(jnp.zeros((1, INTERMEDIATE), jnp.float32))
        f_w.append(nrm(next(keys), (INTERMEDIATE, HIDDEN)))
        f_b.append(jnp.zeros((1, HIDDEN), jnp.float32))
        o_g.append(jnp.ones((1, HIDDEN), jnp.float32))
        o_gb.append(jnp.zeros((1, HIDDEN), jnp.float32))

    cls_w = nrm(next(keys), (HIDDEN, N_CLASSES))
    cls_b = jnp.zeros((N_CLASSES,), jnp.float32)
    cls_w_pad = jnp.zeros((HIDDEN, CLS_PAD), jnp.float32).at[:, :N_CLASSES].set(cls_w)
    cls_b_pad = jnp.zeros((1, CLS_PAD), jnp.float32).at[:, :N_CLASSES].set(cls_b)

    return {
        "word_emb": nrm(next(keys), (VOCAB, HIDDEN)),
        "pos_emb": nrm(next(keys), (MAX_POS, HIDDEN)),
        "type_emb": nrm(next(keys), (TYPE_VOCAB, HIDDEN)),
        "emb_ln_g": jnp.ones((1, HIDDEN), jnp.float32),
        "emb_ln_b": jnp.zeros((1, HIDDEN), jnp.float32),
        "qkv_w": jnp.stack(qkv_w), "qkv_b": jnp.stack(qkv_b),
        "o_w": jnp.stack(o_w), "o_b": jnp.stack(o_b),
        "attn_ln_g": jnp.stack(a_g), "attn_ln_b": jnp.stack(a_b),
        "i_w": jnp.stack(i_w), "i_b": jnp.stack(i_b),
        "f_w": jnp.stack(f_w), "f_b": jnp.stack(f_b),
        "out_ln_g": jnp.stack(o_g), "out_ln_b": jnp.stack(o_gb),
        "pool_w": nrm(next(keys), (HIDDEN, HIDDEN)),
        "pool_b": jnp.zeros((1, HIDDEN), jnp.float32),
        "cls_w_pad": cls_w_pad, "cls_b_pad": cls_b_pad,
    }


# ----------------- forward pass (Pallas) -----------------
def classifier_forward(params, input_ids, attention_mask):
    B, S = input_ids.shape
    BS = B * S

    # embeddings: table gathers stay in plain JAX (glue), sum fed to the fused kernel
    pos_ids = jnp.arange(S, dtype=jnp.int32)
    type_ids = jnp.zeros((B, S), jnp.int32)
    emb = (jnp.take(params["word_emb"], input_ids, axis=0)
           + jnp.take(params["pos_emb"], pos_ids, axis=0)[None, :, :]
           + jnp.take(params["type_emb"], type_ids, axis=0))
    emb = emb.reshape(BS, HIDDEN)

    # block-diagonal extended additive attention mask (BERT convention):
    #  within a batch block -> (1 - mask[key]) * -1e4 ; across batches -> -1e4
    add_mask = (1.0 - attention_mask.astype(jnp.float32)) * -10000.0   # [B, S]
    key_mask = jnp.broadcast_to(add_mask.reshape(1, BS), (BS, BS))
    block = jnp.kron(jnp.eye(B, dtype=jnp.float32), jnp.ones((S, S), jnp.float32))
    full_mask = jnp.where(block > 0, key_mask, jnp.float32(-10000.0))   # [BS, BS]

    out = pl.pallas_call(
        _bert_fwd_kernel,
        out_shape=jax.ShapeDtypeStruct((BS, CLS_PAD), jnp.float32),
    )(emb, full_mask,
      params["emb_ln_g"], params["emb_ln_b"],
      params["qkv_w"], params["qkv_b"], params["o_w"], params["o_b"],
      params["attn_ln_g"], params["attn_ln_b"],
      params["i_w"], params["i_b"], params["f_w"], params["f_b"],
      params["out_ln_g"], params["out_ln_b"],
      params["pool_w"], params["pool_b"],
      params["cls_w_pad"], params["cls_b_pad"])

    # logits = classifier(dropout(pooled([CLS]))) -> take CLS rows, first 2 lanes
    return out.reshape(B, S, CLS_PAD)[:, 0, :N_CLASSES]


# ----------------- pure-JAX reference (same synthetic params) -----------------
def classifier_forward_ref(params, input_ids, attention_mask):
    B, S = input_ids.shape
    hp = lax.Precision.HIGHEST

    def ln(x, g, b):
        mu = jnp.mean(x, axis=-1, keepdims=True)
        var = jnp.mean((x - mu) ** 2, axis=-1, keepdims=True)
        return (x - mu) * lax.rsqrt(var + LN_EPS) * g + b

    def gelu(x):
        c = 0.7978845608028654
        return 0.5 * x * (1.0 + jnp.tanh(c * (x + 0.044715 * x * x * x)))

    pos_ids = jnp.arange(S, dtype=jnp.int32)
    type_ids = jnp.zeros((B, S), jnp.int32)
    emb = (params["word_emb"][input_ids]
           + params["pos_emb"][pos_ids][None, :, :]
           + params["type_emb"][type_ids])
    h = ln(emb, params["emb_ln_g"], params["emb_ln_b"])                    # [B,S,H]
    add_mask = (1.0 - attention_mask.astype(jnp.float32)) * -10000.0       # [B,S]

    for l in range(N_LAYERS):
        qkv = jnp.dot(h, params["qkv_w"][l], precision=hp) + params["qkv_b"][l]
        q = qkv[..., :HIDDEN].reshape(B, S, N_HEADS, HEAD_DIM)
        k = qkv[..., HIDDEN:2 * HIDDEN].reshape(B, S, N_HEADS, HEAD_DIM)
        v = qkv[..., 2 * HIDDEN:].reshape(B, S, N_HEADS, HEAD_DIM)
        s = jnp.einsum("bqhd,bkhd->bhqk", q, k, precision=hp)
        s = s + add_mask[:, None, None, :]
        p = jax.nn.softmax(s, axis=-1)
        ctx = jnp.einsum("bhqk,bkhd->bqhd", p, v, precision=hp).reshape(B, S, HIDDEN)
        attn = jnp.dot(ctx, params["o_w"][l], precision=hp) + params["o_b"][l]
        h = ln(attn + h, params["attn_ln_g"][l], params["attn_ln_b"][l])
        inter = gelu(jnp.dot(h, params["i_w"][l], precision=hp) + params["i_b"][l])
        ff = jnp.dot(inter, params["f_w"][l], precision=hp) + params["f_b"][l]
        h = ln(ff + h, params["out_ln_g"][l], params["out_ln_b"][l])

    pooled = jnp.tanh(jnp.dot(h[:, 0, :], params["pool_w"], precision=hp)
                      + params["pool_b"])
    logits = (jnp.dot(pooled, params["cls_w_pad"][:, :N_CLASSES], precision=hp)
              + params["cls_b_pad"][0, :N_CLASSES])
    return logits


if __name__ == "__main__":
    key = jax.random.PRNGKey(0)
    pkey, dkey = jax.random.split(key)

    params = init_params(pkey)

    B, S = 2, 8
    input_ids = jax.random.randint(dkey, (B, S), 0, VOCAB, dtype=jnp.int32)
    attention_mask = jnp.array([[1, 1, 1, 1, 1, 1, 1, 1],
                                [1, 1, 1, 1, 1, 0, 0, 0]], dtype=jnp.int32)

    fwd = jax.jit(classifier_forward)
    logits = fwd(params, input_ids, attention_mask)
    jax.block_until_ready(logits)

    ref = classifier_forward_ref(params, input_ids, attention_mask)
    assert logits.shape == (B, N_CLASSES) and logits.dtype == jnp.float32
    assert jnp.allclose(logits, ref, rtol=2e-2, atol=2e-3), (logits, ref)
    print("KERNEL_OK")
</pallas_src>

<mosaic_0001>
module attributes {stable_mosaic.version = 11 : i64} {
  func.func @_bert_fwd_kernel(%arg0: memref<16x32xf32, #tpu.memory_space<vmem>>, %arg1: memref<16x16xf32, #tpu.memory_space<vmem>>, %arg2: memref<1x32xf32, #tpu.memory_space<vmem>>, %arg3: memref<1x32xf32, #tpu.memory_space<vmem>>, %arg4: memref<2x32x96xf32, #tpu.memory_space<vmem>>, %arg5: memref<2x1x96xf32, #tpu.memory_space<vmem>>, %arg6: memref<2x32x32xf32, #tpu.memory_space<vmem>>, %arg7: memref<2x1x32xf32, #tpu.memory_space<vmem>>, %arg8: memref<2x1x32xf32, #tpu.memory_space<vmem>>, %arg9: memref<2x1x32xf32, #tpu.memory_space<vmem>>, %arg10: memref<2x32x128xf32, #tpu.memory_space<vmem>>, %arg11: memref<2x1x128xf32, #tpu.memory_space<vmem>>, %arg12: memref<2x128x32xf32, #tpu.memory_space<vmem>>, %arg13: memref<2x1x32xf32, #tpu.memory_space<vmem>>, %arg14: memref<2x1x32xf32, #tpu.memory_space<vmem>>, %arg15: memref<2x1x32xf32, #tpu.memory_space<vmem>>, %arg16: memref<32x32xf32, #tpu.memory_space<vmem>>, %arg17: memref<1x32xf32, #tpu.memory_space<vmem>>, %arg18: memref<32x128xf32, #tpu.memory_space<vmem>>, %arg19: memref<1x128xf32, #tpu.memory_space<vmem>>, %arg20: memref<16x128xf32, #tpu.memory_space<vmem>>) attributes {dimension_semantics = [], scalar_prefetch = 0 : i64, scratch_operands = 0 : i64, tpu.core_type = #tpu.core_type<tc>} {
    %c0 = arith.constant 0 : index
    %c0_0 = arith.constant 0 : index
    %0 = vector.load %arg0[%c0, %c0_0] : memref<16x32xf32, #tpu.memory_space<vmem>>, vector<16x32xf32>
    %c0_1 = arith.constant 0 : index
    %c0_2 = arith.constant 0 : index
    %1 = vector.load %arg2[%c0_1, %c0_2] : memref<1x32xf32, #tpu.memory_space<vmem>>, vector<1x32xf32>
    %c0_3 = arith.constant 0 : index
    %c0_4 = arith.constant 0 : index
    %2 = vector.load %arg3[%c0_3, %c0_4] : memref<1x32xf32, #tpu.memory_space<vmem>>, vector<1x32xf32>
    %cst = arith.constant dense<0.000000e+00> : vector<16xf32>
    %3 = vector.multi_reduction <add>, %0, %cst [1] : vector<16x32xf32> to vector<16xf32>
    %4 = vector.shape_cast %3 : vector<16xf32> to vector<16x1xf32>
    %cst_5 = arith.constant 3.200000e+01 : f32
    %5 = vector.broadcast %cst_5 : f32 to vector<16x1xf32>
    %6 = arith.divf %4, %5 : vector<16x1xf32>
    %7 = vector.broadcast %6 : vector<16x1xf32> to vector<16x32xf32>
    %8 = arith.subf %0, %7 : vector<16x32xf32>
    %9 = arith.mulf %8, %8 : vector<16x32xf32>
    %cst_6 = arith.constant dense<0.000000e+00> : vector<16xf32>
    %10 = vector.multi_reduction <add>, %9, %cst_6 [1] : vector<16x32xf32> to vector<16xf32>
    %11 = vector.shape_cast %10 : vector<16xf32> to vector<16x1xf32>
    %cst_7 = arith.constant 3.200000e+01 : f32
    %12 = vector.broadcast %cst_7 : f32 to vector<16x1xf32>
    %13 = arith.divf %11, %12 : vector<16x1xf32>
    %14 = vector.broadcast %6 : vector<16x1xf32> to vector<16x32xf32>
    %15 = arith.subf %0, %14 : vector<16x32xf32>
    %cst_8 = arith.constant 9.99999996E-13 : f32
    %16 = vector.broadcast %cst_8 : f32 to vector<16x1xf32>
    %17 = arith.addf %13, %16 : vector<16x1xf32>
    %18 = math.rsqrt %17 : vector<16x1xf32>
    %19 = vector.broadcast %18 : vector<16x1xf32> to vector<16x32xf32>
    %20 = arith.mulf %15, %19 : vector<16x32xf32>
    %21 = vector.broadcast %1 : vector<1x32xf32> to vector<16x32xf32>
    %22 = arith.mulf %20, %21 : vector<16x32xf32>
    %23 = vector.broadcast %2 : vector<1x32xf32> to vector<16x32xf32>
    %24 = arith.addf %22, %23 : vector<16x32xf32>
    %c0_9 = arith.constant 0 : index
    %c0_10 = arith.constant 0 : index
    %25 = vector.load %arg1[%c0_9, %c0_10] : memref<16x16xf32, #tpu.memory_space<vmem>>, vector<16x16xf32>
    %c0_11 = arith.constant 0 : index
    %c0_12 = arith.constant 0 : index
    %c0_13 = arith.constant 0 : index
    %26 = vector.load %arg4[%c0_11, %c0_12, %c0_13] : memref<2x32x96xf32, #tpu.memory_space<vmem>>, vector<1x32x96xf32>
    %27 = vector.shape_cast %26 : vector<1x32x96xf32> to vector<32x96xf32>
    %cst_14 = arith.constant dense<0.000000e+00> : vector<16x96xf32>
    %28 = tpu.matmul %24, %27, %cst_14 {dimension_numbers = #tpu.dot_dimension_numbers<[1], [0], [0], [1], [0, 0, 1, 1], [], []>} : vector<16x32xf32>, vector<32x96xf32>, vector<16x96xf32> -> vector<16x96xf32>
    %c0_15 = arith.constant 0 : index
    %c0_16 = arith.constant 0 : index
    %c0_17 = arith.constant 0 : index
    %29 = vector.load %arg5[%c0_15, %c0_16, %c0_17] : memref<2x1x96xf32, #tpu.memory_space<vmem>>, vector<1x1x96xf32>
    %30 = vector.shape_cast %29 : vector<1x1x96xf32> to vector<1x96xf32>
    %31 = vector.broadcast %30 : vector<1x96xf32> to vector<16x96xf32>
    %32 = arith.addf %28, %31 : vector<16x96xf32>
    %c0_18 = arith.constant 0 : index
    %c0_19 = arith.constant 0 : index
    %c0_20 = arith.constant 0 : index
    %33 = vector.load %arg6[%c0_18, %c0_19, %c0_20] : memref<2x32x32xf32, #tpu.memory_space<vmem>>, vector<1x32x32xf32>
    %34 = vector.shape_cast %33 : vector<1x32x32xf32> to vector<32x32xf32>
    %35 = vector.extract_strided_slice %32 {offsets = [0, 0], sizes = [16, 8], strides = [1, 1]} : vector<16x96xf32> to vector<16x8xf32>
    %36 = vector.extract_strided_slice %32 {offsets = [0, 32], sizes = [16, 8], strides = [1, 1]} : vector<16x96xf32> to vector<16x8xf32>
    %37 = vector.extract_strided_slice %32 {offsets = [0, 64], sizes = [16, 8], strides = [1, 1]} : vector<16x96xf32> to vector<16x8xf32>
    %cst_21 = arith.constant dense<0.000000e+00> : vector<16x16xf32>
    %38 = tpu.matmul %35, %36, %cst_21 {dimension_numbers = #tpu.dot_dimension_numbers<[1], [1], [0], [0], [0, 0, 1, 0], [], []>} : vector<16x8xf32>, vector<16x8xf32>, vector<16x16xf32> -> vector<16x16xf32>
    %39 = arith.addf %38, %25 : vector<16x16xf32>
    %cst_22 = arith.constant dense<0xFF800000> : vector<16xf32>
    %40 = vector.multi_reduction <maximumf>, %39, %cst_22 [1] : vector<16x16xf32> to vector<16xf32>
    %41 = vector.shape_cast %40 : vector<16xf32> to vector<16x1xf32>
    %42 = vector.broadcast %41 : vector<16x1xf32> to vector<16x16xf32>
    %43 = arith.subf %39, %42 : vector<16x16xf32>
    %44 = math.exp %43 : vector<16x16xf32>
    %cst_23 = arith.constant dense<0.000000e+00> : vector<16xf32>
    %45 = vector.multi_reduction <add>, %44, %cst_23 [1] : vector<16x16xf32> to vector<16xf32>
    %46 = vector.shape_cast %45 : vector<16xf32> to vector<16x1xf32>
    %47 = tpu.reciprocal %46 {approx = true} : vector<16x1xf32> -> vector<16x1xf32>
    %48 = vector.broadcast %47 : vector<16x1xf32> to vector<16x16xf32>
    %49 = arith.mulf %44, %48 : vector<16x16xf32>
    %cst_24 = arith.constant dense<0.000000e+00> : vector<16x8xf32>
    %50 = tpu.matmul %49, %37, %cst_24 {dimension_numbers = #tpu.dot_dimension_numbers<[1], [0], [0], [1], [0, 0, 1, 1], [], []>} : vector<16x16xf32>, vector<16x8xf32>, vector<16x8xf32> -> vector<16x8xf32>
    %51 = vector.extract_strided_slice %34 {offsets = [0, 0], sizes = [8, 32], strides = [1, 1]} : vector<32x32xf32> to vector<8x32xf32>
    %cst_25 = arith.constant dense<0.000000e+00> : vector<16x32xf32>
    %52 = tpu.matmul %50, %51, %cst_25 {dimension_numbers = #tpu.dot_dimension_numbers<[1], [0], [0], [1], [0, 0, 1, 1], [], []>} : vector<16x8xf32>, vector<8x32xf32>, vector<16x32xf32> -> vector<16x32xf32>
    %53 = vector.extract_strided_slice %32 {offsets = [0, 8], sizes = [16, 8], strides = [1, 1]} : vector<16x96xf32> to vector<16x8xf32>
    %54 = vector.extract_strided_slice %32 {offsets = [0, 40], sizes = [16, 8], strides = [1, 1]} : vector<16x96xf32> to vector<16x8xf32>
    %55 = vector.extract_strided_slice %32 {offsets = [0, 72], sizes = [16, 8], strides = [1, 1]} : vector<16x96xf32> to vector<16x8xf32>
    %cst_26 = arith.constant dense<0.000000e+00> : vector<16x16xf32>
    %56 = tpu.matmul %53, %54, %cst_26 {dimension_numbers = #tpu.dot_dimension_numbers<[1], [1], [0], [0], [0, 0, 1, 0], [], []>} : vector<16x8xf32>, vector<16x8xf32>, vector<16x16xf32> -> vector<16x16xf32>
    %57 = arith.addf %56, %25 : vector<16x16xf32>
    %cst_27 = arith.constant dense<0xFF800000> : vector<16xf32>
    %58 = vector.multi_reduction <maximumf>, %57, %cst_27 [1] : vector<16x16xf32> to vector<16xf32>
    %59 = vector.shape_cast %58 : vector<16xf32> to vector<16x1xf32>
    %60 = vector.broadcast %59 : vector<16x1xf32> to vector<16x16xf32>
    %61 = arith.subf %57, %60 : vector<16x16xf32>
    %62 = math.exp %61 : vector<16x16xf32>
    %cst_28 = arith.constant dense<0.000000e+00> : vector<16xf32>
    %63 = vector.multi_reduction <add>, %62, %cst_28 [1] : vector<16x16xf32> to vector<16xf32>
    %64 = vector.shape_cast %63 : vector<16xf32> to vector<16x1xf32>
    %65 = tpu.reciprocal %64 {approx = true} : vector<16x1xf32> -> vector<16x1xf32>
    %66 = vector.broadcast %65 : vector<16x1xf32> to vector<16x16xf32>
    %67 = arith.mulf %62, %66 : vector<16x16xf32>
    %cst_29 = arith.constant dense<0.000000e+00> : vector<16x8xf32>
    %68 = tpu.matmul %67, %55, %cst_29 {dimension_numbers = #tpu.dot_dimension_numbers<[1], [0], [0], [1], [0, 0, 1, 1], [], []>} : vector<16x16xf32>, vector<16x8xf32>, vector<16x8xf32> -> vector<16x8xf32>
    %69 = vector.extract_strided_slice %34 {offsets = [8, 0], sizes = [8, 32], strides = [1, 1]} : vector<32x32xf32> to vector<8x32xf32>
    %cst_30 = arith.constant dense<0.000000e+00> : vector<16x32xf32>
    %70 = tpu.matmul %68, %69, %cst_30 {dimension_numbers = #tpu.dot_dimension_numbers<[1], [0], [0], [1], [0, 0, 1, 1], [], []>} : vector<16x8xf32>, vector<8x32xf32>, vector<16x32xf32> -> vector<16x32xf32>
    %71 = arith.addf %52, %70 : vector<16x32xf32>
    %72 = vector.extract_strided_slice %32 {offsets = [0, 16], sizes = [16, 8], strides = [1, 1]} : vector<16x96xf32> to vector<16x8xf32>
    %73 = vector.extract_strided_slice %32 {offsets = [0, 48], sizes = [16, 8], strides = [1, 1]} : vector<16x96xf32> to vector<16x8xf32>
    %74 = vector.extract_strided_slice %32 {offsets = [0, 80], sizes = [16, 8], strides = [1, 1]} : vector<16x96xf32> to vector<16x8xf32>
    %cst_31 = arith.constant dense<0.000000e+00> : vector<16x16xf32>
    %75 = tpu.matmul %72, %73, %cst_31 {dimension_numbers = #tpu.dot_dimension_numbers<[1], [1], [0], [0], [0, 0, 1, 0], [], []>} : vector<16x8xf32>, vector<16x8xf32>, vector<16x16xf32> -> vector<16x16xf32>
    %76 = arith.addf %75, %25 : vector<16x16xf32>
    %cst_32 = arith.constant dense<0xFF800000> : vector<16xf32>
    %77 = vector.multi_reduction <maximumf>, %76, %cst_32 [1] : vector<16x16xf32> to vector<16xf32>
    %78 = vector.shape_cast %77 : vector<16xf32> to vector<16x1xf32>
    %79 = vector.broadcast %78 : vector<16x1xf32> to vector<16x16xf32>
    %80 = arith.subf %76, %79 : vector<16x16xf32>
    %81 = math.exp %80 : vector<16x16xf32>
    %cst_33 = arith.constant dense<0.000000e+00> : vector<16xf32>
    %82 = vector.multi_reduction <add>, %81, %cst_33 [1] : vector<16x16xf32> to vector<16xf32>
    %83 = vector.shape_cast %82 : vector<16xf32> to vector<16x1xf32>
    %84 = tpu.reciprocal %83 {approx = true} : vector<16x1xf32> -> vector<16x1xf32>
    %85 = vector.broadcast %84 : vector<16x1xf32> to vector<16x16xf32>
    %86 = arith.mulf %81, %85 : vector<16x16xf32>
    %cst_34 = arith.constant dense<0.000000e+00> : vector<16x8xf32>
    %87 = tpu.matmul %86, %74, %cst_34 {dimension_numbers = #tpu.dot_dimension_numbers<[1], [0], [0], [1], [0, 0, 1, 1], [], []>} : vector<16x16xf32>, vector<16x8xf32>, vector<16x8xf32> -> vector<16x8xf32>
    %88 = vector.extract_strided_slice %34 {offsets = [16, 0], sizes = [8, 32], strides = [1, 1]} : vector<32x32xf32> to vector<8x32xf32>
    %cst_35 = arith.constant dense<0.000000e+00> : vector<16x32xf32>
    %89 = tpu.matmul %87, %88, %cst_35 {dimension_numbers = #tpu.dot_dimension_numbers<[1], [0], [0], [1], [0, 0, 1, 1], [], []>} : vector<16x8xf32>, vector<8x32xf32>, vector<16x32xf32> -> vector<16x32xf32>
    %90 = arith.addf %71, %89 : vector<16x32xf32>
    %91 = vector.extract_strided_slice %32 {offsets = [0, 24], sizes = [16, 8], strides = [1, 1]} : vector<16x96xf32> to vector<16x8xf32>
    %92 = vector.extract_strided_slice %32 {offsets = [0, 56], sizes = [16, 8], strides = [1, 1]} : vector<16x96xf32> to vector<16x8xf32>
    %93 = vector.extract_strided_slice %32 {offsets = [0, 88], sizes = [16, 8], strides = [1, 1]} : vector<16x96xf32> to vector<16x8xf32>
    %cst_36 = arith.constant dense<0.000000e+00> : vector<16x16xf32>
    %94 = tpu.matmul %91, %92, %cst_36 {dimension_numbers = #tpu.dot_dimension_numbers<[1], [1], [0], [0], [0, 0, 1, 0], [], []>} : vector<16x8xf32>, vector<16x8xf32>, vector<16x16xf32> -> vector<16x16xf32>
    %95 = arith.addf %94, %25 : vector<16x16xf32>
    %cst_37 = arith.constant dense<0xFF800000> : vector<16xf32>
    %96 = vector.multi_reduction <maximumf>, %95, %cst_37 [1] : vector<16x16xf32> to vector<16xf32>
    %97 = vector.shape_cast %96 : vector<16xf32> to vector<16x1xf32>
    %98 = vector.broadcast %97 : vector<16x1xf32> to vector<16x16xf32>
    %99 = arith.subf %95, %98 : vector<16x16xf32>
    %100 = math.exp %99 : vector<16x16xf32>
    %cst_38 = arith.constant dense<0.000000e+00> : vector<16xf32>
    %101 = vector.multi_reduction <add>, %100, %cst_38 [1] : vector<16x16xf32> to vector<16xf32>
    %102 = vector.shape_cast %101 : vector<16xf32> to vector<16x1xf32>
    %103 = tpu.reciprocal %102 {approx = true} : vector<16x1xf32> -> vector<16x1xf32>
    %104 = vector.broadcast %103 : vector<16x1xf32> to vector<16x16xf32>
    %105 = arith.mulf %100, %104 : vector<16x16xf32>
    %cst_39 = arith.constant dense<0.000000e+00> : vector<16x8xf32>
    %106 = tpu.matmul %105, %93, %cst_39 {dimension_numbers = #tpu.dot_dimension_numbers<[1], [0], [0], [1], [0, 0, 1, 1], [], []>} : vector<16x16xf32>, vector<16x8xf32>, vector<16x8xf32> -> vector<16x8xf32>
    %107 = vector.extract_strided_slice %34 {offsets = [24, 0], sizes = [8, 32], strides = [1, 1]} : vector<32x32xf32> to vector<8x32xf32>
    %cst_40 = arith.constant dense<0.000000e+00> : vector<16x32xf32>
    %108 = tpu.matmul %106, %107, %cst_40 {dimension_numbers = #tpu.dot_dimension_numbers<[1], [0], [0], [1], [0, 0, 1, 1], [], []>} : vector<16x8xf32>, vector<8x32xf32>, vector<16x32xf32> -> vector<16x32xf32>
    %109 = arith.addf %90, %108 : vector<16x32xf32>
    %c0_41 = arith.constant 0 : index
    %c0_42 = arith.constant 0 : index
    %c0_43 = arith.constant 0 : index
    %110 = vector.load %arg7[%c0_41, %c0_42, %c0_43] : memref<2x1x32xf32, #tpu.memory_space<vmem>>, vector<1x1x32xf32>
    %111 = vector.shape_cast %110 : vector<1x1x32xf32> to vector<1x32xf32>
    %112 = vector.broadcast %111 : vector<1x32xf32> to vector<16x32xf32>
    %113 = arith.addf %109, %112 : vector<16x32xf32>
    %114 = arith.addf %113, %24 : vector<16x32xf32>
    %c0_44 = arith.constant 0 : index
    %c0_45 = arith.constant 0 : index
    %c0_46 = arith.constant 0 : index
    %115 = vector.load %arg8[%c0_44, %c0_45, %c0_46] : memref<2x1x32xf32, #tpu.memory_space<vmem>>, vector<1x1x32xf32>
    %116 = vector.shape_cast %115 : vector<1x1x32xf32> to vector<1x32xf32>
    %c0_47 = arith.constant 0 : index
    %c0_48 = arith.constant 0 : index
    %c0_49 = arith.constant 0 : index
    %117 = vector.load %arg9[%c0_47, %c0_48, %c0_49] : memref<2x1x32xf32, #tpu.memory_space<vmem>>, vector<1x1x32xf32>
    %118 = vector.shape_cast %117 : vector<1x1x32xf32> to vector<1x32xf32>
    %cst_50 = arith.constant dense<0.000000e+00> : vector<16xf32>
    %119 = vector.multi_reduction <add>, %114, %cst_50 [1] : vector<16x32xf32> to vector<16xf32>
    %120 = vector.shape_cast %119 : vector<16xf32> to vector<16x1xf32>
    %cst_51 = arith.constant 3.200000e+01 : f32
    %121 = vector.broadcast %cst_51 : f32 to vector<16x1xf32>
    %122 = arith.divf %120, %121 : vector<16x1xf32>
    %123 = vector.broadcast %122 : vector<16x1xf32> to vector<16x32xf32>
    %124 = arith.subf %114, %123 : vector<16x32xf32>
    %125 = arith.mulf %124, %124 : vector<16x32xf32>
    %cst_52 = arith.constant dense<0.000000e+00> : vector<16xf32>
    %126 = vector.multi_reduction <add>, %125, %cst_52 [1] : vector<16x32xf32> to vector<16xf32>
    %127 = vector.shape_cast %126 : vector<16xf32> to vector<16x1xf32>
    %cst_53 = arith.constant 3.200000e+01 : f32
    %128 = vector.broadcast %cst_53 : f32 to vector<16x1xf32>
    %129 = arith.divf %127, %128 : vector<16x1xf32>
    %130 = vector.broadcast %122 : vector<16x1xf32> to vector<16x32xf32>
    %131 = arith.subf %114, %130 : vector<16x32xf32>
    %cst_54 = arith.constant 9.99999996E-13 : f32
    %132 = vector.broadcast %cst_54 : f32 to vector<16x1xf32>
    %133 = arith.addf %129, %132 : vector<16x1xf32>
    %134 = math.rsqrt %133 : vector<16x1xf32>
    %135 = vector.broadcast %134 : vector<16x1xf32> to vector<16x32xf32>
    %136 = arith.mulf %131, %135 : vector<16x32xf32>
    %137 = vector.broadcast %116 : vector<1x32xf32> to vector<16x32xf32>
    %138 = arith.mulf %136, %137 : vector<16x32xf32>
    %139 = vector.broadcast %118 : vector<1x32xf32> to vector<16x32xf32>
    %140 = arith.addf %138, %139 : vector<16x32xf32>
    %c0_55 = arith.constant 0 : index
    %c0_56 = arith.constant 0 : index
    %c0_57 = arith.constant 0 : index
    %141 = vector.load %arg10[%c0_55, %c0_56, %c0_57] : memref<2x32x128xf32, #tpu.memory_space<vmem>>, vector<1x32x128xf32>
    %142 = vector.shape_cast %141 : vector<1x32x128xf32> to vector<32x128xf32>
    %cst_58 = arith.constant dense<0.000000e+00> : vector<16x128xf32>
    %143 = tpu.matmul %140, %142, %cst_58 {dimension_numbers = #tpu.dot_dimension_numbers<[1], [0], [0], [1], [0, 0, 1, 1], [], []>} : vector<16x32xf32>, vector<32x128xf32>, vector<16x128xf32> -> vector<16x128xf32>
    %c0_59 = arith.constant 0 : index
    %c0_60 = arith.constant 0 : index
    %c0_61 = arith.constant 0 : index
    %144 = vector.load %arg11[%c0_59, %c0_60, %c0_61] : memref<2x1x128xf32, #tpu.memory_space<vmem>>, vector<1x1x128xf32>
    %145 = vector.shape_cast %144 : vector<1x1x128xf32> to vector<1x128xf32>
    %146 = vector.broadcast %145 : vector<1x128xf32> to vector<16x128xf32>
    %147 = arith.addf %143, %146 : vector<16x128xf32>
    %cst_62 = arith.constant 5.000000e-01 : f32
    %148 = vector.broadcast %cst_62 : f32 to vector<16x128xf32>
    %149 = arith.mulf %148, %147 : vector<16x128xf32>
    %cst_63 = arith.constant 4.471500e-02 : f32
    %150 = vector.broadcast %cst_63 : f32 to vector<16x128xf32>
    %151 = arith.mulf %150, %147 : vector<16x128xf32>
    %152 = arith.mulf %151, %147 : vector<16x128xf32>
    %153 = arith.mulf %152, %147 : vector<16x128xf32>
    %154 = arith.addf %147, %153 : vector<16x128xf32>
    %cst_64 = arith.constant 0.797884583 : f32
    %155 = vector.broadcast %cst_64 : f32 to vector<16x128xf32>
    %156 = arith.mulf %155, %154 : vector<16x128xf32>
    %157 = math.tanh %156 : vector<16x128xf32>
    %cst_65 = arith.constant 1.000000e+00 : f32
    %158 = vector.broadcast %cst_65 : f32 to vector<16x128xf32>
    %159 = arith.addf %158, %157 : vector<16x128xf32>
    %160 = arith.mulf %149, %159 : vector<16x128xf32>
    %c0_66 = arith.constant 0 : index
    %c0_67 = arith.constant 0 : index
    %c0_68 = arith.constant 0 : index
    %161 = vector.load %arg12[%c0_66, %c0_67, %c0_68] : memref<2x128x32xf32, #tpu.memory_space<vmem>>, vector<1x128x32xf32>
    %162 = vector.shape_cast %161 : vector<1x128x32xf32> to vector<128x32xf32>
    %cst_69 = arith.constant dense<0.000000e+00> : vector<16x32xf32>
    %163 = tpu.matmul %160, %162, %cst_69 {dimension_numbers = #tpu.dot_dimension_numbers<[1], [0], [0], [1], [0, 0, 1, 1], [], []>} : vector<16x128xf32>, vector<128x32xf32>, vector<16x32xf32> -> vector<16x32xf32>
    %c0_70 = arith.constant 0 : index
    %c0_71 = arith.constant 0 : index
    %c0_72 = arith.constant 0 : index
    %164 = vector.load %arg13[%c0_70, %c0_71, %c0_72] : memref<2x1x32xf32, #tpu.memory_space<vmem>>, vector<1x1x32xf32>
    %165 = vector.shape_cast %164 : vector<1x1x32xf32> to vector<1x32xf32>
    %166 = vector.broadcast %165 : vector<1x32xf32> to vector<16x32xf32>
    %167 = arith.addf %163, %166 : vector<16x32xf32>
    %168 = arith.addf %167, %140 : vector<16x32xf32>
    %c0_73 = arith.constant 0 : index
    %c0_74 = arith.constant 0 : index
    %c0_75 = arith.constant 0 : index
    %169 = vector.load %arg14[%c0_73, %c0_74, %c0_75] : memref<2x1x32xf32, #tpu.memory_space<vmem>>, vector<1x1x32xf32>
    %170 = vector.shape_cast %169 : vector<1x1x32xf32> to vector<1x32xf32>
    %c0_76 = arith.constant 0 : index
    %c0_77 = arith.constant 0 : index
    %c0_78 = arith.constant 0 : index
    %171 = vector.load %arg15[%c0_76, %c0_77, %c0_78] : memref<2x1x32xf32, #tpu.memory_space<vmem>>, vector<1x1x32xf32>
    %172 = vector.shape_cast %171 : vector<1x1x32xf32> to vector<1x32xf32>
    %cst_79 = arith.constant dense<0.000000e+00> : vector<16xf32>
    %173 = vector.multi_reduction <add>, %168, %cst_79 [1] : vector<16x32xf32> to vector<16xf32>
    %174 = vector.shape_cast %173 : vector<16xf32> to vector<16x1xf32>
    %cst_80 = arith.constant 3.200000e+01 : f32
    %175 = vector.broadcast %cst_80 : f32 to vector<16x1xf32>
    %176 = arith.divf %174, %175 : vector<16x1xf32>
    %177 = vector.broadcast %176 : vector<16x1xf32> to vector<16x32xf32>
    %178 = arith.subf %168, %177 : vector<16x32xf32>
    %179 = arith.mulf %178, %178 : vector<16x32xf32>
    %cst_81 = arith.constant dense<0.000000e+00> : vector<16xf32>
    %180 = vector.multi_reduction <add>, %179, %cst_81 [1] : vector<16x32xf32> to vector<16xf32>
    %181 = vector.shape_cast %180 : vector<16xf32> to vector<16x1xf32>
    %cst_82 = arith.constant 3.200000e+01 : f32
    %182 = vector.broadcast %cst_82 : f32 to vector<16x1xf32>
    %183 = arith.divf %181, %182 : vector<16x1xf32>
    %184 = vector.broadcast %176 : vector<16x1xf32> to vector<16x32xf32>
    %185 = arith.subf %168, %184 : vector<16x32xf32>
    %cst_83 = arith.constant 9.99999996E-13 : f32
    %186 = vector.broadcast %cst_83 : f32 to vector<16x1xf32>
    %187 = arith.addf %183, %186 : vector<16x1xf32>
    %188 = math.rsqrt %187 : vector<16x1xf32>
    %189 = vector.broadcast %188 : vector<16x1xf32> to vector<16x32xf32>
    %190 = arith.mulf %185, %189 : vector<16x32xf32>
    %191 = vector.broadcast %170 : vector<1x32xf32> to vector<16x32xf32>
    %192 = arith.mulf %190, %191 : vector<16x32xf32>
    %193 = vector.broadcast %172 : vector<1x32xf32> to vector<16x32xf32>
    %194 = arith.addf %192, %193 : vector<16x32xf32>
    %c1 = arith.constant 1 : index
    %c0_84 = arith.constant 0 : index
    %c0_85 = arith.constant 0 : index
    %195 = vector.load %arg4[%c1, %c0_84, %c0_85] : memref<2x32x96xf32, #tpu.memory_space<vmem>>, vector<1x32x96xf32>
    %196 = vector.shape_cast %195 : vector<1x32x96xf32> to vector<32x96xf32>
    %cst_86 = arith.constant dense<0.000000e+00> : vector<16x96xf32>
    %197 = tpu.matmul %194, %196, %cst_86 {dimension_numbers = #tpu.dot_dimension_numbers<[1], [0], [0], [1], [0, 0, 1, 1], [], []>} : vector<16x32xf32>, vector<32x96xf32>, vector<16x96xf32> -> vector<16x96xf32>
    %c1_87 = arith.constant 1 : index
    %c0_88 = arith.constant 0 : index
    %c0_89 = arith.constant 0 : index
    %198 = vector.load %arg5[%c1_87, %c0_88, %c0_89] : memref<2x1x96xf32, #tpu.memory_space<vmem>>, vector<1x1x96xf32>
    %199 = vector.shape_cast %198 : vector<1x1x96xf32> to vector<1x96xf32>
    %200 = vector.broadcast %199 : vector<1x96xf32> to vector<16x96xf32>
    %201 = arith.addf %197, %200 : vector<16x96xf32>
    %c1_90 = arith.constant 1 : index
    %c0_91 = arith.constant 0 : index
    %c0_92 = arith.constant 0 : index
    %202 = vector.load %arg6[%c1_90, %c0_91, %c0_92] : memref<2x32x32xf32, #tpu.memory_space<vmem>>, vector<1x32x32xf32>
    %203 = vector.shape_cast %202 : vector<1x32x32xf32> to vector<32x32xf32>
    %204 = vector.extract_strided_slice %201 {offsets = [0, 0], sizes = [16, 8], strides = [1, 1]} : vector<16x96xf32> to vector<16x8xf32>
    %205 = vector.extract_strided_slice %201 {offsets = [0, 32], sizes = [16, 8], strides = [1, 1]} : vector<16x96xf32> to vector<16x8xf32>
    %206 = vector.extract_strided_slice %201 {offsets = [0, 64], sizes = [16, 8], strides = [1, 1]} : vector<16x96xf32> to vector<16x8xf32>
    %cst_93 = arith.constant dense<0.000000e+00> : vector<16x16xf32>
    %207 = tpu.matmul %204, %205, %cst_93 {dimension_numbers = #tpu.dot_dimension_numbers<[1], [1], [0], [0], [0, 0, 1, 0], [], []>} : vector<16x8xf32>, vector<16x8xf32>, vector<16x16xf32> -> vector<16x16xf32>
    %208 = arith.addf %207, %25 : vector<16x16xf32>
    %cst_94 = arith.constant dense<0xFF800000> : vector<16xf32>
    %209 = vector.multi_reduction <maximumf>, %208, %cst_94 [1] : vector<16x16xf32> to vector<16xf32>
    %210 = vector.shape_cast %209 : vector<16xf32> to vector<16x1xf32>
    %211 = vector.broadcast %210 : vector<16x1xf32> to vector<16x16xf32>
    %212 = arith.subf %208, %211 : vector<16x16xf32>
    %213 = math.exp %212 : vector<16x16xf32>
    %cst_95 = arith.constant dense<0.000000e+00> : vector<16xf32>
    %214 = vector.multi_reduction <add>, %213, %cst_95 [1] : vector<16x16xf32> to vector<16xf32>
    %215 = vector.shape_cast %214 : vector<16xf32> to vector<16x1xf32>
    %216 = tpu.reciprocal %215 {approx = true} : vector<16x1xf32> -> vector<16x1xf32>
    %217 = vector.broadcast %216 : vector<16x1xf32> to vector<16x16xf32>
    %218 = arith.mulf %213, %217 : vector<16x16xf32>
    %cst_96 = arith.constant dense<0.000000e+00> : vector<16x8xf32>
    %219 = tpu.matmul %218, %206, %cst_96 {dimension_numbers = #tpu.dot_dimension_numbers<[1], [0], [0], [1], [0, 0, 1, 1], [], []>} : vector<16x16xf32>, vector<16x8xf32>, vector<16x8xf32> -> vector<16x8xf32>
    %220 = vector.extract_strided_slice %203 {offsets = [0, 0], sizes = [8, 32], strides = [1, 1]} : vector<32x32xf32> to vector<8x32xf32>
    %cst_97 = arith.constant dense<0.000000e+00> : vector<16x32xf32>
    %221 = tpu.matmul %219, %220, %cst_97 {dimension_numbers = #tpu.dot_dimension_numbers<[1], [0], [0], [1], [0, 0, 1, 1], [], []>} : vector<16x8xf32>, vector<8x32xf32>, vector<16x32xf32> -> vector<16x32xf32>
    %222 = vector.extract_strided_slice %201 {offsets = [0, 8], sizes = [16, 8], strides = [1, 1]} : vector<16x96xf32> to vector<16x8xf32>
    %223 = vector.extract_strided_slice %201 {offsets = [0, 40], sizes = [16, 8], strides = [1, 1]} : vector<16x96xf32> to vector<16x8xf32>
    %224 = vector.extract_strided_slice %201 {offsets = [0, 72], sizes = [16, 8], strides = [1, 1]} : vector<16x96xf32> to vector<16x8xf32>
    %cst_98 = arith.constant dense<0.000000e+00> : vector<16x16xf32>
    %225 = tpu.matmul %222, %223, %cst_98 {dimension_numbers = #tpu.dot_dimension_numbers<[1], [1], [0], [0], [0, 0, 1, 0], [], []>} : vector<16x8xf32>, vector<16x8xf32>, vector<16x16xf32> -> vector<16x16xf32>
    %226 = arith.addf %225, %25 : vector<16x16xf32>
    %cst_99 = arith.constant dense<0xFF800000> : vector<16xf32>
    %227 = vector.multi_reduction <maximumf>, %226, %cst_99 [1] : vector<16x16xf32> to vector<16xf32>
    %228 = vector.shape_cast %227 : vector<16xf32> to vector<16x1xf32>
    %229 = vector.broadcast %228 : vector<16x1xf32> to vector<16x16xf32>
    %230 = arith.subf %226, %229 : vector<16x16xf32>
    %231 = math.exp %230 : vector<16x16xf32>
    %cst_100 = arith.constant dense<0.000000e+00> : vector<16xf32>
    %232 = vector.multi_reduction <add>, %231, %cst_100 [1] : vector<16x16xf32> to vector<16xf32>
    %233 = vector.shape_cast %232 : vector<16xf32> to vector<16x1xf32>
    %234 = tpu.reciprocal %233 {approx = true} : vector<16x1xf32> -> vector<16x1xf32>
    %235 = vector.broadcast %234 : vector<16x1xf32> to vector<16x16xf32>
    %236 = arith.mulf %231, %235 : vector<16x16xf32>
    %cst_101 = arith.constant dense<0.000000e+00> : vector<16x8xf32>
    %237 = tpu.matmul %236, %224, %cst_101 {dimension_numbers = #tpu.dot_dimension_numbers<[1], [0], [0], [1], [0, 0, 1, 1], [], []>} : vector<16x16xf32>, vector<16x8xf32>, vector<16x8xf32> -> vector<16x8xf32>
    %238 = vector.extract_strided_slice %203 {offsets = [8, 0], sizes = [8, 32], strides = [1, 1]} : vector<32x32xf32> to vector<8x32xf32>
    %cst_102 = arith.constant dense<0.000000e+00> : vector<16x32xf32>
    %239 = tpu.matmul %237, %238, %cst_102 {dimension_numbers = #tpu.dot_dimension_numbers<[1], [0], [0], [1], [0, 0, 1, 1], [], []>} : vector<16x8xf32>, vector<8x32xf32>, vector<16x32xf32> -> vector<16x32xf32>
    %240 = arith.addf %221, %239 : vector<16x32xf32>
    %241 = vector.extract_strided_slice %201 {offsets = [0, 16], sizes = [16, 8], strides = [1, 1]} : vector<16x96xf32> to vector<16x8xf32>
    %242 = vector.extract_strided_slice %201 {offsets = [0, 48], sizes = [16, 8], strides = [1, 1]} : vector<16x96xf32> to vector<16x8xf32>
    %243 = vector.extract_strided_slice %201 {offsets = [0, 80], sizes = [16, 8], strides = [1, 1]} : vector<16x96xf32> to vector<16x8xf32>
    %cst_103 = arith.constant dense<0.000000e+00> : vector<16x16xf32>
    %244 = tpu.matmul %241, %242, %cst_103 {dimension_numbers = #tpu.dot_dimension_numbers<[1], [1], [0], [0], [0, 0, 1, 0], [], []>} : vector<16x8xf32>, vector<16x8xf32>, vector<16x16xf32> -> vector<16x16xf32>
    %245 = arith.addf %244, %25 : vector<16x16xf32>
    %cst_104 = arith.constant dense<0xFF800000> : vector<16xf32>
    %246 = vector.multi_reduction <maximumf>, %245, %cst_104 [1] : vector<16x16xf32> to vector<16xf32>
    %247 = vector.shape_cast %246 : vector<16xf32> to vector<16x1xf32>
    %248 = vector.broadcast %247 : vector<16x1xf32> to vector<16x16xf32>
    %249 = arith.subf %245, %248 : vector<16x16xf32>
    %250 = math.exp %249 : vector<16x16xf32>
    %cst_105 = arith.constant dense<0.000000e+00> : vector<16xf32>
    %251 = vector.multi_reduction <add>, %250, %cst_105 [1] : vector<16x16xf32> to vector<16xf32>
    %252 = vector.shape_cast %251 : vector<16xf32> to vector<16x1xf32>
    %253 = tpu.reciprocal %252 {approx = true} : vector<16x1xf32> -> vector<16x1xf32>
    %254 = vector.broadcast %253 : vector<16x1xf32> to vector<16x16xf32>
    %255 = arith.mulf %250, %254 : vector<16x16xf32>
    %cst_106 = arith.constant dense<0.000000e+00> : vector<16x8xf32>
    %256 = tpu.matmul %255, %243, %cst_106 {dimension_numbers = #tpu.dot_dimension_numbers<[1], [0], [0], [1], [0, 0, 1, 1], [], []>} : vector<16x16xf32>, vector<16x8xf32>, vector<16x8xf32> -> vector<16x8xf32>
    %257 = vector.extract_strided_slice %203 {offsets = [16, 0], sizes = [8, 32], strides = [1, 1]} : vector<32x32xf32> to vector<8x32xf32>
    %cst_107 = arith.constant dense<0.000000e+00> : vector<16x32xf32>
    %258 = tpu.matmul %256, %257, %cst_107 {dimension_numbers = #tpu.dot_dimension_numbers<[1], [0], [0], [1], [0, 0, 1, 1], [], []>} : vector<16x8xf32>, vector<8x32xf32>, vector<16x32xf32> -> vector<16x32xf32>
    %259 = arith.addf %240, %258 : vector<16x32xf32>
    %260 = vector.extract_strided_slice %201 {offsets = [0, 24], sizes = [16, 8], strides = [1, 1]} : vector<16x96xf32> to vector<16x8xf32>
    %261 = vector.extract_strided_slice %201 {offsets = [0, 56], sizes = [16, 8], strides = [1, 1]} : vector<16x96xf32> to vector<16x8xf32>
    %262 = vector.extract_strided_slice %201 {offsets = [0, 88], sizes = [16, 8], strides = [1, 1]} : vector<16x96xf32> to vector<16x8xf32>
    %cst_108 = arith.constant dense<0.000000e+00> : vector<16x16xf32>
    %263 = tpu.matmul %260, %261, %cst_108 {dimension_numbers = #tpu.dot_dimension_numbers<[1], [1], [0], [0], [0, 0, 1, 0], [], []>} : vector<16x8xf32>, vector<16x8xf32>, vector<16x16xf32> -> vector<16x16xf32>
    %264 = arith.addf %263, %25 : vector<16x16xf32>
    %cst_109 = arith.constant dense<0xFF800000> : vector<16xf32>
    %265 = vector.multi_reduction <maximumf>, %264, %cst_109 [1] : vector<16x16xf32> to vector<16xf32>
    %266 = vector.shape_cast %265 : vector<16xf32> to vector<16x1xf32>
    %267 = vector.broadcast %266 : vector<16x1xf32> to vector<16x16xf32>
    %268 = arith.subf %264, %267 : vector<16x16xf32>
    %269 = math.exp %268 : vector<16x16xf32>
    %cst_110 = arith.constant dense<0.000000e+00> : vector<16xf32>
    %270 = vector.multi_reduction <add>, %269, %cst_110 [1] : vector<16x16xf32> to vector<16xf32>
    %271 = vector.shape_cast %270 : vector<16xf32> to vector<16x1xf32>
    %272 = tpu.reciprocal %271 {approx = true} : vector<16x1xf32> -> vector<16x1xf32>
    %273 = vector.broadcast %272 : vector<16x1xf32> to vector<16x16xf32>
    %274 = arith.mulf %269, %273 : vector<16x16xf32>
    %cst_111 = arith.constant dense<0.000000e+00> : vector<16x8xf32>
    %275 = tpu.matmul %274, %262, %cst_111 {dimension_numbers = #tpu.dot_dimension_numbers<[1], [0], [0], [1], [0, 0, 1, 1], [], []>} : vector<16x16xf32>, vector<16x8xf32>, vector<16x8xf32> -> vector<16x8xf32>
    %276 = vector.extract_strided_slice %203 {offsets = [24, 0], sizes = [8, 32], strides = [1, 1]} : vector<32x32xf32> to vector<8x32xf32>
    %cst_112 = arith.constant dense<0.000000e+00> : vector<16x32xf32>
    %277 = tpu.matmul %275, %276, %cst_112 {dimension_numbers = #tpu.dot_dimension_numbers<[1], [0], [0], [1], [0, 0, 1, 1], [], []>} : vector<16x8xf32>, vector<8x32xf32>, vector<16x32xf32> -> vector<16x32xf32>
    %278 = arith.addf %259, %277 : vector<16x32xf32>
    %c1_113 = arith.constant 1 : index
    %c0_114 = arith.constant 0 : index
    %c0_115 = arith.constant 0 : index
    %279 = vector.load %arg7[%c1_113, %c0_114, %c0_115] : memref<2x1x32xf32, #tpu.memory_space<vmem>>, vector<1x1x32xf32>
    %280 = vector.shape_cast %279 : vector<1x1x32xf32> to vector<1x32xf32>
    %281 = vector.broadcast %280 : vector<1x32xf32> to vector<16x32xf32>
    %282 = arith.addf %278, %281 : vector<16x32xf32>
    %283 = arith.addf %282, %194 : vector<16x32xf32>
    %c1_116 = arith.constant 1 : index
    %c0_117 = arith.constant 0 : index
    %c0_118 = arith.constant 0 : index
    %284 = vector.load %arg8[%c1_116, %c0_117, %c0_118] : memref<2x1x32xf32, #tpu.memory_space<vmem>>, vector<1x1x32xf32>
    %285 = vector.shape_cast %284 : vector<1x1x32xf32> to vector<1x32xf32>
    %c1_119 = arith.constant 1 : index
    %c0_120 = arith.constant 0 : index
    %c0_121 = arith.constant 0 : index
    %286 = vector.load %arg9[%c1_119, %c0_120, %c0_121] : memref<2x1x32xf32, #tpu.memory_space<vmem>>, vector<1x1x32xf32>
    %287 = vector.shape_cast %286 : vector<1x1x32xf32> to vector<1x32xf32>
    %cst_122 = arith.constant dense<0.000000e+00> : vector<16xf32>
    %288 = vector.multi_reduction <add>, %283, %cst_122 [1] : vector<16x32xf32> to vector<16xf32>
    %289 = vector.shape_cast %288 : vector<16xf32> to vector<16x1xf32>
    %cst_123 = arith.constant 3.200000e+01 : f32
    %290 = vector.broadcast %cst_123 : f32 to vector<16x1xf32>
    %291 = arith.divf %289, %290 : vector<16x1xf32>
    %292 = vector.broadcast %291 : vector<16x1xf32> to vector<16x32xf32>
    %293 = arith.subf %283, %292 : vector<16x32xf32>
    %294 = arith.mulf %293, %293 : vector<16x32xf32>
    %cst_124 = arith.constant dense<0.000000e+00> : vector<16xf32>
    %295 = vector.multi_reduction <add>, %294, %cst_124 [1] : vector<16x32xf32> to vector<16xf32>
    %296 = vector.shape_cast %295 : vector<16xf32> to vector<16x1xf32>
    %cst_125 = arith.constant 3.200000e+01 : f32
    %297 = vector.broadcast %cst_125 : f32 to vector<16x1xf32>
    %298 = arith.divf %296, %297 : vector<16x1xf32>
    %299 = vector.broadcast %291 : vector<16x1xf32> to vector<16x32xf32>
    %300 = arith.subf %283, %299 : vector<16x32xf32>
    %cst_126 = arith.constant 9.99999996E-13 : f32
    %301 = vector.broadcast %cst_126 : f32 to vector<16x1xf32>
    %302 = arith.addf %298, %301 : vector<16x1xf32>
    %303 = math.rsqrt %302 : vector<16x1xf32>
    %304 = vector.broadcast %303 : vector<16x1xf32> to vector<16x32xf32>
    %305 = arith.mulf %300, %304 : vector<16x32xf32>
    %306 = vector.broadcast %285 : vector<1x32xf32> to vector<16x32xf32>
    %307 = arith.mulf %305, %306 : vector<16x32xf32>
    %308 = vector.broadcast %287 : vector<1x32xf32> to vector<16x32xf32>
    %309 = arith.addf %307, %308 : vector<16x32xf32>
    %c1_127 = arith.constant 1 : index
    %c0_128 = arith.constant 0 : index
    %c0_129 = arith.constant 0 : index
    %310 = vector.load %arg10[%c1_127, %c0_128, %c0_129] : memref<2x32x128xf32, #tpu.memory_space<vmem>>, vector<1x32x128xf32>
    %311 = vector.shape_cast %310 : vector<1x32x128xf32> to vector<32x128xf32>
    %cst_130 = arith.constant dense<0.000000e+00> : vector<16x128xf32>
    %312 = tpu.matmul %309, %311, %cst_130 {dimension_numbers = #tpu.dot_dimension_numbers<[1], [0], [0], [1], [0, 0, 1, 1], [], []>} : vector<16x32xf32>, vector<32x128xf32>, vector<16x128xf32> -> vector<16x128xf32>
    %c1_131 = arith.constant 1 : index
    %c0_132 = arith.constant 0 : index
    %c0_133 = arith.constant 0 : index
    %313 = vector.load %arg11[%c1_131, %c0_132, %c0_133] : memref<2x1x128xf32, #tpu.memory_space<vmem>>, vector<1x1x128xf32>
    %314 = vector.shape_cast %313 : vector<1x1x128xf32> to vector<1x128xf32>
    %315 = vector.broadcast %314 : vector<1x128xf32> to vector<16x128xf32>
    %316 = arith.addf %312, %315 : vector<16x128xf32>
    %cst_134 = arith.constant 5.000000e-01 : f32
    %317 = vector.broadcast %cst_134 : f32 to vector<16x128xf32>
    %318 = arith.mulf %317, %316 : vector<16x128xf32>
    %cst_135 = arith.constant 4.471500e-02 : f32
    %319 = vector.broadcast %cst_135 : f32 to vector<16x128xf32>
    %320 = arith.mulf %319, %316 : vector<16x128xf32>
    %321 = arith.mulf %320, %316 : vector<16x128xf32>
    %322 = arith.mulf %321, %316 : vector<16x128xf32>
    %323 = arith.addf %316, %322 : vector<16x128xf32>
    %cst_136 = arith.constant 0.797884583 : f32
    %324 = vector.broadcast %cst_136 : f32 to vector<16x128xf32>
    %325 = arith.mulf %324, %323 : vector<16x128xf32>
    %326 = math.tanh %325 : vector<16x128xf32>
    %cst_137 = arith.constant 1.000000e+00 : f32
    %327 = vector.broadcast %cst_137 : f32 to vector<16x128xf32>
    %328 = arith.addf %327, %326 : vector<16x128xf32>
    %329 = arith.mulf %318, %328 : vector<16x128xf32>
    %c1_138 = arith.constant 1 : index
    %c0_139 = arith.constant 0 : index
    %c0_140 = arith.constant 0 : index
    %330 = vector.load %arg12[%c1_138, %c0_139, %c0_140] : memref<2x128x32xf32, #tpu.memory_space<vmem>>, vector<1x128x32xf32>
    %331 = vector.shape_cast %330 : vector<1x128x32xf32> to vector<128x32xf32>
    %cst_141 = arith.constant dense<0.000000e+00> : vector<16x32xf32>
    %332 = tpu.matmul %329, %331, %cst_141 {dimension_numbers = #tpu.dot_dimension_numbers<[1], [0], [0], [1], [0, 0, 1, 1], [], []>} : vector<16x128xf32>, vector<128x32xf32>, vector<16x32xf32> -> vector<16x32xf32>
    %c1_142 = arith.constant 1 : index
    %c0_143 = arith.constant 0 : index
    %c0_144 = arith.constant 0 : index
    %333 = vector.load %arg13[%c1_142, %c0_143, %c0_144] : memref<2x1x32xf32, #tpu.memory_space<vmem>>, vector<1x1x32xf32>
    %334 = vector.shape_cast %333 : vector<1x1x32xf32> to vector<1x32xf32>
    %335 = vector.broadcast %334 : vector<1x32xf32> to vector<16x32xf32>
    %336 = arith.addf %332, %335 : vector<16x32xf32>
    %337 = arith.addf %336, %309 : vector<16x32xf32>
    %c1_145 = arith.constant 1 : index
    %c0_146 = arith.constant 0 : index
    %c0_147 = arith.constant 0 : index
    %338 = vector.load %arg14[%c1_145, %c0_146, %c0_147] : memref<2x1x32xf32, #tpu.memory_space<vmem>>, vector<1x1x32xf32>
    %339 = vector.shape_cast %338 : vector<1x1x32xf32> to vector<1x32xf32>
    %c1_148 = arith.constant 1 : index
    %c0_149 = arith.constant 0 : index
    %c0_150 = arith.constant 0 : index
    %340 = vector.load %arg15[%c1_148, %c0_149, %c0_150] : memref<2x1x32xf32, #tpu.memory_space<vmem>>, vector<1x1x32xf32>
    %341 = vector.shape_cast %340 : vector<1x1x32xf32> to vector<1x32xf32>
    %cst_151 = arith.constant dense<0.000000e+00> : vector<16xf32>
    %342 = vector.multi_reduction <add>, %337, %cst_151 [1] : vector<16x32xf32> to vector<16xf32>
    %343 = vector.shape_cast %342 : vector<16xf32> to vector<16x1xf32>
    %cst_152 = arith.constant 3.200000e+01 : f32
    %344 = vector.broadcast %cst_152 : f32 to vector<16x1xf32>
    %345 = arith.divf %343, %344 : vector<16x1xf32>
    %346 = vector.broadcast %345 : vector<16x1xf32> to vector<16x32xf32>
    %347 = arith.subf %337, %346 : vector<16x32xf32>
    %348 = arith.mulf %347, %347 : vector<16x32xf32>
    %cst_153 = arith.constant dense<0.000000e+00> : vector<16xf32>
    %349 = vector.multi_reduction <add>, %348, %cst_153 [1] : vector<16x32xf32> to vector<16xf32>
    %350 = vector.shape_cast %349 : vector<16xf32> to vector<16x1xf32>
    %cst_154 = arith.constant 3.200000e+01 : f32
    %351 = vector.broadcast %cst_154 : f32 to vector<16x1xf32>
    %352 = arith.divf %350, %351 : vector<16x1xf32>
    %353 = vector.broadcast %345 : vector<16x1xf32> to vector<16x32xf32>
    %354 = arith.subf %337, %353 : vector<16x32xf32>
    %cst_155 = arith.constant 9.99999996E-13 : f32
    %355 = vector.broadcast %cst_155 : f32 to vector<16x1xf32>
    %356 = arith.addf %352, %355 : vector<16x1xf32>
    %357 = math.rsqrt %356 : vector<16x1xf32>
    %358 = vector.broadcast %357 : vector<16x1xf32> to vector<16x32xf32>
    %359 = arith.mulf %354, %358 : vector<16x32xf32>
    %360 = vector.broadcast %339 : vector<1x32xf32> to vector<16x32xf32>
    %361 = arith.mulf %359, %360 : vector<16x32xf32>
    %362 = vector.broadcast %341 : vector<1x32xf32> to vector<16x32xf32>
    %363 = arith.addf %361, %362 : vector<16x32xf32>
    %c0_156 = arith.constant 0 : index
    %c0_157 = arith.constant 0 : index
    %364 = vector.load %arg16[%c0_156, %c0_157] : memref<32x32xf32, #tpu.memory_space<vmem>>, vector<32x32xf32>
    %cst_158 = arith.constant dense<0.000000e+00> : vector<16x32xf32>
    %365 = tpu.matmul %363, %364, %cst_158 {dimension_numbers = #tpu.dot_dimension_numbers<[1], [0], [0], [1], [0, 0, 1, 1], [], []>} : vector<16x32xf32>, vector<32x32xf32>, vector<16x32xf32> -> vector<16x32xf32>
    %c0_159 = arith.constant 0 : index
    %c0_160 = arith.constant 0 : index
    %366 = vector.load %arg17[%c0_159, %c0_160] : memref<1x32xf32, #tpu.memory_space<vmem>>, vector<1x32xf32>
    %367 = vector.broadcast %366 : vector<1x32xf32> to vector<16x32xf32>
    %368 = arith.addf %365, %367 : vector<16x32xf32>
    %369 = math.tanh %368 : vector<16x32xf32>
    %c0_161 = arith.constant 0 : index
    %c0_162 = arith.constant 0 : index
    %370 = vector.load %arg18[%c0_161, %c0_162] : memref<32x128xf32, #tpu.memory_space<vmem>>, vector<32x128xf32>
    %cst_163 = arith.constant dense<0.000000e+00> : vector<16x128xf32>
    %371 = tpu.matmul %369, %370, %cst_163 {dimension_numbers = #tpu.dot_dimension_numbers<[1], [0], [0], [1], [0, 0, 1, 1], [], []>} : vector<16x32xf32>, vector<32x128xf32>, vector<16x128xf32> -> vector<16x128xf32>
    %c0_164 = arith.constant 0 : index
    %c0_165 = arith.constant 0 : index
    %372 = vector.load %arg19[%c0_164, %c0_165] : memref<1x128xf32, #tpu.memory_space<vmem>>, vector<1x128xf32>
    %373 = vector.broadcast %372 : vector<1x128xf32> to vector<16x128xf32>
    %374 = arith.addf %371, %373 : vector<16x128xf32>
    %c0_166 = arith.constant 0 : index
    %c0_167 = arith.constant 0 : index
    %375 = vector.load %arg20[%c0_166, %c0_167] : memref<16x128xf32, #tpu.memory_space<vmem>>, vector<16x128xf32>
    tpu.vector_store %arg20[%c0_166, %c0_167], %374 {strides = array<i32>} : memref<16x128xf32, #tpu.memory_space<vmem>>, vector<16x128xf32>,
    return
  }
}

</mosaic_0001>

<llo_original>
// kernel: classifier_forward.1
$region0: #{classifier_forward.1}
  #allocation0 [shape = 'u32[]', space=smem, size = 0x4, offset = 0x4, fixed_abs, tag = 'smem constant byte address 0x4 - core index']
  #allocation1 [shape = 'u32[144,128]{1,0:T(1,128)}', space=vmem, size = 0x12000, scoped, tag = 'internal scratch']
  %s0 = inlined_call_operand.vmem [shape: f32[16,32], index: 0, kind: input, shape index: {}]
  %s1 = inlined_call_operand.vmem [shape: f32[16,16], index: 1, kind: input, shape index: {}]
  %s2 = inlined_call_operand.vmem [shape: f32[1,32], index: 2, kind: input, shape index: {}]
  %s3 = inlined_call_operand.vmem [shape: f32[1,32], index: 3, kind: input, shape index: {}]
  %s4 = inlined_call_operand.vmem [shape: f32[2,32,96], index: 4, kind: input, shape index: {}]
  %s5 = inlined_call_operand.vmem [shape: f32[2,1,96], index: 5, kind: input, shape index: {}]
  %s6 = inlined_call_operand.vmem [shape: f32[2,32,32], index: 6, kind: input, shape index: {}]
  %s7 = inlined_call_operand.vmem [shape: f32[2,1,32], index: 7, kind: input, shape index: {}]
  %s8 = inlined_call_operand.vmem [shape: f32[2,1,32], index: 8, kind: input, shape index: {}]
  %s9 = inlined_call_operand.vmem [shape: f32[2,1,32], index: 9, kind: input, shape index: {}]
  %s10 = inlined_call_operand.vmem [shape: f32[2,32,128], index: 10, kind: input, shape index: {}]
  %s11 = inlined_call_operand.vmem [shape: f32[2,1,128], index: 11, kind: input, shape index: {}]
  %s12 = inlined_call_operand.vmem [shape: f32[2,128,32], index: 12, kind: input, shape index: {}]
  %s13 = inlined_call_operand.vmem [shape: f32[2,1,32], index: 13, kind: input, shape index: {}]
  %s14 = inlined_call_operand.vmem [shape: f32[2,1,32], index: 14, kind: input, shape index: {}]
  %s15 = inlined_call_operand.vmem [shape: f32[2,1,32], index: 15, kind: input, shape index: {}]
  %s16 = inlined_call_operand.vmem [shape: f32[32,32], index: 16, kind: input, shape index: {}]
  %s17 = inlined_call_operand.vmem [shape: f32[1,32], index: 17, kind: input, shape index: {}]
  %s18 = inlined_call_operand.vmem [shape: f32[32,128], index: 18, kind: input, shape index: {}]
  %s19 = inlined_call_operand.vmem [shape: f32[1,128], index: 19, kind: input, shape index: {}]
  %s20 = inlined_call_operand.vmem [shape: f32[16,128], index: 20, kind: output, shape index: {}]
  %s21 = sld [smem:[#allocation0]]
  $region90: #{classifier_forward.1} parent=0
    _
  %s23 = ssub.s32 1, %s21
  %s24 = scalar_select 0, %s23, %s21
  // Predicated region
  $region2: #{classifier_forward.1} parent=0 // pred_check
    _
  $region3: #{classifier_forward.1} parent=0 // pred_check_branch
    %26 = sbr.rel (0) target = $region5
  $region4: #{classifier_forward.1} parent=0 // pred_region
    _
  $region5: #{classifier_forward.1} parent=0 // pred_fallthru
    _
  // Predicated region
  $region6: #{classifier_forward.1} parent=0 // pred_check
    _
  $region7: #{classifier_forward.1} parent=0 // pred_check_branch
    %28 = sbr.rel (0) target = $region9
  $region8: #{classifier_forward.1} parent=0 // pred_region
    _
  $region9: #{classifier_forward.1} parent=0 // pred_fallthru
    _
  // Predicated region
  $region10: #{classifier_forward.1} parent=0 // pred_check
    _
  $region11: #{classifier_forward.1} parent=0 // pred_check_branch
    %30 = sbr.rel (0) target = $region13
  $region12: #{classifier_forward.1} parent=0 // pred_region
    _
  $region13: #{classifier_forward.1} parent=0 // pred_fallthru
    _
  // Predicated region
  $region14: #{classifier_forward.1} parent=0 // pred_check
    _
  $region15: #{classifier_forward.1} parent=0 // pred_check_branch
    %32 = sbr.rel (0) target = $region17
  $region16: #{classifier_forward.1} parent=0 // pred_region
    _
  $region17: #{classifier_forward.1} parent=0 // pred_fallthru
    _
  // Predicated region
  $region18: #{classifier_forward.1} parent=0 // pred_check
    _
  $region19: #{classifier_forward.1} parent=0 // pred_check_branch
    %34 = sbr.rel (0) target = $region21
  $region20: #{classifier_forward.1} parent=0 // pred_region
    _
  $region21: #{classifier_forward.1} parent=0 // pred_fallthru
    _
  // Predicated region
  $region22: #{classifier_forward.1} parent=0 // pred_check
    _
  $region23: #{classifier_forward.1} parent=0 // pred_check_branch
    %36 = sbr.rel (0) target = $region25
  $region24: #{classifier_forward.1} parent=0 // pred_region
    _
  $region25: #{classifier_forward.1} parent=0 // pred_fallthru
    _
  // Predicated region
  $region26: #{classifier_forward.1} parent=0 // pred_check
    _
  $region27: #{classifier_forward.1} parent=0 // pred_check_branch
    %38 = sbr.rel (0) target = $region29
  $region28: #{classifier_forward.1} parent=0 // pred_region
    _
  $region29: #{classifier_forward.1} parent=0 // pred_fallthru
    _
  // Predicated region
  $region30: #{classifier_forward.1} parent=0 // pred_check
    _
  $region31: #{classifier_forward.1} parent=0 // pred_check_branch
    %40 = sbr.rel (0) target = $region33
  $region32: #{classifier_forward.1} parent=0 // pred_region
    _
  $region33: #{classifier_forward.1} parent=0 // pred_fallthru
    _
  // Predicated region
  $region34: #{classifier_forward.1} parent=0 // pred_check
    _
  $region35: #{classifier_forward.1} parent=0 // pred_check_branch
    %42 = sbr.rel (0) target = $region37
  $region36: #{classifier_forward.1} parent=0 // pred_region
    _
  $region37: #{classifier_forward.1} parent=0 // pred_fallthru
    _
  // Predicated region
  $region38: #{classifier_forward.1} parent=0 // pred_check
    _
  $region39: #{classifier_forward.1} parent=0 // pred_check_branch
    %44 = sbr.rel (0) target = $region41
  $region40: #{classifier_forward.1} parent=0 // pred_region
    _
  $region41: #{classifier_forward.1} parent=0 // pred_fallthru
    _
  // Predicated region
  $region42: #{classifier_forward.1} parent=0 // pred_check
    _
  $region43: #{classifier_forward.1} parent=0 // pred_check_branch
    %46 = sbr.rel (0) target = $region45
  $region44: #{classifier_forward.1} parent=0 // pred_region
    _
  $region45: #{classifier_forward.1} parent=0 // pred_fallthru
    _
  // Predicated region
  $region46: #{classifier_forward.1} parent=0 // pred_check
    _
  $region47: #{classifier_forward.1} parent=0 // pred_check_branch
    %48 = sbr.rel (0) target = $region49
  $region48: #{classifier_forward.1} parent=0 // pred_region
    _
  $region49: #{classifier_forward.1} parent=0 // pred_fallthru
    _
  // Predicated region
  $region50: #{classifier_forward.1} parent=0 // pred_check
    _
  $region51: #{classifier_forward.1} parent=0 // pred_check_branch
    %50 = sbr.rel (0) target = $region53
  $region52: #{classifier_forward.1} parent=0 // pred_region
    _
  $region53: #{classifier_forward.1} parent=0 // pred_fallthru
    _
  // Predicated region
  $region54: #{classifier_forward.1} parent=0 // pred_check
    _
  $region55: #{classifier_forward.1} parent=0 // pred_check_branch
    %52 = sbr.rel (0) target = $region57
  $region56: #{classifier_forward.1} parent=0 // pred_region
    _
  $region57: #{classifier_forward.1} parent=0 // pred_fallthru
    _
  // Predicated region
  $region58: #{classifier_forward.1} parent=0 // pred_check
    _
  $region59: #{classifier_forward.1} parent=0 // pred_check_branch
    %54 = sbr.rel (0) target = $region61
  $region60: #{classifier_forward.1} parent=0 // pred_region
    _
  $region61: #{classifier_forward.1} parent=0 // pred_fallthru
    _
  // Predicated region
  $region62: #{classifier_forward.1} parent=0 // pred_check
    _
  $region63: #{classifier_forward.1} parent=0 // pred_check_branch
    %56 = sbr.rel (0) target = $region65
  $region64: #{classifier_forward.1} parent=0 // pred_region
    _
  $region65: #{classifier_forward.1} parent=0 // pred_fallthru
    _
  // Predicated region
  $region66: #{classifier_forward.1} parent=0 // pred_check
    _
  $region67: #{classifier_forward.1} parent=0 // pred_check_branch
    %58 = sbr.rel (0) target = $region69
  $region68: #{classifier_forward.1} parent=0 // pred_region
    _
  $region69: #{classifier_forward.1} parent=0 // pred_fallthru
    _
  // Predicated region
  $region70: #{classifier_forward.1} parent=0 // pred_check
    _
  $region71: #{classifier_forward.1} parent=0 // pred_check_branch
    %60 = sbr.rel (0) target = $region73
  $region72: #{classifier_forward.1} parent=0 // pred_region
    _
  $region73: #{classifier_forward.1} parent=0 // pred_fallthru
    _
  // Predicated region
  $region74: #{classifier_forward.1} parent=0 // pred_check
    _
  $region75: #{classifier_forward.1} parent=0 // pred_check_branch
    %62 = sbr.rel (0) target = $region77
  $region76: #{classifier_forward.1} parent=0 // pred_region
    _
  $region77: #{classifier_forward.1} parent=0 // pred_fallthru
    _
  // Predicated region
  $region78: #{classifier_forward.1} parent=0 // pred_check
    _
  $region79: #{classifier_forward.1} parent=0 // pred_check_branch
    %64 = sbr.rel (0) target = $region81
  $region80: #{classifier_forward.1} parent=0 // pred_region
    _
  $region81: #{classifier_forward.1} parent=0 // pred_fallthru
    _
  %v65 = vld [vmem:[%s0] sm:$0xff]
  %v66 = vld [vmem:[%s0 + $0x8] sm:$0xff]
  %v67 = vld [vmem:[%s2] sm:$0x1]
  %v68 = vld [vmem:[%s3] sm:$0x1]
  %vm69 = vcmask 261120
  %v70 = vsel %vm69, %v65, 0.0
  %71 = vadd.xlane.f32.xlu0 %v70
  %v72 = vpop.xlane.xlu0 %71
  %v73 = vsel %vm69, %v66, 0.0
  %74 = vadd.xlane.f32.xlu0 %v73
  %v75 = vpop.xlane.xlu0 %74
  %v76 = vrcp.pop 32.0
  %v77 = vmul.f32 %v72, %v76
  %v78 = vmul.f32 %v75, %v76
  %v79 = vsub.f32 %v65, %v77
  %v80 = vsub.f32 %v66, %v78
  %v81 = vmul.f32 %v79, %v79
  %v82 = vmul.f32 %v80, %v80
  %v83 = vsel %vm69, %v81, 0.0
  %84 = vadd.xlane.f32.xlu0 %v83
  %v85 = vpop.xlane.xlu0 %84
  %v86 = vsel %vm69, %v82, 0.0
  %87 = vadd.xlane.f32.xlu0 %v86
  %v88 = vpop.xlane.xlu0 %87
  %v89 = vmul.f32 %v85, %v76
  %v90 = vmul.f32 %v88, %v76
  %v91 = vadd.f32 %v89, 1e-12
  %v92 = vadd.f32 %v90, 1e-12
  %v93 = vrsqrt.pop %v91
  %v94 = vrsqrt.pop %v92
  %v95 = vmul.f32 %v79, %v93
  %v96 = vmul.f32 %v80, %v94
  %v98 = vlaneseq
  %v99 = vshrl.u32 %v98, 7
  %v100 = vsub.s32 0, %v99
  %v101 = vrot.slane %v67, %v100
  %v103 = vmul.f32 %v95, %v101
  %v104 = vmul.f32 %v96, %v101
  %v106 = vlaneseq
  %v107 = vshrl.u32 %v106, 7
  %v108 = vsub.s32 0, %v107
  %v109 = vrot.slane %v68, %v108
  %v111 = vadd.f32 %v103, %v109
  %v112 = vadd.f32 %v104, %v109
  %v113 = vld [vmem:[%s1] sm:$0xff]
  %v114 = vld [vmem:[%s1 + $0x8] sm:$0xff]
  %v115 = vld [vmem:[%s4] sm:$0xff]
  %v116 = vld [vmem:[%s4 + $0x8] sm:$0xff]
  %v117 = vld [vmem:[%s4 + $0x10] sm:$0xff]
  %v118 = vld [vmem:[%s4 + $0x18] sm:$0xff]
  %v119 = vld [vmem:[%s5] sm:$0x1]
  %v121 = vlaneseq
  %v122 = vshrl.u32 %v121, 7
  %v123 = vsub.s32 0, %v122
  %v124 = vrot.slane %v119, %v123
  %v127 = vsel %vm69, %v111, 0
  %v130 = vsel %vm69, %v112, 0
  %132 = vmatprep.subr.mxu0 0.0
  %133 = vmatpush1.msra.mxu0 %v115
  %134 = vmatprep.subr.mxu0 0.0
  %135 = vmatpush1.msra.mxu0 %v116
  %136 = vmatprep.subr.mxu0 0.0
  %137 = vmatpush1.msra.mxu0 %v117
  %138 = vmatprep.subr.mxu0 0.0
  %139 = vmatpush1.msra.mxu0 %v118
  %140 = vmatprep.subr.mxu0 0.0
  %141 = vmatpush1.msra.mxu0 0.0
  %142 = vmatprep.subr.mxu0 0.0
  %143 = vmatpush1.msra.mxu0 0.0
  %144 = vmatprep.subr.mxu0 0.0
  %145 = vmatpush1.msra.mxu0 0.0
  %146 = vmatprep.subr.mxu0 0.0
  %147 = vmatpush1.msra.mxu0 0.0
  %148 = vmatprep.subr.mxu0 0.0
  %149 = vmatpush1.msra.mxu0 0.0
  %150 = vmatprep.subr.mxu0 0.0
  %151 = vmatpush1.msra.mxu0 0.0
  %152 = vmatprep.subr.mxu0 0.0
  %153 = vmatpush1.msra.mxu0 0.0
  %154 = vmatprep.subr.mxu0 0.0
  %155 = vmatpush1.msra.mxu0 0.0
  %156 = vmatprep.subr.mxu0 0.0
  %157 = vmatpush1.msra.mxu0 0.0
  %158 = vmatprep.subr.mxu0 0.0
  %159 = vmatpush1.msra.mxu0 0.0
  %160 = vmatprep.subr.mxu0 0.0
  %161 = vmatpush1.msra.mxu0 0.0
  %162 = vmatprep.subr.mxu0 0.0
  %163 = vmatpush1.msra.mxu0 0.0
  %164 = vmatprep.subr.mxu0 0.0
  %165 = vmatpush1.msra.mxu0 0.0
  %166 = vmatprep.subr.mxu0 0.0
  %167 = vmatpush1.msra.mxu0 0.0
  %168 = vmatprep.subr.mxu0 0.0
  %169 = vmatpush1.msra.mxu0 0.0
  %170 = vmatprep.subr.mxu0 0.0
  %171 = vmatpush1.msra.mxu0 0.0
  %172 = vmatprep.subr.mxu0 0.0
  %173 = vmatpush1.msra.mxu0 0.0
  %174 = vmatprep.subr.mxu0 0.0
  %175 = vmatpush1.msra.mxu0 0.0
  %176 = vmatprep.subr.mxu0 0.0
  %177 = vmatpush1.msra.mxu0 0.0
  %178 = vmatprep.subr.mxu0 0.0
  %179 = vmatpush1.msra.mxu0 0.0
  %180 = vmatprep.subr.mxu0 0.0
  %181 = vmatpush1.msra.mxu0 0.0
  %182 = vmatprep.subr.mxu0 0.0
  %183 = vmatpush1.msra.mxu0 0.0
  %184 = vmatprep.subr.mxu0 0.0
  %185 = vmatpush1.msra.mxu0 0.0
  %186 = vmatprep.subr.mxu0 0.0
  %187 = vmatpush1.msra.mxu0 0.0
  %188 = vmatprep.subr.mxu0 0.0
  %189 = vmatpush1.msra.mxu0 0.0
  %190 = vmatprep.subr.mxu0 0.0
  %191 = vmatpush1.msra.mxu0 0.0
  %192 = vmatprep.subr.mxu0 0.0
  %193 = vmatpush1.msra.mxu0 0.0
  %194 = vmatprep.subr.mxu0 0.0
  %195 = vmatpush1.msra.mxu0 0.0
  %196 = vmatprep.mubr.f32.mxu0 0.0
  %197 = vmatmul.mubr.f32.gmra.mrb[0].mxu0 %v127
  %v198 = vpop.f32.mrb[0].mxu0
  %v199 = vadd.f32 %v124, %v198
  %v200 = vpop.f32.mrb[0].mxu0
  %201 = vmatprep.mubr.f32.mxu0 0.0
  %202 = vmatmul.mubr.f32.gmra.mrb[0].mxu0 %v130
  %v203 = vpop.f32.mrb[0].mxu0
  %v204 = vadd.f32 %v124, %v203
  %v205 = vpop.f32.mrb[0].mxu0
  %206 = vdwg.mxu0
  %v207 = vld [vmem:[%s6] sm:$0xff]
  %v208 = vld [vmem:[%s6 + $0x8] sm:$0xff]
  %v209 = vld [vmem:[%s6 + $0x10] sm:$0xff]
  %v210 = vld [vmem:[%s6 + $0x18] sm:$0xff]
  %213 = vrot.lane.b32.xlu0 %v199, 96
  %v214 = vpop.permute.xlu0 %213
  %215 = vrot.lane.b32.xlu0 %v204, 96
  %v216 = vpop.permute.xlu0 %215
  %vm217 = vcmask 64512
  %v218 = vsel %vm217, %v199, 0
  %v220 = vsel %vm217, %v204, 0
  %v222 = vsel %vm217, %v214, 0
  %v224 = vsel %vm217, %v216, 0
  %226 = vmatprep.subr.mxu0 0.0
  %227 = vmatpush1.xpose.msra.mxu0 %v222
  %228 = vmatprep.subr.mxu0 0.0
  %229 = vmatpush1.xpose.msra.mxu0 %v224
  %230 = vmatprep.subr.mxu0 0.0
  %231 = vmatpush1.xpose.msra.mxu0 0.0
  %232 = vmatprep.subr.mxu0 0.0
  %233 = vmatpush1.xpose.msra.mxu0 0.0
  %234 = vmatprep.subr.mxu0 0.0
  %235 = vmatpush1.xpose.msra.mxu0 0.0
  %236 = vmatprep.subr.mxu0 0.0
  %237 = vmatpush1.xpose.msra.mxu0 0.0
  %238 = vmatprep.subr.mxu0 0.0
  %239 = vmatpush1.xpose.msra.mxu0 0.0
  %240 = vmatprep.subr.mxu0 0.0
  %241 = vmatpush1.xpose.msra.mxu0 0.0
  %242 = vmatprep.subr.mxu0 0.0
  %243 = vmatpush1.xpose.msra.mxu0 0.0
  %244 = vmatprep.subr.mxu0 0.0
  %245 = vmatpush1.xpose.msra.mxu0 0.0
  %246 = vmatprep.subr.mxu0 0.0
  %247 = vmatpush1.xpose.msra.mxu0 0.0
  %248 = vmatprep.subr.mxu0 0.0
  %249 = vmatpush1.xpose.msra.mxu0 0.0
  %250 = vmatprep.subr.mxu0 0.0
  %251 = vmatpush1.xpose.msra.mxu0 0.0
  %252 = vmatprep.subr.mxu0 0.0
  %253 = vmatpush1.xpose.msra.mxu0 0.0
  %254 = vmatprep.subr.mxu0 0.0
  %255 = vmatpush1.xpose.msra.mxu0 0.0
  %256 = vmatprep.subr.mxu0 0.0
  %257 = vmatpush1.xpose.msra.mxu0 0.0
  %258 = vmatprep.subr.mxu0 0.0
  %259 = vmatpush1.xpose.msra.mxu0 0.0
  %260 = vmatprep.subr.mxu0 0.0
  %261 = vmatpush1.xpose.msra.mxu0 0.0
  %262 = vmatprep.subr.mxu0 0.0
  %263 = vmatpush1.xpose.msra.mxu0 0.0
  %264 = vmatprep.subr.mxu0 0.0
  %265 = vmatpush1.xpose.msra.mxu0 0.0
  %266 = vmatprep.subr.mxu0 0.0
  %267 = vmatpush1.xpose.msra.mxu0 0.0
  %268 = vmatprep.subr.mxu0 0.0
  %269 = vmatpush1.xpose.msra.mxu0 0.0
  %270 = vmatprep.subr.mxu0 0.0
  %271 = vmatpush1.xpose.msra.mxu0 0.0
  %272 = vmatprep.subr.mxu0 0.0
  %273 = vmatpush1.xpose.msra.mxu0 0.0
  %274 = vmatprep.subr.mxu0 0.0
  %275 = vmatpush1.xpose.msra.mxu0 0.0
  %276 = vmatprep.subr.mxu0 0.0
  %277 = vmatpush1.xpose.msra.mxu0 0.0
  %278 = vmatprep.subr.mxu0 0.0
  %279 = vmatpush1.xpose.msra.mxu0 0.0
  %280 = vmatprep.subr.mxu0 0.0
  %281 = vmatpush1.xpose.msra.mxu0 0.0
  %282 = vmatprep.subr.mxu0 0.0
  %283 = vmatpush1.xpose.msra.mxu0 0.0
  %284 = vmatprep.subr.mxu0 0.0
  %285 = vmatpush1.xpose.msra.mxu0 0.0
  %286 = vmatprep.subr.mxu0 0.0
  %287 = vmatpush1.xpose.msra.mxu0 0.0
  %288 = vmatprep.subr.mxu0 0.0
  %289 = vmatpush1.xpose.msra.mxu0 0.0
  %290 = vmatprep.mubr.f32.mxu0 0.0
  %291 = vmatmul.mubr.f32.gmra.mrb[0].mxu0 %v218
  %v292 = vpop.f32.mrb[0].mxu0
  %v293 = vadd.f32 %v113, %v292
  %v294 = vpop.f32.mrb[0].mxu0
  %295 = vmatprep.mubr.f32.mxu0 0.0
  %296 = vmatmul.mubr.f32.gmra.mrb[0].mxu0 %v220
  %v297 = vpop.f32.mrb[0].mxu0
  %v298 = vadd.f32 %v114, %v297
  %v299 = vpop.f32.mrb[0].mxu0
  %300 = vdwg.mxu0
  %vm301 = vcmask 130048
  %v302 = vsel %vm301, %v293, -inf
  %303 = vmax.xlane.f32.xlu0 %v302
  %v304 = vpop.xlane.xlu0 %303
  %v305 = vsel %vm301, %v298, -inf
  %306 = vmax.xlane.f32.xlu0 %v305
  %v307 = vpop.xlane.xlu0 %306
  %v308 = vsub.f32 %v293, %v304
  %v309 = vsub.f32 %v298, %v307
  %v310 = vmul.f32 %v308, 1.442695
  %v311 = vpow.pop %v310
  %v312 = vmul.f32 %v309, 1.442695
  %v313 = vpow.pop %v312
  %v314 = vsel %vm301, %v311, 0.0
  %315 = vadd.xlane.f32.xlu0 %v314
  %v316 = vpop.xlane.xlu0 %315
  %v317 = vsel %vm301, %v313, 0.0
  %318 = vadd.xlane.f32.xlu0 %v317
  %v319 = vpop.xlane.xlu0 %318
  %v320 = vrcp.pop %v316
  %v321 = vrcp.pop %v319
  %v322 = vmul.f32 %v311, %v320
  %v323 = vmul.f32 %v313, %v321
  %324 = vrot.lane.b32.xlu0 %v199, 64
  %v325 = vpop.permute.xlu0 %324
  %326 = vrot.lane.b32.xlu0 %v204, 64
  %v327 = vpop.permute.xlu0 %326
  %v331 = vsel %vm301, %v322, 0
  %v334 = vsel %vm301, %v323, 0
  %336 = vmatprep.subr.mxu0 0.0
  %337 = vmatpush1.msra.mxu0 %v325
  %338 = vmatprep.subr.mxu0 0.0
  %339 = vmatpush1.msra.mxu0 %v327
  %340 = vmatprep.subr.mxu0 0.0
  %341 = vmatpush1.msra.mxu0 0.0
  %342 = vmatprep.subr.mxu0 0.0
  %343 = vmatpush1.msra.mxu0 0.0
  %344 = vmatprep.subr.mxu0 0.0
  %345 = vmatpush1.msra.mxu0 0.0
  %346 = vmatprep.subr.mxu0 0.0
  %347 = vmatpush1.msra.mxu0 0.0
  %348 = vmatprep.subr.mxu0 0.0
  %349 = vmatpush1.msra.mxu0 0.0
  %350 = vmatprep.subr.mxu0 0.0
  %351 = vmatpush1.msra.mxu0 0.0
  %352 = vmatprep.subr.mxu0 0.0
  %353 = vmatpush1.msra.mxu0 0.0
  %354 = vmatprep.subr.mxu0 0.0
  %355 = vmatpush1.msra.mxu0 0.0
  %356 = vmatprep.subr.mxu0 0.0
  %357 = vmatpush1.msra.mxu0 0.0
  %358 = vmatprep.subr.mxu0 0.0
  %359 = vmatpush1.msra.mxu0 0.0
  %360 = vmatprep.subr.mxu0 0.0
  %361 = vmatpush1.msra.mxu0 0.0
  %362 = vmatprep.subr.mxu0 0.0
  %363 = vmatpush1.msra.mxu0 0.0
  %364 = vmatprep.subr.mxu0 0.0
  %365 = vmatpush1.msra.mxu0 0.0
  %366 = vmatprep.subr.mxu0 0.0
  %367 = vmatpush1.msra.mxu0 0.0
  %368 = vmatprep.subr.mxu0 0.0
  %369 = vmatpush1.msra.mxu0 0.0
  %370 = vmatprep.subr.mxu0 0.0
  %371 = vmatpush1.msra.mxu0 0.0
  %372 = vmatprep.subr.mxu0 0.0
  %373 = vmatpush1.msra.mxu0 0.0
  %374 = vmatprep.subr.mxu0 0.0
  %375 = vmatpush1.msra.mxu0 0.0
  %376 = vmatprep.subr.mxu0 0.0
  %377 = vmatpush1.msra.mxu0 0.0
  %378 = vmatprep.subr.mxu0 0.0
  %379 = vmatpush1.msra.mxu0 0.0
  %380 = vmatprep.subr.mxu0 0.0
  %381 = vmatpush1.msra.mxu0 0.0
  %382 = vmatprep.subr.mxu0 0.0
  %383 = vmatpush1.msra.mxu0 0.0
  %384 = vmatprep.subr.mxu0 0.0
  %385 = vmatpush1.msra.mxu0 0.0
  %386 = vmatprep.subr.mxu0 0.0
  %387 = vmatpush1.msra.mxu0 0.0
  %388 = vmatprep.subr.mxu0 0.0
  %389 = vmatpush1.msra.mxu0 0.0
  %390 = vmatprep.subr.mxu0 0.0
  %391 = vmatpush1.msra.mxu0 0.0
  %392 = vmatprep.subr.mxu0 0.0
  %393 = vmatpush1.msra.mxu0 0.0
  %394 = vmatprep.subr.mxu0 0.0
  %395 = vmatpush1.msra.mxu0 0.0
  %396 = vmatprep.subr.mxu0 0.0
  %397 = vmatpush1.msra.mxu0 0.0
  %398 = vmatprep.subr.mxu0 0.0
  %399 = vmatpush1.msra.mxu0 0.0
  %400 = vmatprep.mubr.f32.mxu0 0.0
  %401 = vmatmul.mubr.f32.gmra.mrb[0].mxu0 %v331
  %v402 = vpop.f32.mrb[0].mxu0
  %v403 = vadd.f32 0.0, %v402
  %v404 = vpop.f32.mrb[0].mxu0
  %405 = vmatprep.mubr.f32.mxu0 0.0
  %406 = vmatmul.mubr.f32.gmra.mrb[0].mxu0 %v334
  %v407 = vpop.f32.mrb[0].mxu0
  %v408 = vadd.f32 0.0, %v407
  %v409 = vpop.f32.mrb[0].mxu0
  %410 = vdwg.mxu0
  %411 = vrot.lane.b32.xlu0 %v199, 120
  %v412 = vpop.permute.xlu0 %411
  %413 = vrot.lane.b32.xlu0 %v204, 120
  %v414 = vpop.permute.xlu0 %413
  %415 = vrot.lane.b32.xlu0 %v199, 88
  %v416 = vpop.permute.xlu0 %415
  %417 = vrot.lane.b32.xlu0 %v204, 88
  %v418 = vpop.permute.xlu0 %417
  %v419 = vsel %vm217, %v412, 0
  %v421 = vsel %vm217, %v414, 0
  %v423 = vsel %vm217, %v416, 0
  %v425 = vsel %vm217, %v418, 0
  %427 = vmatprep.subr.mxu0 0.0
  %428 = vmatpush1.xpose.msra.mxu0 %v423
  %429 = vmatprep.subr.mxu0 0.0
  %430 = vmatpush1.xpose.msra.mxu0 %v425
  %431 = vmatprep.subr.mxu0 0.0
  %432 = vmatpush1.xpose.msra.mxu0 0.0
  %433 = vmatprep.subr.mxu0 0.0
  %434 = vmatpush1.xpose.msra.mxu0 0.0
  %435 = vmatprep.subr.mxu0 0.0
  %436 = vmatpush1.xpose.msra.mxu0 0.0
  %437 = vmatprep.subr.mxu0 0.0
  %438 = vmatpush1.xpose.msra.mxu0 0.0
  %439 = vmatprep.subr.mxu0 0.0
  %440 = vmatpush1.xpose.msra.mxu0 0.0
  %441 = vmatprep.subr.mxu0 0.0
  %442 = vmatpush1.xpose.msra.mxu0 0.0
  %443 = vmatprep.subr.mxu0 0.0
  %444 = vmatpush1.xpose.msra.mxu0 0.0
  %445 = vmatprep.subr.mxu0 0.0
  %446 = vmatpush1.xpose.msra.mxu0 0.0
  %447 = vmatprep.subr.mxu0 0.0
  %448 = vmatpush1.xpose.msra.mxu0 0.0
  %449 = vmatprep.subr.mxu0 0.0
  %450 = vmatpush1.xpose.msra.mxu0 0.0
  %451 = vmatprep.subr.mxu0 0.0
  %452 = vmatpush1.xpose.msra.mxu0 0.0
  %453 = vmatprep.subr.mxu0 0.0
  %454 = vmatpush1.xpose.msra.mxu0 0.0
  %455 = vmatprep.subr.mxu0 0.0
  %456 = vmatpush1.xpose.msra.mxu0 0.0
  %457 = vmatprep.subr.mxu0 0.0
  %458 = vmatpush1.xpose.msra.mxu0 0.0
  %459 = vmatprep.subr.mxu0 0.0
  %460 = vmatpush1.xpose.msra.mxu0 0.0
  %461 = vmatprep.subr.mxu0 0.0
  %462 = vmatpush1.xpose.msra.mxu0 0.0
  %463 = vmatprep.subr.mxu0 0.0
  %464 = vmatpush1.xpose.msra.mxu0 0.0
  %465 = vmatprep.subr.mxu0 0.0
  %466 = vmatpush1.xpose.msra.mxu0 0.0
  %467 = vmatprep.subr.mxu0 0.0
  %468 = vmatpush1.xpose.msra.mxu0 0.0
  %469 = vmatprep.subr.mxu0 0.0
  %470 = vmatpush1.xpose.msra.mxu0 0.0
  %471 = vmatprep.subr.mxu0 0.0
  %472 = vmatpush1.xpose.msra.mxu0 0.0
  %473 = vmatprep.subr.mxu0 0.0
  %474 = vmatpush1.xpose.msra.mxu0 0.0
  %475 = vmatprep.subr.mxu0 0.0
  %476 = vmatpush1.xpose.msra.mxu0 0.0
  %477 = vmatprep.subr.mxu0 0.0
  %478 = vmatpush1.xpose.msra.mxu0 0.0
  %479 = vmatprep.subr.mxu0 0.0
  %480 = vmatpush1.xpose.msra.mxu0 0.0
  %481 = vmatprep.subr.mxu0 0.0
  %482 = vmatpush1.xpose.msra.mxu0 0.0
  %483 = vmatprep.subr.mxu0 0.0
  %484 = vmatpush1.xpose.msra.mxu0 0.0
  %485 = vmatprep.subr.mxu0 0.0
  %486 = vmatpush1.xpose.msra.mxu0 0.0
  %487 = vmatprep.subr.mxu0 0.0
  %488 = vmatpush1.xpose.msra.mxu0 0.0
  %489 = vmatprep.subr.mxu0 0.0
  %490 = vmatpush1.xpose.msra.mxu0 0.0
  %491 = vmatprep.mubr.f32.mxu0 0.0
  %492 = vmatmul.mubr.f32.gmra.mrb[0].mxu0 %v419
  %v493 = vpop.f32.mrb[0].mxu0
  %v494 = vadd.f32 %v113, %v493
  %v495 = vpop.f32.mrb[0].mxu0
  %496 = vmatprep.mubr.f32.mxu0 0.0
  %497 = vmatmul.mubr.f32.gmra.mrb[0].mxu0 %v421
  %v498 = vpop.f32.mrb[0].mxu0
  %v499 = vadd.f32 %v114, %v498
  %v500 = vpop.f32.mrb[0].mxu0
  %501 = vdwg.mxu0
  %v502 = vsel %vm301, %v494, -inf
  %503 = vmax.xlane.f32.xlu0 %v502
  %v504 = vpop.xlane.xlu0 %503
  %v505 = vsel %vm301, %v499, -inf
  %506 = vmax.xlane.f32.xlu0 %v505
  %v507 = vpop.xlane.xlu0 %506
  %v508 = vsub.f32 %v494, %v504
  %v509 = vsub.f32 %v499, %v507
  %v510 = vmul.f32 %v508, 1.442695
  %v511 = vpow.pop %v510
  %v512 = vmul.f32 %v509, 1.442695
  %v513 = vpow.pop %v512
  %v514 = vsel %vm301, %v511, 0.0
  %515 = vadd.xlane.f32.xlu0 %v514
  %v516 = vpop.xlane.xlu0 %515
  %v517 = vsel %vm301, %v513, 0.0
  %518 = vadd.xlane.f32.xlu0 %v517
  %v519 = vpop.xlane.xlu0 %518
  %v520 = vrcp.pop %v516
  %v521 = vrcp.pop %v519
  %v522 = vmul.f32 %v511, %v520
  %v523 = vmul.f32 %v513, %v521
  %524 = vrot.lane.b32.xlu0 %v199, 56
  %v525 = vpop.permute.xlu0 %524
  %526 = vrot.lane.b32.xlu0 %v204, 56
  %v527 = vpop.permute.xlu0 %526
  %v531 = vsel %vm301, %v522, 0
  %v534 = vsel %vm301, %v523, 0
  %536 = vmatprep.subr.mxu0 0.0
  %537 = vmatpush1.msra.mxu0 %v525
  %538 = vmatprep.subr.mxu0 0.0
  %539 = vmatpush1.msra.mxu0 %v527
  %540 = vmatprep.subr.mxu0 0.0
  %541 = vmatpush1.msra.mxu0 0.0
  %542 = vmatprep.subr.mxu0 0.0
  %543 = vmatpush1.msra.mxu0 0.0
  %544 = vmatprep.subr.mxu0 0.0
  %545 = vmatpush1.msra.mxu0 0.0
  %546 = vmatprep.subr.mxu0 0.0
  %547 = vmatpush1.msra.mxu0 0.0
  %548 = vmatprep.subr.mxu0 0.0
  %549 = vmatpush1.msra.mxu0 0.0
  %550 = vmatprep.subr.mxu0 0.0
  %551 = vmatpush1.msra.mxu0 0.0
  %552 = vmatprep.subr.mxu0 0.0
  %553 = vmatpush1.msra.mxu0 0.0
  %554 = vmatprep.subr.mxu0 0.0
  %555 = vmatpush1.msra.mxu0 0.0
  %556 = vmatprep.subr.mxu0 0.0
  %557 = vmatpush1.msra.mxu0 0.0
  %558 = vmatprep.subr.mxu0 0.0
  %559 = vmatpush1.msra.mxu0 0.0
  %560 = vmatprep.subr.mxu0 0.0
  %561 = vmatpush1.msra.mxu0 0.0
  %562 = vmatprep.subr.mxu0 0.0
  %563 = vmatpush1.msra.mxu0 0.0
  %564 = vmatprep.subr.mxu0 0.0
  %565 = vmatpush1.msra.mxu0 0.0
  %566 = vmatprep.subr.mxu0 0.0
  %567 = vmatpush1.msra.mxu0 0.0
  %568 = vmatprep.subr.mxu0 0.0
  %569 = vmatpush1.msra.mxu0 0.0
  %570 = vmatprep.subr.mxu0 0.0
  %571 = vmatpush1.msra.mxu0 0.0
  %572 = vmatprep.subr.mxu0 0.0
  %573 = vmatpush1.msra.mxu0 0.0
  %574 = vmatprep.subr.mxu0 0.0
  %575 = vmatpush1.msra.mxu0 0.0
  %576 = vmatprep.subr.mxu0 0.0
  %577 = vmatpush1.msra.mxu0 0.0
  %578 = vmatprep.subr.mxu0 0.0
  %579 = vmatpush1.msra.mxu0 0.0
  %580 = vmatprep.subr.mxu0 0.0
  %581 = vmatpush1.msra.mxu0 0.0
  %582 = vmatprep.subr.mxu0 0.0
  %583 = vmatpush1.msra.mxu0 0.0
  %584 = vmatprep.subr.mxu0 0.0
  %585 = vmatpush1.msra.mxu0 0.0
  %586 = vmatprep.subr.mxu0 0.0
  %587 = vmatpush1.msra.mxu0 0.0
  %588 = vmatprep.subr.mxu0 0.0
  %589 = vmatpush1.msra.mxu0 0.0
  %590 = vmatprep.subr.mxu0 0.0
  %591 = vmatpush1.msra.mxu0 0.0
  %592 = vmatprep.subr.mxu0 0.0
  %593 = vmatpush1.msra.mxu0 0.0
  %594 = vmatprep.subr.mxu0 0.0
  %595 = vmatpush1.msra.mxu0 0.0
  %596 = vmatprep.subr.mxu0 0.0
  %597 = vmatpush1.msra.mxu0 0.0
  %598 = vmatprep.subr.mxu0 0.0
  %599 = vmatpush1.msra.mxu0 0.0
  %600 = vmatprep.mubr.f32.mxu0 0.0
  %601 = vmatmul.mubr.f32.gmra.mrb[0].mxu0 %v531
  %v602 = vpop.f32.mrb[0].mxu0
  %v603 = vadd.f32 0.0, %v602
  %v604 = vpop.f32.mrb[0].mxu0
  %605 = vmatprep.mubr.f32.mxu0 0.0
  %606 = vmatmul.mubr.f32.gmra.mrb[0].mxu0 %v534
  %v607 = vpop.f32.mrb[0].mxu0
  %v608 = vadd.f32 0.0, %v607
  %v609 = vpop.f32.mrb[0].mxu0
  %610 = vdwg.mxu0
  %v612 = vsel %vm217, %v603, 0
  %v615 = vsel %vm217, %v608, 0
  %617 = vmatprep.subr.mxu0 0.0
  %618 = vmatpush1.msra.mxu0 %v208
  %619 = vmatprep.subr.mxu0 0.0
  %620 = vmatpush1.msra.mxu0 0.0
  %621 = vmatprep.subr.mxu0 0.0
  %622 = vmatpush1.msra.mxu0 0.0
  %623 = vmatprep.subr.mxu0 0.0
  %624 = vmatpush1.msra.mxu0 0.0
  %625 = vmatprep.subr.mxu0 0.0
  %626 = vmatpush1.msra.mxu0 0.0
  %627 = vmatprep.subr.mxu0 0.0
  %628 = vmatpush1.msra.mxu0 0.0
  %629 = vmatprep.subr.mxu0 0.0
  %630 = vmatpush1.msra.mxu0 0.0
  %631 = vmatprep.subr.mxu0 0.0
  %632 = vmatpush1.msra.mxu0 0.0
  %633 = vmatprep.subr.mxu0 0.0
  %634 = vmatpush1.msra.mxu0 0.0
  %635 = vmatprep.subr.mxu0 0.0
  %636 = vmatpush1.msra.mxu0 0.0
  %637 = vmatprep.subr.mxu0 0.0
  %638 = vmatpush1.msra.mxu0 0.0
  %639 = vmatprep.subr.mxu0 0.0
  %640 = vmatpush1.msra.mxu0 0.0
  %641 = vmatprep.subr.mxu0 0.0
  %642 = vmatpush1.msra.mxu0 0.0
  %643 = vmatprep.subr.mxu0 0.0
  %644 = vmatpush1.msra.mxu0 0.0
  %645 = vmatprep.subr.mxu0 0.0
  %646 = vmatpush1.msra.mxu0 0.0
  %647 = vmatprep.subr.mxu0 0.0
  %648 = vmatpush1.msra.mxu0 0.0
  %649 = vmatprep.subr.mxu0 0.0
  %650 = vmatpush1.msra.mxu0 0.0
  %651 = vmatprep.subr.mxu0 0.0
  %652 = vmatpush1.msra.mxu0 0.0
  %653 = vmatprep.subr.mxu0 0.0
  %654 = vmatpush1.msra.mxu0 0.0
  %655 = vmatprep.subr.mxu0 0.0
  %656 = vmatpush1.msra.mxu0 0.0
  %657 = vmatprep.subr.mxu0 0.0
  %658 = vmatpush1.msra.mxu0 0.0
  %659 = vmatprep.subr.mxu0 0.0
  %660 = vmatpush1.msra.mxu0 0.0
  %661 = vmatprep.subr.mxu0 0.0
  %662 = vmatpush1.msra.mxu0 0.0
  %663 = vmatprep.subr.mxu0 0.0
  %664 = vmatpush1.msra.mxu0 0.0
  %665 = vmatprep.subr.mxu0 0.0
  %666 = vmatpush1.msra.mxu0 0.0
  %667 = vmatprep.subr.mxu0 0.0
  %668 = vmatpush1.msra.mxu0 0.0
  %669 = vmatprep.subr.mxu0 0.0
  %670 = vmatpush1.msra.mxu0 0.0
  %671 = vmatprep.subr.mxu0 0.0
  %672 = vmatpush1.msra.mxu0 0.0
  %673 = vmatprep.subr.mxu0 0.0
  %674 = vmatpush1.msra.mxu0 0.0
  %675 = vmatprep.subr.mxu0 0.0
  %676 = vmatpush1.msra.mxu0 0.0
  %677 = vmatprep.subr.mxu0 0.0
  %678 = vmatpush1.msra.mxu0 0.0
  %679 = vmatprep.subr.mxu0 0.0
  %680 = vmatpush1.msra.mxu0 0.0
  %681 = vmatprep.mubr.f32.mxu0 0.0
  %682 = vmatmul.mubr.f32.gmra.mrb[0].mxu0 %v612
  %v683 = vpop.f32.mrb[0].mxu0
  %v684 = vadd.f32 0.0, %v683
  %v685 = vpop.f32.mrb[0].mxu0
  %686 = vmatprep.mubr.f32.mxu0 0.0
  %687 = vmatmul.mubr.f32.gmra.mrb[0].mxu0 %v615
  %v688 = vpop.f32.mrb[0].mxu0
  %v689 = vadd.f32 0.0, %v688
  %v690 = vpop.f32.mrb[0].mxu0
  %691 = vdwg.mxu0
  %v693 = vsel %vm217, %v403, 0
  %v696 = vsel %vm217, %v408, 0
  %698 = vmatprep.subr.mxu0 0.0
  %699 = vmatpush1.msra.mxu0 %v207
  %700 = vmatprep.subr.mxu0 0.0
  %701 = vmatpush1.msra.mxu0 0.0
  %702 = vmatprep.subr.mxu0 0.0
  %703 = vmatpush1.msra.mxu0 0.0
  %704 = vmatprep.subr.mxu0 0.0
  %705 = vmatpush1.msra.mxu0 0.0
  %706 = vmatprep.subr.mxu0 0.0
  %707 = vmatpush1.msra.mxu0 0.0
  %708 = vmatprep.subr.mxu0 0.0
  %709 = vmatpush1.msra.mxu0 0.0
  %710 = vmatprep.subr.mxu0 0.0
  %711 = vmatpush1.msra.mxu0 0.0
  %712 = vmatprep.subr.mxu0 0.0
  %713 = vmatpush1.msra.mxu0 0.0
  %714 = vmatprep.subr.mxu0 0.0
  %715 = vmatpush1.msra.mxu0 0.0
  %716 = vmatprep.subr.mxu0 0.0
  %717 = vmatpush1.msra.mxu0 0.0
  %718 = vmatprep.subr.mxu0 0.0
  %719 = vmatpush1.msra.mxu0 0.0
  %720 = vmatprep.subr.mxu0 0.0
  %721 = vmatpush1.msra.mxu0 0.0
  %722 = vmatprep.subr.mxu0 0.0
  %723 = vmatpush1.msra.mxu0 0.0
  %724 = vmatprep.subr.mxu0 0.0
  %725 = vmatpush1.msra.mxu0 0.0
  %726 = vmatprep.subr.mxu0 0.0
  %727 = vmatpush1.msra.mxu0 0.0
  %728 = vmatprep.subr.mxu0 0.0
  %729 = vmatpush1.msra.mxu0 0.0
  %730 = vmatprep.subr.mxu0 0.0
  %731 = vmatpush1.msra.mxu0 0.0
  %732 = vmatprep.subr.mxu0 0.0
  %733 = vmatpush1.msra.mxu0 0.0
  %734 = vmatprep.subr.mxu0 0.0
  %735 = vmatpush1.msra.mxu0 0.0
  %736 = vmatprep.subr.mxu0 0.0
  %737 = vmatpush1.msra.mxu0 0.0
  %738 = vmatprep.subr.mxu0 0.0
  %739 = vmatpush1.msra.mxu0 0.0
  %740 = vmatprep.subr.mxu0 0.0
  %741 = vmatpush1.msra.mxu0 0.0
  %742 = vmatprep.subr.mxu0 0.0
  %743 = vmatpush1.msra.mxu0 0.0
  %744 = vmatprep.subr.mxu0 0.0
  %745 = vmatpush1.msra.mxu0 0.0
  %746 = vmatprep.subr.mxu0 0.0
  %747 = vmatpush1.msra.mxu0 0.0
  %748 = vmatprep.subr.mxu0 0.0
  %749 = vmatpush1.msra.mxu0 0.0
  %750 = vmatprep.subr.mxu0 0.0
  %751 = vmatpush1.msra.mxu0 0.0
  %752 = vmatprep.subr.mxu0 0.0
  %753 = vmatpush1.msra.mxu0 0.0
  %754 = vmatprep.subr.mxu0 0.0
  %755 = vmatpush1.msra.mxu0 0.0
  %756 = vmatprep.subr.mxu0 0.0
  %757 = vmatpush1.msra.mxu0 0.0
  %758 = vmatprep.subr.mxu0 0.0
  %759 = vmatpush1.msra.mxu0 0.0
  %760 = vmatprep.subr.mxu0 0.0
  %761 = vmatpush1.msra.mxu0 0.0
  %762 = vmatprep.mubr.f32.mxu0 0.0
  %763 = vmatmul.mubr.f32.gmra.mrb[0].mxu0 %v693
  %v764 = vpop.f32.mrb[0].mxu0
  %v765 = vadd.f32 %v684, %v764
  %v766 = vpop.f32.mrb[0].mxu0
  %767 = vmatprep.mubr.f32.mxu0 0.0
  %768 = vmatmul.mubr.f32.gmra.mrb[0].mxu0 %v696
  %v769 = vpop.f32.mrb[0].mxu0
  %v770 = vadd.f32 %v689, %v769
  %v771 = vpop.f32.mrb[0].mxu0
  %772 = vdwg.mxu0
  %773 = vrot.lane.b32.xlu0 %v199, 112
  %v774 = vpop.permute.xlu0 %773
  %775 = vrot.lane.b32.xlu0 %v204, 112
  %v776 = vpop.permute.xlu0 %775
  %777 = vrot.lane.b32.xlu0 %v199, 80
  %v778 = vpop.permute.xlu0 %777
  %779 = vrot.lane.b32.xlu0 %v204, 80
  %v780 = vpop.permute.xlu0 %779
  %v781 = vsel %vm217, %v774, 0
  %v783 = vsel %vm217, %v776, 0
  %v785 = vsel %vm217, %v778, 0
  %v787 = vsel %vm217, %v780, 0
  %789 = vmatprep.subr.mxu0 0.0
  %790 = vmatpush1.xpose.msra.mxu0 %v785
  %791 = vmatprep.subr.mxu0 0.0
  %792 = vmatpush1.xpose.msra.mxu0 %v787
  %793 = vmatprep.subr.mxu0 0.0
  %794 = vmatpush1.xpose.msra.mxu0 0.0
  %795 = vmatprep.subr.mxu0 0.0
  %796 = vmatpush1.xpose.msra.mxu0 0.0
  %797 = vmatprep.subr.mxu0 0.0
  %798 = vmatpush1.xpose.msra.mxu0 0.0
  %799 = vmatprep.subr.mxu0 0.0
  %800 = vmatpush1.xpose.msra.mxu0 0.0
  %801 = vmatprep.subr.mxu0 0.0
  %802 = vmatpush1.xpose.msra.mxu0 0.0
  %803 = vmatprep.subr.mxu0 0.0
  %804 = vmatpush1.xpose.msra.mxu0 0.0
  %805 = vmatprep.subr.mxu0 0.0
  %806 = vmatpush1.xpose.msra.mxu0 0.0
  %807 = vmatprep.subr.mxu0 0.0
  %808 = vmatpush1.xpose.msra.mxu0 0.0
  %809 = vmatprep.subr.mxu0 0.0
  %810 = vmatpush1.xpose.msra.mxu0 0.0
  %811 = vmatprep.subr.mxu0 0.0
  %812 = vmatpush1.xpose.msra.mxu0 0.0
  %813 = vmatprep.subr.mxu0 0.0
  %814 = vmatpush1.xpose.msra.mxu0 0.0
  %815 = vmatprep.subr.mxu0 0.0
  %816 = vmatpush1.xpose.msra.mxu0 0.0
  %817 = vmatprep.subr.mxu0 0.0
  %818 = vmatpush1.xpose.msra.mxu0 0.0
  %819 = vmatprep.subr.mxu0 0.0
  %820 = vmatpush1.xpose.msra.mxu0 0.0
  %821 = vmatprep.subr.mxu0 0.0
  %822 = vmatpush1.xpose.msra.mxu0 0.0
  %823 = vmatprep.subr.mxu0 0.0
  %824 = vmatpush1.xpose.msra.mxu0 0.0
  %825 = vmatprep.subr.mxu0 0.0
  %826 = vmatpush1.xpose.msra.mxu0 0.0
  %827 = vmatprep.subr.mxu0 0.0
  %828 = vmatpush1.xpose.msra.mxu0 0.0
  %829 = vmatprep.subr.mxu0 0.0
  %830 = vmatpush1.xpose.msra.mxu0 0.0
  %831 = vmatprep.subr.mxu0 0.0
  %832 = vmatpush1.xpose.msra.mxu0 0.0
  %833 = vmatprep.subr.mxu0 0.0
  %834 = vmatpush1.xpose.msra.mxu0 0.0
  %835 = vmatprep.subr.mxu0 0.0
  %836 = vmatpush1.xpose.msra.mxu0 0.0
  %837 = vmatprep.subr.mxu0 0.0
  %838 = vmatpush1.xpose.msra.mxu0 0.0
  %839 = vmatprep.subr.mxu0 0.0
  %840 = vmatpush1.xpose.msra.mxu0 0.0
  %841 = vmatprep.subr.mxu0 0.0
  %842 = vmatpush1.xpose.msra.mxu0 0.0
  %843 = vmatprep.subr.mxu0 0.0
  %844 = vmatpush1.xpose.msra.mxu0 0.0
  %845 = vmatprep.subr.mxu0 0.0
  %846 = vmatpush1.xpose.msra.mxu0 0.0
  %847 = vmatprep.subr.mxu0 0.0
  %848 = vmatpush1.xpose.msra.mxu0 0.0
  %849 = vmatprep.subr.mxu0 0.0
  %850 = vmatpush1.xpose.msra.mxu0 0.0
  %851 = vmatprep.subr.mxu0 0.0
  %852 = vmatpush1.xpose.msra.mxu0 0.0
  %853 = vmatprep.mubr.f32.mxu0 0.0
  %854 = vmatmul.mubr.f32.gmra.mrb[0].mxu0 %v781
  %v855 = vpop.f32.mrb[0].mxu0
  %v856 = vadd.f32 %v113, %v855
  %v857 = vpop.f32.mrb[0].mxu0
  %858 = vmatprep.mubr.f32.mxu0 0.0
  %859 = vmatmul.mubr.f32.gmra.mrb[0].mxu0 %v783
  %v860 = vpop.f32.mrb[0].mxu0
  %v861 = vadd.f32 %v114, %v860
  %v862 = vpop.f32.mrb[0].mxu0
  %863 = vdwg.mxu0
  %v864 = vsel %vm301, %v856, -inf
  %865 = vmax.xlane.f32.xlu0 %v864
  %v866 = vpop.xlane.xlu0 %865
  %v867 = vsel %vm301, %v861, -inf
  %868 = vmax.xlane.f32.xlu0 %v867
  %v869 = vpop.xlane.xlu0 %868
  %v870 = vsub.f32 %v856, %v866
  %v871 = vsub.f32 %v861, %v869
  %v872 = vmul.f32 %v870, 1.442695
  %v873 = vpow.pop %v872
  %v874 = vmul.f32 %v871, 1.442695
  %v875 = vpow.pop %v874
  %v876 = vsel %vm301, %v873, 0.0
  %877 = vadd.xlane.f32.xlu0 %v876
  %v878 = vpop.xlane.xlu0 %877
  %v879 = vsel %vm301, %v875, 0.0
  %880 = vadd.xlane.f32.xlu0 %v879
  %v881 = vpop.xlane.xlu0 %880
  %v882 = vrcp.pop %v878
  %v883 = vrcp.pop %v881
  %v884 = vmul.f32 %v873, %v882
  %v885 = vmul.f32 %v875, %v883
  %886 = vrot.lane.b32.xlu0 %v199, 48
  %v887 = vpop.permute.xlu0 %886
  %888 = vrot.lane.b32.xlu0 %v204, 48
  %v889 = vpop.permute.xlu0 %888
  %v893 = vsel %vm301, %v884, 0
  %v896 = vsel %vm301, %v885, 0
  %898 = vmatprep.subr.mxu0 0.0
  %899 = vmatpush1.msra.mxu0 %v887
  %900 = vmatprep.subr.mxu0 0.0
  %901 = vmatpush1.msra.mxu0 %v889
  %902 = vmatprep.subr.mxu0 0.0
  %903 = vmatpush1.msra.mxu0 0.0
  %904 = vmatprep.subr.mxu0 0.0
  %905 = vmatpush1.msra.mxu0 0.0
  %906 = vmatprep.subr.mxu0 0.0
  %907 = vmatpush1.msra.mxu0 0.0
  %908 = vmatprep.subr.mxu0 0.0
  %909 = vmatpush1.msra.mxu0 0.0
  %910 = vmatprep.subr.mxu0 0.0
  %911 = vmatpush1.msra.mxu0 0.0
  %912 = vmatprep.subr.mxu0 0.0
  %913 = vmatpush1.msra.mxu0 0.0
  %914 = vmatprep.subr.mxu0 0.0
  %915 = vmatpush1.msra.mxu0 0.0
  %916 = vmatprep.subr.mxu0 0.0
  %917 = vmatpush1.msra.mxu0 0.0
  %918 = vmatprep.subr.mxu0 0.0
  %919 = vmatpush1.msra.mxu0 0.0
  %920 = vmatprep.subr.mxu0 0.0
  %921 = vmatpush1.msra.mxu0 0.0
  %922 = vmatprep.subr.mxu0 0.0
  %923 = vmatpush1.msra.mxu0 0.0
  %924 = vmatprep.subr.mxu0 0.0
  %925 = vmatpush1.msra.mxu0 0.0
  %926 = vmatprep.subr.mxu0 0.0
  %927 = vmatpush1.msra.mxu0 0.0
  %928 = vmatprep.subr.mxu0 0.0
  %929 = vmatpush1.msra.mxu0 0.0
  %930 = vmatprep.subr.mxu0 0.0
  %931 = vmatpush1.msra.mxu0 0.0
  %932 = vmatprep.subr.mxu0 0.0
  %933 = vmatpush1.msra.mxu0 0.0
  %934 = vmatprep.subr.mxu0 0.0
  %935 = vmatpush1.msra.mxu0 0.0
  %936 = vmatprep.subr.mxu0 0.0
  %937 = vmatpush1.msra.mxu0 0.0
  %938 = vmatprep.subr.mxu0 0.0
  %939 = vmatpush1.msra.mxu0 0.0
  %940 = vmatprep.subr.mxu0 0.0
  %941 = vmatpush1.msra.mxu0 0.0
  %942 = vmatprep.subr.mxu0 0.0
  %943 = vmatpush1.msra.mxu0 0.0
  %944 = vmatprep.subr.mxu0 0.0
  %945 = vmatpush1.msra.mxu0 0.0
  %946 = vmatprep.subr.mxu0 0.0
  %947 = vmatpush1.msra.mxu0 0.0
  %948 = vmatprep.subr.mxu0 0.0
  %949 = vmatpush1.msra.mxu0 0.0
  %950 = vmatprep.subr.mxu0 0.0
  %951 = vmatpush1.msra.mxu0 0.0
  %952 = vmatprep.subr.mxu0 0.0
  %953 = vmatpush1.msra.mxu0 0.0
  %954 = vmatprep.subr.mxu0 0.0
  %955 = vmatpush1.msra.mxu0 0.0
  %956 = vmatprep.subr.mxu0 0.0
  %957 = vmatpush1.msra.mxu0 0.0
  %958 = vmatprep.subr.mxu0 0.0
  %959 = vmatpush1.msra.mxu0 0.0
  %960 = vmatprep.subr.mxu0 0.0
  %961 = vmatpush1.msra.mxu0 0.0
  %962 = vmatprep.mubr.f32.mxu0 0.0
  %963 = vmatmul.mubr.f32.gmra.mrb[0].mxu0 %v893
  %v964 = vpop.f32.mrb[0].mxu0
  %v965 = vadd.f32 0.0, %v964
  %v966 = vpop.f32.mrb[0].mxu0
  %967 = vmatprep.mubr.f32.mxu0 0.0
  %968 = vmatmul.mubr.f32.gmra.mrb[0].mxu0 %v896
  %v969 = vpop.f32.mrb[0].mxu0
  %v970 = vadd.f32 0.0, %v969
  %v971 = vpop.f32.mrb[0].mxu0
  %972 = vdwg.mxu0
  %v974 = vsel %vm217, %v965, 0
  %v977 = vsel %vm217, %v970, 0
  %979 = vmatprep.subr.mxu0 0.0
  %980 = vmatpush1.msra.mxu0 %v209
  %981 = vmatprep.subr.mxu0 0.0
  %982 = vmatpush1.msra.mxu0 0.0
  %983 = vmatprep.subr.mxu0 0.0
  %984 = vmatpush1.msra.mxu0 0.0
  %985 = vmatprep.subr.mxu0 0.0
  %986 = vmatpush1.msra.mxu0 0.0
  %987 = vmatprep.subr.mxu0 0.0
  %988 = vmatpush1.msra.mxu0 0.0
  %989 = vmatprep.subr.mxu0 0.0
  %990 = vmatpush1.msra.mxu0 0.0
  %991 = vmatprep.subr.mxu0 0.0
  %992 = vmatpush1.msra.mxu0 0.0
  %993 = vmatprep.subr.mxu0 0.0
  %994 = vmatpush1.msra.mxu0 0.0
  %995 = vmatprep.subr.mxu0 0.0
  %996 = vmatpush1.msra.mxu0 0.0
  %997 = vmatprep.subr.mxu0 0.0
  %998 = vmatpush1.msra.mxu0 0.0
  %999 = vmatprep.subr.mxu0 0.0
  %1000 = vmatpush1.msra.mxu0 0.0
  %1001 = vmatprep.subr.mxu0 0.0
  %1002 = vmatpush1.msra.mxu0 0.0
  %1003 = vmatprep.subr.mxu0 0.0
  %1004 = vmatpush1.msra.mxu0 0.0
  %1005 = vmatprep.subr.mxu0 0.0
  %1006 = vmatpush1.msra.mxu0 0.0
  %1007 = vmatprep.subr.mxu0 0.0
  %1008 = vmatpush1.msra.mxu0 0.0
  %1009 = vmatprep.subr.mxu0 0.0
  %1010 = vmatpush1.msra.mxu0 0.0
  %1011 = vmatprep.subr.mxu0 0.0
  %1012 = vmatpush1.msra.mxu0 0.0
  %1013 = vmatprep.subr.mxu0 0.0
  %1014 = vmatpush1.msra.mxu0 0.0
  %1015 = vmatprep.subr.mxu0 0.0
  %1016 = vmatpush1.msra.mxu0 0.0
  %1017 = vmatprep.subr.mxu0 0.0
  %1018 = vmatpush1.msra.mxu0 0.0
  %1019 = vmatprep.subr.mxu0 0.0
  %1020 = vmatpush1.msra.mxu0 0.0
  %1021 = vmatprep.subr.mxu0 0.0
  %1022 = vmatpush1.msra.mxu0 0.0
  %1023 = vmatprep.subr.mxu0 0.0
  %1024 = vmatpush1.msra.mxu0 0.0
  %1025 = vmatprep.subr.mxu0 0.0
  %1026 = vmatpush1.msra.mxu0 0.0
  %1027 = vmatprep.subr.mxu0 0.0
  %1028 = vmatpush1.msra.mxu0 0.0
  %1029 = vmatprep.subr.mxu0 0.0
  %1030 = vmatpush1.msra.mxu0 0.0
  %1031 = vmatprep.subr.mxu0 0.0
  %1032 = vmatpush1.msra.mxu0 0.0
  %1033 = vmatprep.subr.mxu0 0.0
  %1034 = vmatpush1.msra.mxu0 0.0
  %1035 = vmatprep.subr.mxu0 0.0
  %1036 = vmatpush1.msra.mxu0 0.0
  %1037 = vmatprep.subr.mxu0 0.0
  %1038 = vmatpush1.msra.mxu0 0.0
  %1039 = vmatprep.subr.mxu0 0.0
  %1040 = vmatpush1.msra.mxu0 0.0
  %1041 = vmatprep.subr.mxu0 0.0
  %1042 = vmatpush1.msra.mxu0 0.0
  %1043 = vmatprep.mubr.f32.mxu0 0.0
  %1044 = vmatmul.mubr.f32.gmra.mrb[0].mxu0 %v974
  %v1045 = vpop.f32.mrb[0].mxu0
  %v1046 = vadd.f32 0.0, %v1045
  %v1047 = vpop.f32.mrb[0].mxu0
  %1048 = vmatprep.mubr.f32.mxu0 0.0
  %1049 = vmatmul.mubr.f32.gmra.mrb[0].mxu0 %v977
  %v1050 = vpop.f32.mrb[0].mxu0
  %v1051 = vadd.f32 0.0, %v1050
  %v1052 = vpop.f32.mrb[0].mxu0
  %1053 = vdwg.mxu0
  %v1054 = vadd.f32 %v765, %v1046
  %v1055 = vadd.f32 %v770, %v1051
  %1056 = vrot.lane.b32.xlu0 %v199, 104
  %v1057 = vpop.permute.xlu0 %1056
  %1058 = vrot.lane.b32.xlu0 %v204, 104
  %v1059 = vpop.permute.xlu0 %1058
  %1060 = vrot.lane.b32.xlu0 %v199, 72
  %v1061 = vpop.permute.xlu0 %1060
  %1062 = vrot.lane.b32.xlu0 %v204, 72
  %v1063 = vpop.permute.xlu0 %1062
  %v1064 = vsel %vm217, %v1057, 0
  %v1066 = vsel %vm217, %v1059, 0
  %v1068 = vsel %vm217, %v1061, 0
  %v1070 = vsel %vm217, %v1063, 0
  %1072 = vmatprep.subr.mxu0 0.0
  %1073 = vmatpush1.xpose.msra.mxu0 %v1068
  %1074 = vmatprep.subr.mxu0 0.0
  %1075 = vmatpush1.xpose.msra.mxu0 %v1070
  %1076 = vmatprep.subr.mxu0 0.0
  %1077 = vmatpush1.xpose.msra.mxu0 0.0
  %1078 = vmatprep.subr.mxu0 0.0
  %1079 = vmatpush1.xpose.msra.mxu0 0.0
  %1080 = vmatprep.subr.mxu0 0.0
  %1081 = vmatpush1.xpose.msra.mxu0 0.0
  %1082 = vmatprep.subr.mxu0 0.0
  %1083 = vmatpush1.xpose.msra.mxu0 0.0
  %1084 = vmatprep.subr.mxu0 0.0
  %1085 = vmatpush1.xpose.msra.mxu0 0.0
  %1086 = vmatprep.subr.mxu0 0.0
  %1087 = vmatpush1.xpose.msra.mxu0 0.0
  %1088 = vmatprep.subr.mxu0 0.0
  %1089 = vmatpush1.xpose.msra.mxu0 0.0
  %1090 = vmatprep.subr.mxu0 0.0
  %1091 = vmatpush1.xpose.msra.mxu0 0.0
  %1092 = vmatprep.subr.mxu0 0.0
  %1093 = vmatpush1.xpose.msra.mxu0 0.0
  %1094 = vmatprep.subr.mxu0 0.0
  %1095 = vmatpush1.xpose.msra.mxu0 0.0
  %1096 = vmatprep.subr.mxu0 0.0
  %1097 = vmatpush1.xpose.msra.mxu0 0.0
  %1098 = vmatprep.subr.mxu0 0.0
  %1099 = vmatpush1.xpose.msra.mxu0 0.0
  %1100 = vmatprep.subr.mxu0 0.0
  %1101 = vmatpush1.xpose.msra.mxu0 0.0
  %1102 = vmatprep.subr.mxu0 0.0
  %1103 = vmatpush1.xpose.msra.mxu0 0.0
  %1104 = vmatprep.subr.mxu0 0.0
  %1105 = vmatpush1.xpose.msra.mxu0 0.0
  %1106 = vmatprep.subr.mxu0 0.0
  %1107 = vmatpush1.xpose.msra.mxu0 0.0
  %1108 = vmatprep.subr.mxu0 0.0
  %1109 = vmatpush1.xpose.msra.mxu0 0.0
  %1110 = vmatprep.subr.mxu0 0.0
  %1111 = vmatpush1.xpose.msra.mxu0 0.0
  %1112 = vmatprep.subr.mxu0 0.0
  %1113 = vmatpush1.xpose.msra.mxu0 0.0
  %1114 = vmatprep.subr.mxu0 0.0
  %1115 = vmatpush1.xpose.msra.mxu0 0.0
  %1116 = vmatprep.subr.mxu0 0.0
  %1117 = vmatpush1.xpose.msra.mxu0 0.0
  %1118 = vmatprep.subr.mxu0 0.0
  %1119 = vmatpush1.xpose.msra.mxu0 0.0
  %1120 = vmatprep.subr.mxu0 0.0
  %1121 = vmatpush1.xpose.msra.mxu0 0.0
  %1122 = vmatprep.subr.mxu0 0.0
  %1123 = vmatpush1.xpose.msra.mxu0 0.0
  %1124 = vmatprep.subr.mxu0 0.0
  %1125 = vmatpush1.xpose.msra.mxu0 0.0
  %1126 = vmatprep.subr.mxu0 0.0
  %1127 = vmatpush1.xpose.msra.mxu0 0.0
  %1128 = vmatprep.subr.mxu0 0.0
  %1129 = vmatpush1.xpose.msra.mxu0 0.0
  %1130 = vmatprep.subr.mxu0 0.0
  %1131 = vmatpush1.xpose.msra.mxu0 0.0
  %1132 = vmatprep.subr.mxu0 0.0
  %1133 = vmatpush1.xpose.msra.mxu0 0.0
  %1134 = vmatprep.subr.mxu0 0.0
  %1135 = vmatpush1.xpose.msra.mxu0 0.0
  %1136 = vmatprep.mubr.f32.mxu0 0.0
  %1137 = vmatmul.mubr.f32.gmra.mrb[0].mxu0 %v1064
  %v1138 = vpop.f32.mrb[0].mxu0
  %v1139 = vadd.f32 %v113, %v1138
  %v1140 = vpop.f32.mrb[0].mxu0
  %1141 = vmatprep.mubr.f32.mxu0 0.0
  %1142 = vmatmul.mubr.f32.gmra.mrb[0].mxu0 %v1066
  %v1143 = vpop.f32.mrb[0].mxu0
  %v1144 = vadd.f32 %v114, %v1143
  %v1145 = vpop.f32.mrb[0].mxu0
  %1146 = vdwg.mxu0
  %v1147 = vsel %vm301, %v1139, -inf
  %1148 = vmax.xlane.f32.xlu0 %v1147
  %v1149 = vpop.xlane.xlu0 %1148
  %v1150 = vsel %vm301, %v1144, -inf
  %1151 = vmax.xlane.f32.xlu0 %v1150
  %v1152 = vpop.xlane.xlu0 %1151
  %v1153 = vsub.f32 %v1139, %v1149
  %v1154 = vsub.f32 %v1144, %v1152
  %v1155 = vmul.f32 %v1153, 1.442695
  %v1156 = vpow.pop %v1155
  %v1157 = vmul.f32 %v1154, 1.442695
  %v1158 = vpow.pop %v1157
  %v1159 = vsel %vm301, %v1156, 0.0
  %1160 = vadd.xlane.f32.xlu0 %v1159
  %v1161 = vpop.xlane.xlu0 %1160
  %v1162 = vsel %vm301, %v1158, 0.0
  %1163 = vadd.xlane.f32.xlu0 %v1162
  %v1164 = vpop.xlane.xlu0 %1163
  %v1165 = vrcp.pop %v1161
  %v1166 = vrcp.pop %v1164
  %v1167 = vmul.f32 %v1156, %v1165
  %v1168 = vmul.f32 %v1158, %v1166
  %1169 = vrot.lane.b32.xlu0 %v199, 40
  %v1170 = vpop.permute.xlu0 %1169
  %1171 = vrot.lane.b32.xlu0 %v204, 40
  %v1172 = vpop.permute.xlu0 %1171
  %v1176 = vsel %vm301, %v1167, 0
  %v1179 = vsel %vm301, %v1168, 0
  %1181 = vmatprep.subr.mxu0 0.0
  %1182 = vmatpush1.msra.mxu0 %v1170
  %1183 = vmatprep.subr.mxu0 0.0
  %1184 = vmatpush1.msra.mxu0 %v1172
  %1185 = vmatprep.subr.mxu0 0.0
  %1186 = vmatpush1.msra.mxu0 0.0
  %1187 = vmatprep.subr.mxu0 0.0
  %1188 = vmatpush1.msra.mxu0 0.0
  %1189 = vmatprep.subr.mxu0 0.0
  %1190 = vmatpush1.msra.mxu0 0.0
  %1191 = vmatprep.subr.mxu0 0.0
  %1192 = vmatpush1.msra.mxu0 0.0
  %1193 = vmatprep.subr.mxu0 0.0
  %1194 = vmatpush1.msra.mxu0 0.0
  %1195 = vmatprep.subr.mxu0 0.0
  %1196 = vmatpush1.msra.mxu0 0.0
  %1197 = vmatprep.subr.mxu0 0.0
  %1198 = vmatpush1.msra.mxu0 0.0
  %1199 = vmatprep.subr.mxu0 0.0
  %1200 = vmatpush1.msra.mxu0 0.0
  %1201 = vmatprep.subr.mxu0 0.0
  %1202 = vmatpush1.msra.mxu0 0.0
  %1203 = vmatprep.subr.mxu0 0.0
  %1204 = vmatpush1.msra.mxu0 0.0
  %1205 = vmatprep.subr.mxu0 0.0
  %1206 = vmatpush1.msra.mxu0 0.0
  %1207 = vmatprep.subr.mxu0 0.0
  %1208 = vmatpush1.msra.mxu0 0.0
  %1209 = vmatprep.subr.mxu0 0.0
  %1210 = vmatpush1.msra.mxu0 0.0
  %1211 = vmatprep.subr.mxu0 0.0
  %1212 = vmatpush1.msra.mxu0 0.0
  %1213 = vmatprep.subr.mxu0 0.0
  %1214 = vmatpush1.msra.mxu0 0.0
  %1215 = vmatprep.subr.mxu0 0.0
  %1216 = vmatpush1.msra.mxu0 0.0
  %1217 = vmatprep.subr.mxu0 0.0
  %1218 = vmatpush1.msra.mxu0 0.0
  %1219 = vmatprep.subr.mxu0 0.0
  %1220 = vmatpush1.msra.mxu0 0.0
  %1221 = vmatprep.subr.mxu0 0.0
  %1222 = vmatpush1.msra.mxu0 0.0
  %1223 = vmatprep.subr.mxu0 0.0
  %1224 = vmatpush1.msra.mxu0 0.0
  %1225 = vmatprep.subr.mxu0 0.0
  %1226 = vmatpush1.msra.mxu0 0.0
  %1227 = vmatprep.subr.mxu0 0.0
  %1228 = vmatpush1.msra.mxu0 0.0
  %1229 = vmatprep.subr.mxu0 0.0
  %1230 = vmatpush1.msra.mxu0 0.0
  %1231 = vmatprep.subr.mxu0 0.0
  %1232 = vmatpush1.msra.mxu0 0.0
  %1233 = vmatprep.subr.mxu0 0.0
  %1234 = vmatpush1.msra.mxu0 0.0
  %1235 = vmatprep.subr.mxu0 0.0
  %1236 = vmatpush1.msra.mxu0 0.0
  %1237 = vmatprep.subr.mxu0 0.0
  %1238 = vmatpush1.msra.mxu0 0.0
  %1239 = vmatprep.subr.mxu0 0.0
  %1240 = vmatpush1.msra.mxu0 0.0
  %1241 = vmatprep.subr.mxu0 0.0
  %1242 = vmatpush1.msra.mxu0 0.0
  %1243 = vmatprep.subr.mxu0 0.0
  %1244 = vmatpush1.msra.mxu0 0.0
  %1245 = vmatprep.mubr.f32.mxu0 0.0
  %1246 = vmatmul.mubr.f32.gmra.mrb[0].mxu0 %v1176
  %v1247 = vpop.f32.mrb[0].mxu0
  %v1248 = vadd.f32 0.0, %v1247
  %v1249 = vpop.f32.mrb[0].mxu0
  %1250 = vmatprep.mubr.f32.mxu0 0.0
  %1251 = vmatmul.mubr.f32.gmra.mrb[0].mxu0 %v1179
  %v1252 = vpop.f32.mrb[0].mxu0
  %v1253 = vadd.f32 0.0, %v1252
  %v1254 = vpop.f32.mrb[0].mxu0
  %1255 = vdwg.mxu0
  %v1257 = vsel %vm217, %v1248, 0
  %v1260 = vsel %vm217, %v1253, 0
  %1262 = vmatprep.subr.mxu0 0.0
  %1263 = vmatpush1.msra.mxu0 %v210
  %1264 = vmatprep.subr.mxu0 0.0
  %1265 = vmatpush1.msra.mxu0 0.0
  %1266 = vmatprep.subr.mxu0 0.0
  %1267 = vmatpush1.msra.mxu0 0.0
  %1268 = vmatprep.subr.mxu0 0.0
  %1269 = vmatpush1.msra.mxu0 0.0
  %1270 = vmatprep.subr.mxu0 0.0
  %1271 = vmatpush1.msra.mxu0 0.0
  %1272 = vmatprep.subr.mxu0 0.0
  %1273 = vmatpush1.msra.mxu0 0.0
  %1274 = vmatprep.subr.mxu0 0.0
  %1275 = vmatpush1.msra.mxu0 0.0
  %1276 = vmatprep.subr.mxu0 0.0
  %1277 = vmatpush1.msra.mxu0 0.0
  %1278 = vmatprep.subr.mxu0 0.0
  %1279 = vmatpush1.msra.mxu0 0.0
  %1280 = vmatprep.subr.mxu0 0.0
  %1281 = vmatpush1.msra.mxu0 0.0
  %1282 = vmatprep.subr.mxu0 0.0
  %1283 = vmatpush1.msra.mxu0 0.0
  %1284 = vmatprep.subr.mxu0 0.0
  %1285 = vmatpush1.msra.mxu0 0.0
  %1286 = vmatprep.subr.mxu0 0.0
  %1287 = vmatpush1.msra.mxu0 0.0
  %1288 = vmatprep.subr.mxu0 0.0
  %1289 = vmatpush1.msra.mxu0 0.0
  %1290 = vmatprep.subr.mxu0 0.0
  %1291 = vmatpush1.msra.mxu0 0.0
  %1292 = vmatprep.subr.mxu0 0.0
  %1293 = vmatpush1.msra.mxu0 0.0
  %1294 = vmatprep.subr.mxu0 0.0
  %1295 = vmatpush1.msra.mxu0 0.0
  %1296 = vmatprep.subr.mxu0 0.0
  %1297 = vmatpush1.msra.mxu0 0.0
  %1298 = vmatprep.subr.mxu0 0.0
  %1299 = vmatpush1.msra.mxu0 0.0
  %1300 = vmatprep.subr.mxu0 0.0
  %1301 = vmatpush1.msra.mxu0 0.0
  %1302 = vmatprep.subr.mxu0 0.0
  %1303 = vmatpush1.msra.mxu0 0.0
  %1304 = vmatprep.subr.mxu0 0.0
  %1305 = vmatpush1.msra.mxu0 0.0
  %1306 = vmatprep.subr.mxu0 0.0
  %1307 = vmatpush1.msra.mxu0 0.0
  %1308 = vmatprep.subr.mxu0 0.0
  %1309 = vmatpush1.msra.mxu0 0.0
  %1310 = vmatprep.subr.mxu0 0.0
  %1311 = vmatpush1.msra.mxu0 0.0
  %1312 = vmatprep.subr.mxu0 0.0
  %1313 = vmatpush1.msra.mxu0 0.0
  %1314 = vmatprep.subr.mxu0 0.0
  %1315 = vmatpush1.msra.mxu0 0.0
  %1316 = vmatprep.subr.mxu0 0.0
  %1317 = vmatpush1.msra.mxu0 0.0
  %1318 = vmatprep.subr.mxu0 0.0
  %1319 = vmatpush1.msra.mxu0 0.0
  %1320 = vmatprep.subr.mxu0 0.0
  %1321 = vmatpush1.msra.mxu0 0.0
  %1322 = vmatprep.subr.mxu0 0.0
  %1323 = vmatpush1.msra.mxu0 0.0
  %1324 = vmatprep.subr.mxu0 0.0
  %1325 = vmatpush1.msra.mxu0 0.0
  %1326 = vmatprep.mubr.f32.mxu0 0.0
  %1327 = vmatmul.mubr.f32.gmra.mrb[0].mxu0 %v1257
  %v1328 = vpop.f32.mrb[0].mxu0
  %v1329 = vadd.f32 0.0, %v1328
  %v1330 = vpop.f32.mrb[0].mxu0
  %1331 = vmatprep.mubr.f32.mxu0 0.0
  %1332 = vmatmul.mubr.f32.gmra.mrb[0].mxu0 %v1260
  %v1333 = vpop.f32.mrb[0].mxu0
  %v1334 = vadd.f32 0.0, %v1333
  %v1335 = vpop.f32.mrb[0].mxu0
  %1336 = vdwg.mxu0
  %v1337 = vadd.f32 %v1054, %v1329
  %v1338 = vadd.f32 %v1055, %v1334
  %v1339 = vld [vmem:[%s7] sm:$0x1]
  %v1341 = vlaneseq
  %v1342 = vshrl.u32 %v1341, 7
  %v1343 = vsub.s32 0, %v1342
  %v1344 = vrot.slane %v1339, %v1343
  %v1346 = vadd.f32 %v1337, %v1344
  %v1347 = vadd.f32 %v1338, %v1344
  %v1348 = vadd.f32 %v1346, %v111
  %v1349 = vadd.f32 %v1347, %v112
  %v1350 = vld [vmem:[%s8] sm:$0x1]
  %v1351 = vld [vmem:[%s9] sm:$0x1]
  %v1352 = vsel %vm69, %v1348, 0.0
  %1353 = vadd.xlane.f32.xlu0 %v1352
  %v1354 = vpop.xlane.xlu0 %1353
  %v1355 = vsel %vm69, %v1349, 0.0
  %1356 = vadd.xlane.f32.xlu0 %v1355
  %v1357 = vpop.xlane.xlu0 %1356
  %v1358 = vmul.f32 %v1354, %v76
  %v1359 = vmul.f32 %v1357, %v76
  %v1360 = vsub.f32 %v1348, %v1358
  %v1361 = vsub.f32 %v1349, %v1359
  %v1362 = vmul.f32 %v1360, %v1360
  %v1363 = vmul.f32 %v1361, %v1361
  %v1364 = vsel %vm69, %v1362, 0.0
  %1365 = vadd.xlane.f32.xlu0 %v1364
  %v1366 = vpop.xlane.xlu0 %1365
  %v1367 = vsel %vm69, %v1363, 0.0
  %1368 = vadd.xlane.f32.xlu0 %v1367
  %v1369 = vpop.xlane.xlu0 %1368
  %v1370 = vmul.f32 %v1366, %v76
  %v1371 = vmul.f32 %v1369, %v76
  %v1372 = vadd.f32 %v1370, 1e-12
  %v1373 = vadd.f32 %v1371, 1e-12
  %v1374 = vrsqrt.pop %v1372
  %v1375 = vrsqrt.pop %v1373
  %v1376 = vmul.f32 %v1360, %v1374
  %v1377 = vmul.f32 %v1361, %v1375
  %v1379 = vlaneseq
  %v1380 = vshrl.u32 %v1379, 7
  %v1381 = vsub.s32 0, %v1380
  %v1382 = vrot.slane %v1350, %v1381
  %v1384 = vmul.f32 %v1376, %v1382
  %v1385 = vmul.f32 %v1377, %v1382
  %v1387 = vlaneseq
  %v1388 = vshrl.u32 %v1387, 7
  %v1389 = vsub.s32 0, %v1388
  %v1390 = vrot.slane %v1351, %v1389
  %v1392 = vadd.f32 %v1384, %v1390
  %v1393 = vadd.f32 %v1385, %v1390
  %v1394 = vld [vmem:[%s10] sm:$0xff]
  %v1395 = vld [vmem:[%s10 + $0x8] sm:$0xff]
  %v1396 = vld [vmem:[%s10 + $0x10] sm:$0xff]
  %v1397 = vld [vmem:[%s10 + $0x18] sm:$0xff]
  %v1398 = vld [vmem:[%s11] sm:$0x1]
  %v1400 = vlaneseq
  %v1401 = vshrl.u32 %v1400, 7
  %v1402 = vsub.s32 0, %v1401
  %v1403 = vrot.slane %v1398, %v1402
  %v1406 = vsel %vm69, %v1392, 0
  %v1409 = vsel %vm69, %v1393, 0
  %1411 = vmatprep.subr.mxu0 0.0
  %1412 = vmatpush1.msra.mxu0 %v1394
  %1413 = vmatprep.subr.mxu0 0.0
  %1414 = vmatpush1.msra.mxu0 %v1395
  %1415 = vmatprep.subr.mxu0 0.0
  %1416 = vmatpush1.msra.mxu0 %v1396
  %1417 = vmatprep.subr.mxu0 0.0
  %1418 = vmatpush1.msra.mxu0 %v1397
  %1419 = vmatprep.subr.mxu0 0.0
  %1420 = vmatpush1.msra.mxu0 0.0
  %1421 = vmatprep.subr.mxu0 0.0
  %1422 = vmatpush1.msra.mxu0 0.0
  %1423 = vmatprep.subr.mxu0 0.0
  %1424 = vmatpush1.msra.mxu0 0.0
  %1425 = vmatprep.subr.mxu0 0.0
  %1426 = vmatpush1.msra.mxu0 0.0
  %1427 = vmatprep.subr.mxu0 0.0
  %1428 = vmatpush1.msra.mxu0 0.0
  %1429 = vmatprep.subr.mxu0 0.0
  %1430 = vmatpush1.msra.mxu0 0.0
  %1431 = vmatprep.subr.mxu0 0.0
  %1432 = vmatpush1.msra.mxu0 0.0
  %1433 = vmatprep.subr.mxu0 0.0
  %1434 = vmatpush1.msra.mxu0 0.0
  %1435 = vmatprep.subr.mxu0 0.0
  %1436 = vmatpush1.msra.mxu0 0.0
  %1437 = vmatprep.subr.mxu0 0.0
  %1438 = vmatpush1.msra.mxu0 0.0
  %1439 = vmatprep.subr.mxu0 0.0
  %1440 = vmatpush1.msra.mxu0 0.0
  %1441 = vmatprep.subr.mxu0 0.0
  %1442 = vmatpush1.msra.mxu0 0.0
  %1443 = vmatprep.subr.mxu0 0.0
  %1444 = vmatpush1.msra.mxu0 0.0
  %1445 = vmatprep.subr.mxu0 0.0
  %1446 = vmatpush1.msra.mxu0 0.0
  %1447 = vmatprep.subr.mxu0 0.0
  %1448 = vmatpush1.msra.mxu0 0.0
  %1449 = vmatprep.subr.mxu0 0.0
  %1450 = vmatpush1.msra.mxu0 0.0
  %1451 = vmatprep.subr.mxu0 0.0
  %1452 = vmatpush1.msra.mxu0 0.0
  %1453 = vmatprep.subr.mxu0 0.0
  %1454 = vmatpush1.msra.mxu0 0.0
  %1455 = vmatprep.subr.mxu0 0.0
  %1456 = vmatpush1.msra.mxu0 0.0
  %1457 = vmatprep.subr.mxu0 0.0
  %1458 = vmatpush1.msra.mxu0 0.0
  %1459 = vmatprep.subr.mxu0 0.0
  %1460 = vmatpush1.msra.mxu0 0.0
  %1461 = vmatprep.subr.mxu0 0.0
  %1462 = vmatpush1.msra.mxu0 0.0
  %1463 = vmatprep.subr.mxu0 0.0
  %1464 = vmatpush1.msra.mxu0 0.0
  %1465 = vmatprep.subr.mxu0 0.0
  %1466 = vmatpush1.msra.mxu0 0.0
  %1467 = vmatprep.subr.mxu0 0.0
  %1468 = vmatpush1.msra.mxu0 0.0
  %1469 = vmatprep.subr.mxu0 0.0
  %1470 = vmatpush1.msra.mxu0 0.0
  %1471 = vmatprep.subr.mxu0 0.0
  %1472 = vmatpush1.msra.mxu0 0.0
  %1473 = vmatprep.subr.mxu0 0.0
  %1474 = vmatpush1.msra.mxu0 0.0
  %1475 = vmatprep.mubr.f32.mxu0 0.0
  %1476 = vmatmul.mubr.f32.gmra.mrb[0].mxu0 %v1406
  %v1477 = vpop.f32.mrb[0].mxu0
  %v1478 = vadd.f32 %v1403, %v1477
  %v1479 = vpop.f32.mrb[0].mxu0
  %1480 = vmatprep.mubr.f32.mxu0 0.0
  %1481 = vmatmul.mubr.f32.gmra.mrb[0].mxu0 %v1409
  %v1482 = vpop.f32.mrb[0].mxu0
  %v1483 = vadd.f32 %v1403, %v1482
  %v1484 = vpop.f32.mrb[0].mxu0
  %1485 = vdwg.mxu0
  %v1486 = vmul.f32 %v1478, 0.5
  %v1487 = vmul.f32 %v1483, 0.5
  %v1488 = vmul.f32 %v1478, 0.044715
  %v1489 = vmul.f32 %v1483, 0.044715
  %v1490 = vmul.f32 %v1488, %v1478
  %v1491 = vmul.f32 %v1489, %v1483
  %v1492 = vmul.f32 %v1490, %v1478
  %v1493 = vmul.f32 %v1491, %v1483
  %v1494 = vadd.f32 %v1478, %v1492
  %v1495 = vadd.f32 %v1483, %v1493
  %v1496 = vmul.f32 %v1494, 0.7978846
  %v1497 = vmul.f32 %v1495, 0.7978846
  %v1498 = vtanh.pop %v1496
  %v1499 = vtanh.pop %v1497
  %v1500 = vadd.f32 %v1498, 1.0
  %v1501 = vadd.f32 %v1499, 1.0
  %v1502 = vmul.f32 %v1486, %v1500
  %v1503 = vmul.f32 %v1487, %v1501
  %v1504 = vld [vmem:[%s12] sm:$0xff]
  %v1505 = vld [vmem:[%s12 + $0x8] sm:$0xff]
  %v1506 = vld [vmem:[%s12 + $0x10] sm:$0xff]
  %v1507 = vld [vmem:[%s12 + $0x18] sm:$0xff]
  %v1508 = vld [vmem:[%s12 + $0x20] sm:$0xff]
  %v1509 = vld [vmem:[%s12 + $0x28] sm:$0xff]
  %v1510 = vld [vmem:[%s12 + $0x30] sm:$0xff]
  %v1511 = vld [vmem:[%s12 + $0x38] sm:$0xff]
  %v1512 = vld [vmem:[%s12 + $0x40] sm:$0xff]
  %v1513 = vld [vmem:[%s12 + $0x48] sm:$0xff]
  %v1514 = vld [vmem:[%s12 + $0x50] sm:$0xff]
  %v1515 = vld [vmem:[%s12 + $0x58] sm:$0xff]
  %v1516 = vld [vmem:[%s12 + $0x60] sm:$0xff]
  %v1517 = vld [vmem:[%s12 + $0x68] sm:$0xff]
  %v1518 = vld [vmem:[%s12 + $0x70] sm:$0xff]
  %v1519 = vld [vmem:[%s12 + $0x78] sm:$0xff]
  %v1520 = vld [vmem:[%s13] sm:$0x1]
  %v1522 = vlaneseq
  %v1523 = vshrl.u32 %v1522, 7
  %v1524 = vsub.s32 0, %v1523
  %v1525 = vrot.slane %v1520, %v1524
  %1527 = vmatprep.subr.mxu0 0.0
  %1528 = vmatpush1.msra.mxu0 %v1504
  %1529 = vmatprep.subr.mxu0 0.0
  %1530 = vmatpush1.msra.mxu0 %v1505
  %1531 = vmatprep.subr.mxu0 0.0
  %1532 = vmatpush1.msra.mxu0 %v1506
  %1533 = vmatprep.subr.mxu0 0.0
  %1534 = vmatpush1.msra.mxu0 %v1507
  %1535 = vmatprep.subr.mxu0 0.0
  %1536 = vmatpush1.msra.mxu0 %v1508
  %1537 = vmatprep.subr.mxu0 0.0
  %1538 = vmatpush1.msra.mxu0 %v1509
  %1539 = vmatprep.subr.mxu0 0.0
  %1540 = vmatpush1.msra.mxu0 %v1510
  %1541 = vmatprep.subr.mxu0 0.0
  %1542 = vmatpush1.msra.mxu0 %v1511
  %1543 = vmatprep.subr.mxu0 0.0
  %1544 = vmatpush1.msra.mxu0 %v1512
  %1545 = vmatprep.subr.mxu0 0.0
  %1546 = vmatpush1.msra.mxu0 %v1513
  %1547 = vmatprep.subr.mxu0 0.0
  %1548 = vmatpush1.msra.mxu0 %v1514
  %1549 = vmatprep.subr.mxu0 0.0
  %1550 = vmatpush1.msra.mxu0 %v1515
  %1551 = vmatprep.subr.mxu0 0.0
  %1552 = vmatpush1.msra.mxu0 %v1516
  %1553 = vmatprep.subr.mxu0 0.0
  %1554 = vmatpush1.msra.mxu0 %v1517
  %1555 = vmatprep.subr.mxu0 0.0
  %1556 = vmatpush1.msra.mxu0 %v1518
  %1557 = vmatprep.subr.mxu0 0.0
  %1558 = vmatpush1.msra.mxu0 %v1519
  %1559 = vmatprep.subr.mxu0 0.0
  %1560 = vmatpush1.msra.mxu0 0.0
  %1561 = vmatprep.subr.mxu0 0.0
  %1562 = vmatpush1.msra.mxu0 0.0
  %1563 = vmatprep.subr.mxu0 0.0
  %1564 = vmatpush1.msra.mxu0 0.0
  %1565 = vmatprep.subr.mxu0 0.0
  %1566 = vmatpush1.msra.mxu0 0.0
  %1567 = vmatprep.subr.mxu0 0.0
  %1568 = vmatpush1.msra.mxu0 0.0
  %1569 = vmatprep.subr.mxu0 0.0
  %1570 = vmatpush1.msra.mxu0 0.0
  %1571 = vmatprep.subr.mxu0 0.0
  %1572 = vmatpush1.msra.mxu0 0.0
  %1573 = vmatprep.subr.mxu0 0.0
  %1574 = vmatpush1.msra.mxu0 0.0
  %1575 = vmatprep.subr.mxu0 0.0
  %1576 = vmatpush1.msra.mxu0 0.0
  %1577 = vmatprep.subr.mxu0 0.0
  %1578 = vmatpush1.msra.mxu0 0.0
  %1579 = vmatprep.subr.mxu0 0.0
  %1580 = vmatpush1.msra.mxu0 0.0
  %1581 = vmatprep.subr.mxu0 0.0
  %1582 = vmatpush1.msra.mxu0 0.0
  %1583 = vmatprep.subr.mxu0 0.0
  %1584 = vmatpush1.msra.mxu0 0.0
  %1585 = vmatprep.subr.mxu0 0.0
  %1586 = vmatpush1.msra.mxu0 0.0
  %1587 = vmatprep.subr.mxu0 0.0
  %1588 = vmatpush1.msra.mxu0 0.0
  %1589 = vmatprep.subr.mxu0 0.0
  %1590 = vmatpush1.msra.mxu0 0.0
  %1591 = vmatprep.mubr.f32.mxu0 0.0
  %1592 = vmatmul.mubr.f32.gmra.mrb[0].mxu0 %v1502
  %v1593 = vpop.f32.mrb[0].mxu0
  %v1594 = vadd.f32 %v1525, %v1593
  %v1595 = vpop.f32.mrb[0].mxu0
  %1596 = vmatprep.mubr.f32.mxu0 0.0
  %1597 = vmatmul.mubr.f32.gmra.mrb[0].mxu0 %v1503
  %v1598 = vpop.f32.mrb[0].mxu0
  %v1599 = vadd.f32 %v1525, %v1598
  %v1600 = vpop.f32.mrb[0].mxu0
  %1601 = vdwg.mxu0
  %v1602 = vadd.f32 %v1594, %v1392
  %v1603 = vadd.f32 %v1599, %v1393
  %v1604 = vld [vmem:[%s14] sm:$0x1]
  %v1605 = vld [vmem:[%s15] sm:$0x1]
  %v1606 = vsel %vm69, %v1602, 0.0
  %1607 = vadd.xlane.f32.xlu0 %v1606
  %v1608 = vpop.xlane.xlu0 %1607
  %v1609 = vsel %vm69, %v1603, 0.0
  %1610 = vadd.xlane.f32.xlu0 %v1609
  %v1611 = vpop.xlane.xlu0 %1610
  %v1612 = vmul.f32 %v1608, %v76
  %v1613 = vmul.f32 %v1611, %v76
  %v1614 = vsub.f32 %v1602, %v1612
  %v1615 = vsub.f32 %v1603, %v1613
  %v1616 = vmul.f32 %v1614, %v1614
  %v1617 = vmul.f32 %v1615, %v1615
  %v1618 = vsel %vm69, %v1616, 0.0
  %1619 = vadd.xlane.f32.xlu0 %v1618
  %v1620 = vpop.xlane.xlu0 %1619
  %v1621 = vsel %vm69, %v1617, 0.0
  %1622 = vadd.xlane.f32.xlu0 %v1621
  %v1623 = vpop.xlane.xlu0 %1622
  %v1624 = vmul.f32 %v1620, %v76
  %v1625 = vmul.f32 %v1623, %v76
  %v1626 = vadd.f32 %v1624, 1e-12
  %v1627 = vadd.f32 %v1625, 1e-12
  %v1628 = vrsqrt.pop %v1626
  %v1629 = vrsqrt.pop %v1627
  %v1630 = vmul.f32 %v1614, %v1628
  %v1631 = vmul.f32 %v1615, %v1629
  %v1633 = vlaneseq
  %v1634 = vshrl.u32 %v1633, 7
  %v1635 = vsub.s32 0, %v1634
  %v1636 = vrot.slane %v1604, %v1635
  %v1638 = vmul.f32 %v1630, %v1636
  %v1639 = vmul.f32 %v1631, %v1636
  %v1641 = vlaneseq
  %v1642 = vshrl.u32 %v1641, 7
  %v1643 = vsub.s32 0, %v1642
  %v1644 = vrot.slane %v1605, %v1643
  %v1646 = vadd.f32 %v1638, %v1644
  %v1647 = vadd.f32 %v1639, %v1644
  %s1648 = scalar_lea.vmem %s4, 32
  %v1649 = vld [vmem:[%s1648] sm:$0xff]
  %v1650 = vld [vmem:[%s1648 + $0x8] sm:$0xff]
  %v1651 = vld [vmem:[%s1648 + $0x10] sm:$0xff]
  %v1652 = vld [vmem:[%s1648 + $0x18] sm:$0xff]
  %s1653 = scalar_lea.vmem %s5, 1
  %v1654 = vld [vmem:[%s1653] sm:$0x1]
  %v1656 = vlaneseq
  %v1657 = vshrl.u32 %v1656, 7
  %v1658 = vsub.s32 0, %v1657
  %v1659 = vrot.slane %v1654, %v1658
  %v1662 = vsel %vm69, %v1646, 0
  %v1665 = vsel %vm69, %v1647, 0
  %1667 = vmatprep.subr.mxu0 0.0
  %1668 = vmatpush1.msra.mxu0 %v1649
  %1669 = vmatprep.subr.mxu0 0.0
  %1670 = vmatpush1.msra.mxu0 %v1650
  %1671 = vmatprep.subr.mxu0 0.0
  %1672 = vmatpush1.msra.mxu0 %v1651
  %1673 = vmatprep.subr.mxu0 0.0
  %1674 = vmatpush1.msra.mxu0 %v1652
  %1675 = vmatprep.subr.mxu0 0.0
  %1676 = vmatpush1.msra.mxu0 0.0
  %1677 = vmatprep.subr.mxu0 0.0
  %1678 = vmatpush1.msra.mxu0 0.0
  %1679 = vmatprep.subr.mxu0 0.0
  %1680 = vmatpush1.msra.mxu0 0.0
  %1681 = vmatprep.subr.mxu0 0.0
  %1682 = vmatpush1.msra.mxu0 0.0
  %1683 = vmatprep.subr.mxu0 0.0
  %1684 = vmatpush1.msra.mxu0 0.0
  %1685 = vmatprep.subr.mxu0 0.0
  %1686 = vmatpush1.msra.mxu0 0.0
  %1687 = vmatprep.subr.mxu0 0.0
  %1688 = vmatpush1.msra.mxu0 0.0
  %1689 = vmatprep.subr.mxu0 0.0
  %1690 = vmatpush1.msra.mxu0 0.0
  %1691 = vmatprep.subr.mxu0 0.0
  %1692 = vmatpush1.msra.mxu0 0.0
  %1693 = vmatprep.subr.mxu0 0.0
  %1694 = vmatpush1.msra.mxu0 0.0
  %1695 = vmatprep.subr.mxu0 0.0
  %1696 = vmatpush1.msra.mxu0 0.0
  %1697 = vmatprep.subr.mxu0 0.0
  %1698 = vmatpush1.msra.mxu0 0.0
  %1699 = vmatprep.subr.mxu0 0.0
  %1700 = vmatpush1.msra.mxu0 0.0
  %1701 = vmatprep.subr.mxu0 0.0
  %1702 = vmatpush1.msra.mxu0 0.0
  %1703 = vmatprep.subr.mxu0 0.0
  %1704 = vmatpush1.msra.mxu0 0.0
  %1705 = vmatprep.subr.mxu0 0.0
  %1706 = vmatpush1.msra.mxu0 0.0
  %1707 = vmatprep.subr.mxu0 0.0
  %1708 = vmatpush1.msra.mxu0 0.0
  %1709 = vmatprep.subr.mxu0 0.0
  %1710 = vmatpush1.msra.mxu0 0.0
  %1711 = vmatprep.subr.mxu0 0.0
  %1712 = vmatpush1.msra.mxu0 0.0
  %1713 = vmatprep.subr.mxu0 0.0
  %1714 = vmatpush1.msra.mxu0 0.0
  %1715 = vmatprep.subr.mxu0 0.0
  %1716 = vmatpush1.msra.mxu0 0.0
  %1717 = vmatprep.subr.mxu0 0.0
  %1718 = vmatpush1.msra.mxu0 0.0
  %1719 = vmatprep.subr.mxu0 0.0
  %1720 = vmatpush1.msra.mxu0 0.0
  %1721 = vmatprep.subr.mxu0 0.0
  %1722 = vmatpush1.msra.mxu0 0.0
  %1723 = vmatprep.subr.mxu0 0.0
  %1724 = vmatpush1.msra.mxu0 0.0
  %1725 = vmatprep.subr.mxu0 0.0
  %1726 = vmatpush1.msra.mxu0 0.0
  %1727 = vmatprep.subr.mxu0 0.0
  %1728 = vmatpush1.msra.mxu0 0.0
  %1729 = vmatprep.subr.mxu0 0.0
  %1730 = vmatpush1.msra.mxu0 0.0
  %1731 = vmatprep.mubr.f32.mxu0 0.0
  %1732 = vmatmul.mubr.f32.gmra.mrb[0].mxu0 %v1662
  %v1733 = vpop.f32.mrb[0].mxu0
  %v1734 = vadd.f32 %v1659, %v1733
  %v1735 = vpop.f32.mrb[0].mxu0
  %1736 = vmatprep.mubr.f32.mxu0 0.0
  %1737 = vmatmul.mubr.f32.gmra.mrb[0].mxu0 %v1665
  %v1738 = vpop.f32.mrb[0].mxu0
  %v1739 = vadd.f32 %v1659, %v1738
  %v1740 = vpop.f32.mrb[0].mxu0
  %1741 = vdwg.mxu0
  %s1742 = scalar_lea.vmem %s6, 32
  %v1743 = vld [vmem:[%s1742] sm:$0xff]
  %v1744 = vld [vmem:[%s1742 + $0x8] sm:$0xff]
  %v1745 = vld [vmem:[%s1742 + $0x10] sm:$0xff]
  %v1746 = vld [vmem:[%s1742 + $0x18] sm:$0xff]
  %1749 = vrot.lane.b32.xlu0 %v1734, 96
  %v1750 = vpop.permute.xlu0 %1749
  %1751 = vrot.lane.b32.xlu0 %v1739, 96
  %v1752 = vpop.permute.xlu0 %1751
  %v1753 = vsel %vm217, %v1734, 0
  %v1755 = vsel %vm217, %v1739, 0
  %v1757 = vsel %vm217, %v1750, 0
  %v1759 = vsel %vm217, %v1752, 0
  %1761 = vmatprep.subr.mxu0 0.0
  %1762 = vmatpush1.xpose.msra.mxu0 %v1757
  %1763 = vmatprep.subr.mxu0 0.0
  %1764 = vmatpush1.xpose.msra.mxu0 %v1759
  %1765 = vmatprep.subr.mxu0 0.0
  %1766 = vmatpush1.xpose.msra.mxu0 0.0
  %1767 = vmatprep.subr.mxu0 0.0
  %1768 = vmatpush1.xpose.msra.mxu0 0.0
  %1769 = vmatprep.subr.mxu0 0.0
  %1770 = vmatpush1.xpose.msra.mxu0 0.0
  %1771 = vmatprep.subr.mxu0 0.0
  %1772 = vmatpush1.xpose.msra.mxu0 0.0
  %1773 = vmatprep.subr.mxu0 0.0
  %1774 = vmatpush1.xpose.msra.mxu0 0.0
  %1775 = vmatprep.subr.mxu0 0.0
  %1776 = vmatpush1.xpose.msra.mxu0 0.0
  %1777 = vmatprep.subr.mxu0 0.0
  %1778 = vmatpush1.xpose.msra.mxu0 0.0
  %1779 = vmatprep.subr.mxu0 0.0
  %1780 = vmatpush1.xpose.msra.mxu0 0.0
  %1781 = vmatprep.subr.mxu0 0.0
  %1782 = vmatpush1.xpose.msra.mxu0 0.0
  %1783 = vmatprep.subr.mxu0 0.0
  %1784 = vmatpush1.xpose.msra.mxu0 0.0
  %1785 = vmatprep.subr.mxu0 0.0
  %1786 = vmatpush1.xpose.msra.mxu0 0.0
  %1787 = vmatprep.subr.mxu0 0.0
  %1788 = vmatpush1.xpose.msra.mxu0 0.0
  %1789 = vmatprep.subr.mxu0 0.0
  %1790 = vmatpush1.xpose.msra.mxu0 0.0
  %1791 = vmatprep.subr.mxu0 0.0
  %1792 = vmatpush1.xpose.msra.mxu0 0.0
  %1793 = vmatprep.subr.mxu0 0.0
  %1794 = vmatpush1.xpose.msra.mxu0 0.0
  %1795 = vmatprep.subr.mxu0 0.0
  %1796 = vmatpush1.xpose.msra.mxu0 0.0
  %1797 = vmatprep.subr.mxu0 0.0
  %1798 = vmatpush1.xpose.msra.mxu0 0.0
  %1799 = vmatprep.subr.mxu0 0.0
  %1800 = vmatpush1.xpose.msra.mxu0 0.0
  %1801 = vmatprep.subr.mxu0 0.0
  %1802 = vmatpush1.xpose.msra.mxu0 0.0
  %1803 = vmatprep.subr.mxu0 0.0
  %1804 = vmatpush1.xpose.msra.mxu0 0.0
  %1805 = vmatprep.subr.mxu0 0.0
  %1806 = vmatpush1.xpose.msra.mxu0 0.0
  %1807 = vmatprep.subr.mxu0 0.0
  %1808 = vmatpush1.xpose.msra.mxu0 0.0
  %1809 = vmatprep.subr.mxu0 0.0
  %1810 = vmatpush1.xpose.msra.mxu0 0.0
  %1811 = vmatprep.subr.mxu0 0.0
  %1812 = vmatpush1.xpose.msra.mxu0 0.0
  %1813 = vmatprep.subr.mxu0 0.0
  %1814 = vmatpush1.xpose.msra.mxu0 0.0
  %1815 = vmatprep.subr.mxu0 0.0
  %1816 = vmatpush1.xpose.msra.mxu0 0.0
  %1817 = vmatprep.subr.mxu0 0.0
  %1818 = vmatpush1.xpose.msra.mxu0 0.0
  %1819 = vmatprep.subr.mxu0 0.0
  %1820 = vmatpush1.xpose.msra.mxu0 0.0
  %1821 = vmatprep.subr.mxu0 0.0
  %1822 = vmatpush1.xpose.msra.mxu0 0.0
  %1823 = vmatprep.subr.mxu0 0.0
  %1824 = vmatpush1.xpose.msra.mxu0 0.0
  %1825 = vmatprep.mubr.f32.mxu0 0.0
  %1826 = vmatmul.mubr.f32.gmra.mrb[0].mxu0 %v1753
  %v1827 = vpop.f32.mrb[0].mxu0
  %v1828 = vadd.f32 %v113, %v1827
  %v1829 = vpop.f32.mrb[0].mxu0
  %1830 = vmatprep.mubr.f32.mxu0 0.0
  %1831 = vmatmul.mubr.f32.gmra.mrb[0].mxu0 %v1755
  %v1832 = vpop.f32.mrb[0].mxu0
  %v1833 = vadd.f32 %v114, %v1832
  %v1834 = vpop.f32.mrb[0].mxu0
  %1835 = vdwg.mxu0
  %v1836 = vsel %vm301, %v1828, -inf
  %1837 = vmax.xlane.f32.xlu0 %v1836
  %v1838 = vpop.xlane.xlu0 %1837
  %v1839 = vsel %vm301, %v1833, -inf
  %1840 = vmax.xlane.f32.xlu0 %v1839
  %v1841 = vpop.xlane.xlu0 %1840
  %v1842 = vsub.f32 %v1828, %v1838
  %v1843 = vsub.f32 %v1833, %v1841
  %v1844 = vmul.f32 %v1842, 1.442695
  %v1845 = vpow.pop %v1844
  %v1846 = vmul.f32 %v1843, 1.442695
  %v1847 = vpow.pop %v1846
  %v1848 = vsel %vm301, %v1845, 0.0
  %1849 = vadd.xlane.f32.xlu0 %v1848
  %v1850 = vpop.xlane.xlu0 %1849
  %v1851 = vsel %vm301, %v1847, 0.0
  %1852 = vadd.xlane.f32.xlu0 %v1851
  %v1853 = vpop.xlane.xlu0 %1852
  %v1854 = vrcp.pop %v1850
  %v1855 = vrcp.pop %v1853
  %v1856 = vmul.f32 %v1845, %v1854
  %v1857 = vmul.f32 %v1847, %v1855
  %1858 = vrot.lane.b32.xlu0 %v1734, 64
  %v1859 = vpop.permute.xlu0 %1858
  %1860 = vrot.lane.b32.xlu0 %v1739, 64
  %v1861 = vpop.permute.xlu0 %1860
  %v1865 = vsel %vm301, %v1856, 0
  %v1868 = vsel %vm301, %v1857, 0
  %1870 = vmatprep.subr.mxu0 0.0
  %1871 = vmatpush1.msra.mxu0 %v1859
  %1872 = vmatprep.subr.mxu0 0.0
  %1873 = vmatpush1.msra.mxu0 %v1861
  %1874 = vmatprep.subr.mxu0 0.0
  %1875 = vmatpush1.msra.mxu0 0.0
  %1876 = vmatprep.subr.mxu0 0.0
  %1877 = vmatpush1.msra.mxu0 0.0
  %1878 = vmatprep.subr.mxu0 0.0
  %1879 = vmatpush1.msra.mxu0 0.0
  %1880 = vmatprep.subr.mxu0 0.0
  %1881 = vmatpush1.msra.mxu0 0.0
  %1882 = vmatprep.subr.mxu0 0.0
  %1883 = vmatpush1.msra.mxu0 0.0
  %1884 = vmatprep.subr.mxu0 0.0
  %1885 = vmatpush1.msra.mxu0 0.0
  %1886 = vmatprep.subr.mxu0 0.0
  %1887 = vmatpush1.msra.mxu0 0.0
  %1888 = vmatprep.subr.mxu0 0.0
  %1889 = vmatpush1.msra.mxu0 0.0
  %1890 = vmatprep.subr.mxu0 0.0
  %1891 = vmatpush1.msra.mxu0 0.0
  %1892 = vmatprep.subr.mxu0 0.0
  %1893 = vmatpush1.msra.mxu0 0.0
  %1894 = vmatprep.subr.mxu0 0.0
  %1895 = vmatpush1.msra.mxu0 0.0
  %1896 = vmatprep.subr.mxu0 0.0
  %1897 = vmatpush1.msra.mxu0 0.0
  %1898 = vmatprep.subr.mxu0 0.0
  %1899 = vmatpush1.msra.mxu0 0.0
  %1900 = vmatprep.subr.mxu0 0.0
  %1901 = vmatpush1.msra.mxu0 0.0
  %1902 = vmatprep.subr.mxu0 0.0
  %1903 = vmatpush1.msra.mxu0 0.0
  %1904 = vmatprep.subr.mxu0 0.0
  %1905 = vmatpush1.msra.mxu0 0.0
  %1906 = vmatprep.subr.mxu0 0.0
  %1907 = vmatpush1.msra.mxu0 0.0
  %1908 = vmatprep.subr.mxu0 0.0
  %1909 = vmatpush1.msra.mxu0 0.0
  %1910 = vmatprep.subr.mxu0 0.0
  %1911 = vmatpush1.msra.mxu0 0.0
  %1912 = vmatprep.subr.mxu0 0.0
  %1913 = vmatpush1.msra.mxu0 0.0
  %1914 = vmatprep.subr.mxu0 0.0
  %1915 = vmatpush1.msra.mxu0 0.0
  %1916 = vmatprep.subr.mxu0 0.0
  %1917 = vmatpush1.msra.mxu0 0.0
  %1918 = vmatprep.subr.mxu0 0.0
  %1919 = vmatpush1.msra.mxu0 0.0
  %1920 = vmatprep.subr.mxu0 0.0
  %1921 = vmatpush1.msra.mxu0 0.0
  %1922 = vmatprep.subr.mxu0 0.0
  %1923 = vmatpush1.msra.mxu0 0.0
  %1924 = vmatprep.subr.mxu0 0.0
  %1925 = vmatpush1.msra.mxu0 0.0
  %1926 = vmatprep.subr.mxu0 0.0
  %1927 = vmatpush1.msra.mxu0 0.0
  %1928 = vmatprep.subr.mxu0 0.0
  %1929 = vmatpush1.msra.mxu0 0.0
  %1930 = vmatprep.subr.mxu0 0.0
  %1931 = vmatpush1.msra.mxu0 0.0
  %1932 = vmatprep.subr.mxu0 0.0
  %1933 = vmatpush1.msra.mxu0 0.0
  %1934 = vmatprep.mubr.f32.mxu0 0.0
  %1935 = vmatmul.mubr.f32.gmra.mrb[0].mxu0 %v1865
  %v1936 = vpop.f32.mrb[0].mxu0
  %v1937 = vadd.f32 0.0, %v1936
  %v1938 = vpop.f32.mrb[0].mxu0
  %1939 = vmatprep.mubr.f32.mxu0 0.0
  %1940 = vmatmul.mubr.f32.gmra.mrb[0].mxu0 %v1868
  %v1941 = vpop.f32.mrb[0].mxu0
  %v1942 = vadd.f32 0.0, %v1941
  %v1943 = vpop.f32.mrb[0].mxu0
  %1944 = vdwg.mxu0
  %1945 = vrot.lane.b32.xlu0 %v1734, 120
  %v1946 = vpop.permute.xlu0 %1945
  %1947 = vrot.lane.b32.xlu0 %v1739, 120
  %v1948 = vpop.permute.xlu0 %1947
  %1949 = vrot.lane.b32.xlu0 %v1734, 88
  %v1950 = vpop.permute.xlu0 %1949
  %1951 = vrot.lane.b32.xlu0 %v1739, 88
  %v1952 = vpop.permute.xlu0 %1951
  %v1953 = vsel %vm217, %v1946, 0
  %v1955 = vsel %vm217, %v1948, 0
  %v1957 = vsel %vm217, %v1950, 0
  %v1959 = vsel %vm217, %v1952, 0
  %1961 = vmatprep.subr.mxu0 0.0
  %1962 = vmatpush1.xpose.msra.mxu0 %v1957
  %1963 = vmatprep.subr.mxu0 0.0
  %1964 = vmatpush1.xpose.msra.mxu0 %v1959
  %1965 = vmatprep.subr.mxu0 0.0
  %1966 = vmatpush1.xpose.msra.mxu0 0.0
  %1967 = vmatprep.subr.mxu0 0.0
  %1968 = vmatpush1.xpose.msra.mxu0 0.0
  %1969 = vmatprep.subr.mxu0 0.0
  %1970 = vmatpush1.xpose.msra.mxu0 0.0
  %1971 = vmatprep.subr.mxu0 0.0
  %1972 = vmatpush1.xpose.msra.mxu0 0.0
  %1973 = vmatprep.subr.mxu0 0.0
  %1974 = vmatpush1.xpose.msra.mxu0 0.0
  %1975 = vmatprep.subr.mxu0 0.0
  %1976 = vmatpush1.xpose.msra.mxu0 0.0
  %1977 = vmatprep.subr.mxu0 0.0
  %1978 = vmatpush1.xpose.msra.mxu0 0.0
  %1979 = vmatprep.subr.mxu0 0.0
  %1980 = vmatpush1.xpose.msra.mxu0 0.0
  %1981 = vmatprep.subr.mxu0 0.0
  %1982 = vmatpush1.xpose.msra.mxu0 0.0
  %1983 = vmatprep.subr.mxu0 0.0
  %1984 = vmatpush1.xpose.msra.mxu0 0.0
  %1985 = vmatprep.subr.mxu0 0.0
  %1986 = vmatpush1.xpose.msra.mxu0 0.0
  %1987 = vmatprep.subr.mxu0 0.0
  %1988 = vmatpush1.xpose.msra.mxu0 0.0
  %1989 = vmatprep.subr.mxu0 0.0
  %1990 = vmatpush1.xpose.msra.mxu0 0.0
  %1991 = vmatprep.subr.mxu0 0.0
  %1992 = vmatpush1.xpose.msra.mxu0 0.0
  %1993 = vmatprep.subr.mxu0 0.0
  %1994 = vmatpush1.xpose.msra.mxu0 0.0
  %1995 = vmatprep.subr.mxu0 0.0
  %1996 = vmatpush1.xpose.msra.mxu0 0.0
  %1997 = vmatprep.subr.mxu0 0.0
  %1998 = vmatpush1.xpose.msra.mxu0 0.0
  %1999 = vmatprep.subr.mxu0 0.0
  %2000 = vmatpush1.xpose.msra.mxu0 0.0
  %2001 = vmatprep.subr.mxu0 0.0
  %2002 = vmatpush1.xpose.msra.mxu0 0.0
  %2003 = vmatprep.subr.mxu0 0.0
  %2004 = vmatpush1.xpose.msra.mxu0 0.0
  %2005 = vmatprep.subr.mxu0 0.0
  %2006 = vmatpush1.xpose.msra.mxu0 0.0
  %2007 = vmatprep.subr.mxu0 0.0
  %2008 = vmatpush1.xpose.msra.mxu0 0.0
  %2009 = vmatprep.subr.mxu0 0.0
  %2010 = vmatpush1.xpose.msra.mxu0 0.0
  %2011 = vmatprep.subr.mxu0 0.0
  %2012 = vmatpush1.xpose.msra.mxu0 0.0
  %2013 = vmatprep.subr.mxu0 0.0
  %2014 = vmatpush1.xpose.msra.mxu0 0.0
  %2015 = vmatprep.subr.mxu0 0.0
  %2016 = vmatpush1.xpose.msra.mxu0 0.0
  %2017 = vmatprep.subr.mxu0 0.0
  %2018 = vmatpush1.xpose.msra.mxu0 0.0
  %2019 = vmatprep.subr.mxu0 0.0
  %2020 = vmatpush1.xpose.msra.mxu0 0.0
  %2021 = vmatprep.subr.mxu0 0.0
  %2022 = vmatpush1.xpose.msra.mxu0 0.0
  %2023 = vmatprep.subr.mxu0 0.0
  %2024 = vmatpush1.xpose.msra.mxu0 0.0
  %2025 = vmatprep.mubr.f32.mxu0 0.0
  %2026 = vmatmul.mubr.f32.gmra.mrb[0].mxu0 %v1953
  %v2027 = vpop.f32.mrb[0].mxu0
  %v2028 = vadd.f32 %v113, %v2027
  %v2029 = vpop.f32.mrb[0].mxu0
  %2030 = vmatprep.mubr.f32.mxu0 0.0
  %2031 = vmatmul.mubr.f32.gmra.mrb[0].mxu0 %v1955
  %v2032 = vpop.f32.mrb[0].mxu0
  %v2033 = vadd.f32 %v114, %v2032
  %v2034 = vpop.f32.mrb[0].mxu0
  %2035 = vdwg.mxu0
  %v2036 = vsel %vm301, %v2028, -inf
  %2037 = vmax.xlane.f32.xlu0 %v2036
  %v2038 = vpop.xlane.xlu0 %2037
  %v2039 = vsel %vm301, %v2033, -inf
  %2040 = vmax.xlane.f32.xlu0 %v2039
  %v2041 = vpop.xlane.xlu0 %2040
  %v2042 = vsub.f32 %v2028, %v2038
  %v2043 = vsub.f32 %v2033, %v2041
  %v2044 = vmul.f32 %v2042, 1.442695
  %v2045 = vpow.pop %v2044
  %v2046 = vmul.f32 %v2043, 1.442695
  %v2047 = vpow.pop %v2046
  %v2048 = vsel %vm301, %v2045, 0.0
  %2049 = vadd.xlane.f32.xlu0 %v2048
  %v2050 = vpop.xlane.xlu0 %2049
  %v2051 = vsel %vm301, %v2047, 0.0
  %2052 = vadd.xlane.f32.xlu0 %v2051
  %v2053 = vpop.xlane.xlu0 %2052
  %v2054 = vrcp.pop %v2050
  %v2055 = vrcp.pop %v2053
  %v2056 = vmul.f32 %v2045, %v2054
  %v2057 = vmul.f32 %v2047, %v2055
  %2058 = vrot.lane.b32.xlu0 %v1734, 56
  %v2059 = vpop.permute.xlu0 %2058
  %2060 = vrot.lane.b32.xlu0 %v1739, 56
  %v2061 = vpop.permute.xlu0 %2060
  %v2065 = vsel %vm301, %v2056, 0
  %v2068 = vsel %vm301, %v2057, 0
  %2070 = vmatprep.subr.mxu0 0.0
  %2071 = vmatpush1.msra.mxu0 %v2059
  %2072 = vmatprep.subr.mxu0 0.0
  %2073 = vmatpush1.msra.mxu0 %v2061
  %2074 = vmatprep.subr.mxu0 0.0
  %2075 = vmatpush1.msra.mxu0 0.0
  %2076 = vmatprep.subr.mxu0 0.0
  %2077 = vmatpush1.msra.mxu0 0.0
  %2078 = vmatprep.subr.mxu0 0.0
  %2079 = vmatpush1.msra.mxu0 0.0
  %2080 = vmatprep.subr.mxu0 0.0
  %2081 = vmatpush1.msra.mxu0 0.0
  %2082 = vmatprep.subr.mxu0 0.0
  %2083 = vmatpush1.msra.mxu0 0.0
  %2084 = vmatprep.subr.mxu0 0.0
  %2085 = vmatpush1.msra.mxu0 0.0
  %2086 = vmatprep.subr.mxu0 0.0
  %2087 = vmatpush1.msra.mxu0 0.0
  %2088 = vmatprep.subr.mxu0 0.0
  %2089 = vmatpush1.msra.mxu0 0.0
  %2090 = vmatprep.subr.mxu0 0.0
  %2091 = vmatpush1.msra.mxu0 0.0
  %2092 = vmatprep.subr.mxu0 0.0
  %2093 = vmatpush1.msra.mxu0 0.0
  %2094 = vmatprep.subr.mxu0 0.0
  %2095 = vmatpush1.msra.mxu0 0.0
  %2096 = vmatprep.subr.mxu0 0.0
  %2097 = vmatpush1.msra.mxu0 0.0
  %2098 = vmatprep.subr.mxu0 0.0
  %2099 = vmatpush1.msra.mxu0 0.0
  %2100 = vmatprep.subr.mxu0 0.0
  %2101 = vmatpush1.msra.mxu0 0.0
  %2102 = vmatprep.subr.mxu0 0.0
  %2103 = vmatpush1.msra.mxu0 0.0
  %2104 = vmatprep.subr.mxu0 0.0
  %2105 = vmatpush1.msra.mxu0 0.0
  %2106 = vmatprep.subr.mxu0 0.0
  %2107 = vmatpush1.msra.mxu0 0.0
  %2108 = vmatprep.subr.mxu0 0.0
  %2109 = vmatpush1.msra.mxu0 0.0
  %2110 = vmatprep.subr.mxu0 0.0
  %2111 = vmatpush1.msra.mxu0 0.0
  %2112 = vmatprep.subr.mxu0 0.0
  %2113 = vmatpush1.msra.mxu0 0.0
  %2114 = vmatprep.subr.mxu0 0.0
  %2115 = vmatpush1.msra.mxu0 0.0
  %2116 = vmatprep.subr.mxu0 0.0
  %2117 = vmatpush1.msra.mxu0 0.0
  %2118 = vmatprep.subr.mxu0 0.0
  %2119 = vmatpush1.msra.mxu0 0.0
  %2120 = vmatprep.subr.mxu0 0.0
  %2121 = vmatpush1.msra.mxu0 0.0
  %2122 = vmatprep.subr.mxu0 0.0
  %2123 = vmatpush1.msra.mxu0 0.0
  %2124 = vmatprep.subr.mxu0 0.0
  %2125 = vmatpush1.msra.mxu0 0.0
  %2126 = vmatprep.subr.mxu0 0.0
  %2127 = vmatpush1.msra.mxu0 0.0
  %2128 = vmatprep.subr.mxu0 0.0
  %2129 = vmatpush1.msra.mxu0 0.0
  %2130 = vmatprep.subr.mxu0 0.0
  %2131 = vmatpush1.msra.mxu0 0.0
  %2132 = vmatprep.subr.mxu0 0.0
  %2133 = vmatpush1.msra.mxu0 0.0
  %2134 = vmatprep.mubr.f32.mxu0 0.0
  %2135 = vmatmul.mubr.f32.gmra.mrb[0].mxu0 %v2065
  %v2136 = vpop.f32.mrb[0].mxu0
  %v2137 = vadd.f32 0.0, %v2136
  %v2138 = vpop.f32.mrb[0].mxu0
  %2139 = vmatprep.mubr.f32.mxu0 0.0
  %2140 = vmatmul.mubr.f32.gmra.mrb[0].mxu0 %v2068
  %v2141 = vpop.f32.mrb[0].mxu0
  %v2142 = vadd.f32 0.0, %v2141
  %v2143 = vpop.f32.mrb[0].mxu0
  %2144 = vdwg.mxu0
  %v2146 = vsel %vm217, %v2137, 0
  %v2149 = vsel %vm217, %v2142, 0
  %2151 = vmatprep.subr.mxu0 0.0
  %2152 = vmatpush1.msra.mxu0 %v1744
  %2153 = vmatprep.subr.mxu0 0.0
  %2154 = vmatpush1.msra.mxu0 0.0
  %2155 = vmatprep.subr.mxu0 0.0
  %2156 = vmatpush1.msra.mxu0 0.0
  %2157 = vmatprep.subr.mxu0 0.0
  %2158 = vmatpush1.msra.mxu0 0.0
  %2159 = vmatprep.subr.mxu0 0.0
  %2160 = vmatpush1.msra.mxu0 0.0
  %2161 = vmatprep.subr.mxu0 0.0
  %2162 = vmatpush1.msra.mxu0 0.0
  %2163 = vmatprep.subr.mxu0 0.0
  %2164 = vmatpush1.msra.mxu0 0.0
  %2165 = vmatprep.subr.mxu0 0.0
  %2166 = vmatpush1.msra.mxu0 0.0
  %2167 = vmatprep.subr.mxu0 0.0
  %2168 = vmatpush1.msra.mxu0 0.0
  %2169 = vmatprep.subr.mxu0 0.0
  %2170 = vmatpush1.msra.mxu0 0.0
  %2171 = vmatprep.subr.mxu0 0.0
  %2172 = vmatpush1.msra.mxu0 0.0
  %2173 = vmatprep.subr.mxu0 0.0
  %2174 = vmatpush1.msra.mxu0 0.0
  %2175 = vmatprep.subr.mxu0 0.0
  %2176 = vmatpush1.msra.mxu0 0.0
  %2177 = vmatprep.subr.mxu0 0.0
  %2178 = vmatpush1.msra.mxu0 0.0
  %2179 = vmatprep.subr.mxu0 0.0
  %2180 = vmatpush1.msra.mxu0 0.0
  %2181 = vmatprep.subr.mxu0 0.0
  %2182 = vmatpush1.msra.mxu0 0.0
  %2183 = vmatprep.subr.mxu0 0.0
  %2184 = vmatpush1.msra.mxu0 0.0
  %2185 = vmatprep.subr.mxu0 0.0
  %2186 = vmatpush1.msra.mxu0 0.0
  %2187 = vmatprep.subr.mxu0 0.0
  %2188 = vmatpush1.msra.mxu0 0.0
  %2189 = vmatprep.subr.mxu0 0.0
  %2190 = vmatpush1.msra.mxu0 0.0
  %2191 = vmatprep.subr.mxu0 0.0
  %2192 = vmatpush1.msra.mxu0 0.0
  %2193 = vmatprep.subr.mxu0 0.0
  %2194 = vmatpush1.msra.mxu0 0.0
  %2195 = vmatprep.subr.mxu0 0.0
  %2196 = vmatpush1.msra.mxu0 0.0
  %2197 = vmatprep.subr.mxu0 0.0
  %2198 = vmatpush1.msra.mxu0 0.0
  %2199 = vmatprep.subr.mxu0 0.0
  %2200 = vmatpush1.msra.mxu0 0.0
  %2201 = vmatprep.subr.mxu0 0.0
  %2202 = vmatpush1.msra.mxu0 0.0
  %2203 = vmatprep.subr.mxu0 0.0
  %2204 = vmatpush1.msra.mxu0 0.0
  %2205 = vmatprep.subr.mxu0 0.0
  %2206 = vmatpush1.msra.mxu0 0.0
  %2207 = vmatprep.subr.mxu0 0.0
  %2208 = vmatpush1.msra.mxu0 0.0
  %2209 = vmatprep.subr.mxu0 0.0
  %2210 = vmatpush1.msra.mxu0 0.0
  %2211 = vmatprep.subr.mxu0 0.0
  %2212 = vmatpush1.msra.mxu0 0.0
  %2213 = vmatprep.subr.mxu0 0.0
  %2214 = vmatpush1.msra.mxu0 0.0
  %2215 = vmatprep.mubr.f32.mxu0 0.0
  %2216 = vmatmul.mubr.f32.gmra.mrb[0].mxu0 %v2146
  %v2217 = vpop.f32.mrb[0].mxu0
  %v2218 = vadd.f32 0.0, %v2217
  %v2219 = vpop.f32.mrb[0].mxu0
  %2220 = vmatprep.mubr.f32.mxu0 0.0
  %2221 = vmatmul.mubr.f32.gmra.mrb[0].mxu0 %v2149
  %v2222 = vpop.f32.mrb[0].mxu0
  %v2223 = vadd.f32 0.0, %v2222
  %v2224 = vpop.f32.mrb[0].mxu0
  %2225 = vdwg.mxu0
  %v2227 = vsel %vm217, %v1937, 0
  %v2230 = vsel %vm217, %v1942, 0
  %2232 = vmatprep.subr.mxu0 0.0
  %2233 = vmatpush1.msra.mxu0 %v1743
  %2234 = vmatprep.subr.mxu0 0.0
  %2235 = vmatpush1.msra.mxu0 0.0
  %2236 = vmatprep.subr.mxu0 0.0
  %2237 = vmatpush1.msra.mxu0 0.0
  %2238 = vmatprep.subr.mxu0 0.0
  %2239 = vmatpush1.msra.mxu0 0.0
  %2240 = vmatprep.subr.mxu0 0.0
  %2241 = vmatpush1.msra.mxu0 0.0
  %2242 = vmatprep.subr.mxu0 0.0
  %2243 = vmatpush1.msra.mxu0 0.0
  %2244 = vmatprep.subr.mxu0 0.0
  %2245 = vmatpush1.msra.mxu0 0.0
  %2246 = vmatprep.subr.mxu0 0.0
  %2247 = vmatpush1.msra.mxu0 0.0
  %2248 = vmatprep.subr.mxu0 0.0
  %2249 = vmatpush1.msra.mxu0 0.0
  %2250 = vmatprep.subr.mxu0 0.0
  %2251 = vmatpush1.msra.mxu0 0.0
  %2252 = vmatprep.subr.mxu0 0.0
  %2253 = vmatpush1.msra.mxu0 0.0
  %2254 = vmatprep.subr.mxu0 0.0
  %2255 = vmatpush1.msra.mxu0 0.0
  %2256 = vmatprep.subr.mxu0 0.0
  %2257 = vmatpush1.msra.mxu0 0.0
  %2258 = vmatprep.subr.mxu0 0.0
  %2259 = vmatpush1.msra.mxu0 0.0
  %2260 = vmatprep.subr.mxu0 0.0
  %2261 = vmatpush1.msra.mxu0 0.0
  %2262 = vmatprep.subr.mxu0 0.0
  %2263 = vmatpush1.msra.mxu0 0.0
  %2264 = vmatprep.subr.mxu0 0.0
  %2265 = vmatpush1.msra.mxu0 0.0
  %2266 = vmatprep.subr.mxu0 0.0
  %2267 = vmatpush1.msra.mxu0 0.0
  %2268 = vmatprep.subr.mxu0 0.0
  %2269 = vmatpush1.msra.mxu0 0.0
  %2270 = vmatprep.subr.mxu0 0.0
  %2271 = vmatpush1.msra.mxu0 0.0
  %2272 = vmatprep.subr.mxu0 0.0
  %2273 = vmatpush1.msra.mxu0 0.0
  %2274 = vmatprep.subr.mxu0 0.0
  %2275 = vmatpush1.msra.mxu0 0.0
  %2276 = vmatprep.subr.mxu0 0.0
  %2277 = vmatpush1.msra.mxu0 0.0
  %2278 = vmatprep.subr.mxu0 0.0
  %2279 = vmatpush1.msra.mxu0 0.0
  %2280 = vmatprep.subr.mxu0 0.0
  %2281 = vmatpush1.msra.mxu0 0.0
  %2282 = vmatprep.subr.mxu0 0.0
  %2283 = vmatpush1.msra.mxu0 0.0
  %2284 = vmatprep.subr.mxu0 0.0
  %2285 = vmatpush1.msra.mxu0 0.0
  %2286 = vmatprep.subr.mxu0 0.0
  %2287 = vmatpush1.msra.mxu0 0.0
  %2288 = vmatprep.subr.mxu0 0.0
  %2289 = vmatpush1.msra.mxu0 0.0
  %2290 = vmatprep.subr.mxu0 0.0
  %2291 = vmatpush1.msra.mxu0 0.0
  %2292 = vmatprep.subr.mxu0 0.0
  %2293 = vmatpush1.msra.mxu0 0.0
  %2294 = vmatprep.subr.mxu0 0.0
  %2295 = vmatpush1.msra.mxu0 0.0
  %2296 = vmatprep.mubr.f32.mxu0 0.0
  %2297 = vmatmul.mubr.f32.gmra.mrb[0].mxu0 %v2227
  %v2298 = vpop.f32.mrb[0].mxu0
  %v2299 = vadd.f32 %v2218, %v2298
  %v2300 = vpop.f32.mrb[0].mxu0
  %2301 = vmatprep.mubr.f32.mxu0 0.0
  %2302 = vmatmul.mubr.f32.gmra.mrb[0].mxu0 %v2230
  %v2303 = vpop.f32.mrb[0].mxu0
  %v2304 = vadd.f32 %v2223, %v2303
  %v2305 = vpop.f32.mrb[0].mxu0
  %2306 = vdwg.mxu0
  %2307 = vrot.lane.b32.xlu0 %v1734, 112
  %v2308 = vpop.permute.xlu0 %2307
  %2309 = vrot.lane.b32.xlu0 %v1739, 112
  %v2310 = vpop.permute.xlu0 %2309
  %2311 = vrot.lane.b32.xlu0 %v1734, 80
  %v2312 = vpop.permute.xlu0 %2311
  %2313 = vrot.lane.b32.xlu0 %v1739, 80
  %v2314 = vpop.permute.xlu0 %2313
  %v2315 = vsel %vm217, %v2308, 0
  %v2317 = vsel %vm217, %v2310, 0
  %v2319 = vsel %vm217, %v2312, 0
  %v2321 = vsel %vm217, %v2314, 0
  %2323 = vmatprep.subr.mxu0 0.0
  %2324 = vmatpush1.xpose.msra.mxu0 %v2319
  %2325 = vmatprep.subr.mxu0 0.0
  %2326 = vmatpush1.xpose.msra.mxu0 %v2321
  %2327 = vmatprep.subr.mxu0 0.0
  %2328 = vmatpush1.xpose.msra.mxu0 0.0
  %2329 = vmatprep.subr.mxu0 0.0
  %2330 = vmatpush1.xpose.msra.mxu0 0.0
  %2331 = vmatprep.subr.mxu0 0.0
  %2332 = vmatpush1.xpose.msra.mxu0 0.0
  %2333 = vmatprep.subr.mxu0 0.0
  %2334 = vmatpush1.xpose.msra.mxu0 0.0
  %2335 = vmatprep.subr.mxu0 0.0
  %2336 = vmatpush1.xpose.msra.mxu0 0.0
  %2337 = vmatprep.subr.mxu0 0.0
  %2338 = vmatpush1.xpose.msra.mxu0 0.0
  %2339 = vmatprep.subr.mxu0 0.0
  %2340 = vmatpush1.xpose.msra.mxu0 0.0
  %2341 = vmatprep.subr.mxu0 0.0
  %2342 = vmatpush1.xpose.msra.mxu0 0.0
  %2343 = vmatprep.subr.mxu0 0.0
  %2344 = vmatpush1.xpose.msra.mxu0 0.0
  %2345 = vmatprep.subr.mxu0 0.0
  %2346 = vmatpush1.xpose.msra.mxu0 0.0
  %2347 = vmatprep.subr.mxu0 0.0
  %2348 = vmatpush1.xpose.msra.mxu0 0.0
  %2349 = vmatprep.subr.mxu0 0.0
  %2350 = vmatpush1.xpose.msra.mxu0 0.0
  %2351 = vmatprep.subr.mxu0 0.0
  %2352 = vmatpush1.xpose.msra.mxu0 0.0
  %2353 = vmatprep.subr.mxu0 0.0
  %2354 = vmatpush1.xpose.msra.mxu0 0.0
  %2355 = vmatprep.subr.mxu0 0.0
  %2356 = vmatpush1.xpose.msra.mxu0 0.0
  %2357 = vmatprep.subr.mxu0 0.0
  %2358 = vmatpush1.xpose.msra.mxu0 0.0
  %2359 = vmatprep.subr.mxu0 0.0
  %2360 = vmatpush1.xpose.msra.mxu0 0.0
  %2361 = vmatprep.subr.mxu0 0.0
  %2362 = vmatpush1.xpose.msra.mxu0 0.0
  %2363 = vmatprep.subr.mxu0 0.0
  %2364 = vmatpush1.xpose.msra.mxu0 0.0
  %2365 = vmatprep.subr.mxu0 0.0
  %2366 = vmatpush1.xpose.msra.mxu0 0.0
  %2367 = vmatprep.subr.mxu0 0.0
  %2368 = vmatpush1.xpose.msra.mxu0 0.0
  %2369 = vmatprep.subr.mxu0 0.0
  %2370 = vmatpush1.xpose.msra.mxu0 0.0
  %2371 = vmatprep.subr.mxu0 0.0
  %2372 = vmatpush1.xpose.msra.mxu0 0.0
  %2373 = vmatprep.subr.mxu0 0.0
  %2374 = vmatpush1.xpose.msra.mxu0 0.0
  %2375 = vmatprep.subr.mxu0 0.0
  %2376 = vmatpush1.xpose.msra.mxu0 0.0
  %2377 = vmatprep.subr.mxu0 0.0
  %2378 = vmatpush1.xpose.msra.mxu0 0.0
  %2379 = vmatprep.subr.mxu0 0.0
  %2380 = vmatpush1.xpose.msra.mxu0 0.0
  %2381 = vmatprep.subr.mxu0 0.0
  %2382 = vmatpush1.xpose.msra.mxu0 0.0
  %2383 = vmatprep.subr.mxu0 0.0
  %2384 = vmatpush1.xpose.msra.mxu0 0.0
  %2385 = vmatprep.subr.mxu0 0.0
  %2386 = vmatpush1.xpose.msra.mxu0 0.0
  %2387 = vmatprep.mubr.f32.mxu0 0.0
  %2388 = vmatmul.mubr.f32.gmra.mrb[0].mxu0 %v2315
  %v2389 = vpop.f32.mrb[0].mxu0
  %v2390 = vadd.f32 %v113, %v2389
  %v2391 = vpop.f32.mrb[0].mxu0
  %2392 = vmatprep.mubr.f32.mxu0 0.0
  %2393 = vmatmul.mubr.f32.gmra.mrb[0].mxu0 %v2317
  %v2394 = vpop.f32.mrb[0].mxu0
  %v2395 = vadd.f32 %v114, %v2394
  %v2396 = vpop.f32.mrb[0].mxu0
  %2397 = vdwg.mxu0
  %v2398 = vsel %vm301, %v2390, -inf
  %2399 = vmax.xlane.f32.xlu0 %v2398
  %v2400 = vpop.xlane.xlu0 %2399
  %v2401 = vsel %vm301, %v2395, -inf
  %2402 = vmax.xlane.f32.xlu0 %v2401
  %v2403 = vpop.xlane.xlu0 %2402
  %v2404 = vsub.f32 %v2390, %v2400
  %v2405 = vsub.f32 %v2395, %v2403
  %v2406 = vmul.f32 %v2404, 1.442695
  %v2407 = vpow.pop %v2406
  %v2408 = vmul.f32 %v2405, 1.442695
  %v2409 = vpow.pop %v2408
  %v2410 = vsel %vm301, %v2407, 0.0
  %2411 = vadd.xlane.f32.xlu0 %v2410
  %v2412 = vpop.xlane.xlu0 %2411
  %v2413 = vsel %vm301, %v2409, 0.0
  %2414 = vadd.xlane.f32.xlu0 %v2413
  %v2415 = vpop.xlane.xlu0 %2414
  %v2416 = vrcp.pop %v2412
  %v2417 = vrcp.pop %v2415
  %v2418 = vmul.f32 %v2407, %v2416
  %v2419 = vmul.f32 %v2409, %v2417
  %2420 = vrot.lane.b32.xlu0 %v1734, 48
  %v2421 = vpop.permute.xlu0 %2420
  %2422 = vrot.lane.b32.xlu0 %v1739, 48
  %v2423 = vpop.permute.xlu0 %2422
  %v2427 = vsel %vm301, %v2418, 0
  %v2430 = vsel %vm301, %v2419, 0
  %2432 = vmatprep.subr.mxu0 0.0
  %2433 = vmatpush1.msra.mxu0 %v2421
  %2434 = vmatprep.subr.mxu0 0.0
  %2435 = vmatpush1.msra.mxu0 %v2423
  %2436 = vmatprep.subr.mxu0 0.0
  %2437 = vmatpush1.msra.mxu0 0.0
  %2438 = vmatprep.subr.mxu0 0.0
  %2439 = vmatpush1.msra.mxu0 0.0
  %2440 = vmatprep.subr.mxu0 0.0
  %2441 = vmatpush1.msra.mxu0 0.0
  %2442 = vmatprep.subr.mxu0 0.0
  %2443 = vmatpush1.msra.mxu0 0.0
  %2444 = vmatprep.subr.mxu0 0.0
  %2445 = vmatpush1.msra.mxu0 0.0
  %2446 = vmatprep.subr.mxu0 0.0
  %2447 = vmatpush1.msra.mxu0 0.0
  %2448 = vmatprep.subr.mxu0 0.0
  %2449 = vmatpush1.msra.mxu0 0.0
  %2450 = vmatprep.subr.mxu0 0.0
  %2451 = vmatpush1.msra.mxu0 0.0
  %2452 = vmatprep.subr.mxu0 0.0
  %2453 = vmatpush1.msra.mxu0 0.0
  %2454 = vmatprep.subr.mxu0 0.0
  %2455 = vmatpush1.msra.mxu0 0.0
  %2456 = vmatprep.subr.mxu0 0.0
  %2457 = vmatpush1.msra.mxu0 0.0
  %2458 = vmatprep.subr.mxu0 0.0
  %2459 = vmatpush1.msra.mxu0 0.0
  %2460 = vmatprep.subr.mxu0 0.0
  %2461 = vmatpush1.msra.mxu0 0.0
  %2462 = vmatprep.subr.mxu0 0.0
  %2463 = vmatpush1.msra.mxu0 0.0
  %2464 = vmatprep.subr.mxu0 0.0
  %2465 = vmatpush1.msra.mxu0 0.0
  %2466 = vmatprep.subr.mxu0 0.0
  %2467 = vmatpush1.msra.mxu0 0.0
  %2468 = vmatprep.subr.mxu0 0.0
  %2469 = vmatpush1.msra.mxu0 0.0
  %2470 = vmatprep.subr.mxu0 0.0
  %2471 = vmatpush1.msra.mxu0 0.0
  %2472 = vmatprep.subr.mxu0 0.0
  %2473 = vmatpush1.msra.mxu0 0.0
  %2474 = vmatprep.subr.mxu0 0.0
  %2475 = vmatpush1.msra.mxu0 0.0
  %2476 = vmatprep.subr.mxu0 0.0
  %2477 = vmatpush1.msra.mxu0 0.0
  %2478 = vmatprep.subr.mxu0 0.0
  %2479 = vmatpush1.msra.mxu0 0.0
  %2480 = vmatprep.subr.mxu0 0.0
  %2481 = vmatpush1.msra.mxu0 0.0
  %2482 = vmatprep.subr.mxu0 0.0
  %2483 = vmatpush1.msra.mxu0 0.0
  %2484 = vmatprep.subr.mxu0 0.0
  %2485 = vmatpush1.msra.mxu0 0.0
  %2486 = vmatprep.subr.mxu0 0.0
  %2487 = vmatpush1.msra.mxu0 0.0
  %2488 = vmatprep.subr.mxu0 0.0
  %2489 = vmatpush1.msra.mxu0 0.0
  %2490 = vmatprep.subr.mxu0 0.0
  %2491 = vmatpush1.msra.mxu0 0.0
  %2492 = vmatprep.subr.mxu0 0.0
  %2493 = vmatpush1.msra.mxu0 0.0
  %2494 = vmatprep.subr.mxu0 0.0
  %2495 = vmatpush1.msra.mxu0 0.0
  %2496 = vmatprep.mubr.f32.mxu0 0.0
  %2497 = vmatmul.mubr.f32.gmra.mrb[0].mxu0 %v2427
  %v2498 = vpop.f32.mrb[0].mxu0
  %v2499 = vadd.f32 0.0, %v2498
  %v2500 = vpop.f32.mrb[0].mxu0
  %2501 = vmatprep.mubr.f32.mxu0 0.0
  %2502 = vmatmul.mubr.f32.gmra.mrb[0].mxu0 %v2430
  %v2503 = vpop.f32.mrb[0].mxu0
  %v2504 = vadd.f32 0.0, %v2503
  %v2505 = vpop.f32.mrb[0].mxu0
  %2506 = vdwg.mxu0
  %v2508 = vsel %vm217, %v2499, 0
  %v2511 = vsel %vm217, %v2504, 0
  %2513 = vmatprep.subr.mxu0 0.0
  %2514 = vmatpush1.msra.mxu0 %v1745
  %2515 = vmatprep.subr.mxu0 0.0
  %2516 = vmatpush1.msra.mxu0 0.0
  %2517 = vmatprep.subr.mxu0 0.0
  %2518 = vmatpush1.msra.mxu0 0.0
  %2519 = vmatprep.subr.mxu0 0.0
  %2520 = vmatpush1.msra.mxu0 0.0
  %2521 = vmatprep.subr.mxu0 0.0
  %2522 = vmatpush1.msra.mxu0 0.0
  %2523 = vmatprep.subr.mxu0 0.0
  %2524 = vmatpush1.msra.mxu0 0.0
  %2525 = vmatprep.subr.mxu0 0.0
  %2526 = vmatpush1.msra.mxu0 0.0
  %2527 = vmatprep.subr.mxu0 0.0
  %2528 = vmatpush1.msra.mxu0 0.0
  %2529 = vmatprep.subr.mxu0 0.0
  %2530 = vmatpush1.msra.mxu0 0.0
  %2531 = vmatprep.subr.mxu0 0.0
  %2532 = vmatpush1.msra.mxu0 0.0
  %2533 = vmatprep.subr.mxu0 0.0
  %2534 = vmatpush1.msra.mxu0 0.0
  %2535 = vmatprep.subr.mxu0 0.0
  %2536 = vmatpush1.msra.mxu0 0.0
  %2537 = vmatprep.subr.mxu0 0.0
  %2538 = vmatpush1.msra.mxu0 0.0
  %2539 = vmatprep.subr.mxu0 0.0
  %2540 = vmatpush1.msra.mxu0 0.0
  %2541 = vmatprep.subr.mxu0 0.0
  %2542 = vmatpush1.msra.mxu0 0.0
  %2543 = vmatprep.subr.mxu0 0.0
  %2544 = vmatpush1.msra.mxu0 0.0
  %2545 = vmatprep.subr.mxu0 0.0
  %2546 = vmatpush1.msra.mxu0 0.0
  %2547 = vmatprep.subr.mxu0 0.0
  %2548 = vmatpush1.msra.mxu0 0.0
  %2549 = vmatprep.subr.mxu0 0.0
  %2550 = vmatpush1.msra.mxu0 0.0
  %2551 = vmatprep.subr.mxu0 0.0
  %2552 = vmatpush1.msra.mxu0 0.0
  %2553 = vmatprep.subr.mxu0 0.0
  %2554 = vmatpush1.msra.mxu0 0.0
  %2555 = vmatprep.subr.mxu0 0.0
  %2556 = vmatpush1.msra.mxu0 0.0
  %2557 = vmatprep.subr.mxu0 0.0
  %2558 = vmatpush1.msra.mxu0 0.0
  %2559 = vmatprep.subr.mxu0 0.0
  %2560 = vmatpush1.msra.mxu0 0.0
  %2561 = vmatprep.subr.mxu0 0.0
  %2562 = vmatpush1.msra.mxu0 0.0
  %2563 = vmatprep.subr.mxu0 0.0
  %2564 = vmatpush1.msra.mxu0 0.0
  %2565 = vmatprep.subr.mxu0 0.0
  %2566 = vmatpush1.msra.mxu0 0.0
  %2567 = vmatprep.subr.mxu0 0.0
  %2568 = vmatpush1.msra.mxu0 0.0
  %2569 = vmatprep.subr.mxu0 0.0
  %2570 = vmatpush1.msra.mxu0 0.0
  %2571 = vmatprep.subr.mxu0 0.0
  %2572 = vmatpush1.msra.mxu0 0.0
  %2573 = vmatprep.subr.mxu0 0.0
  %2574 = vmatpush1.msra.mxu0 0.0
  %2575 = vmatprep.subr.mxu0 0.0
  %2576 = vmatpush1.msra.mxu0 0.0
  %2577 = vmatprep.mubr.f32.mxu0 0.0
  %2578 = vmatmul.mubr.f32.gmra.mrb[0].mxu0 %v2508
  %v2579 = vpop.f32.mrb[0].mxu0
  %v2580 = vadd.f32 0.0, %v2579
  %v2581 = vpop.f32.mrb[0].mxu0
  %2582 = vmatprep.mubr.f32.mxu0 0.0
  %2583 = vmatmul.mubr.f32.gmra.mrb[0].mxu0 %v2511
  %v2584 = vpop.f32.mrb[0].mxu0
  %v2585 = vadd.f32 0.0, %v2584
  %v2586 = vpop.f32.mrb[0].mxu0
  %2587 = vdwg.mxu0
  %v2588 = vadd.f32 %v2299, %v2580
  %v2589 = vadd.f32 %v2304, %v2585
  %2590 = vrot.lane.b32.xlu0 %v1734, 104
  %v2591 = vpop.permute.xlu0 %2590
  %2592 = vrot.lane.b32.xlu0 %v1739, 104
  %v2593 = vpop.permute.xlu0 %2592
  %2594 = vrot.lane.b32.xlu0 %v1734, 72
  %v2595 = vpop.permute.xlu0 %2594
  %2596 = vrot.lane.b32.xlu0 %v1739, 72
  %v2597 = vpop.permute.xlu0 %2596
  %v2598 = vsel %vm217, %v2591, 0
  %v2600 = vsel %vm217, %v2593, 0
  %v2602 = vsel %vm217, %v2595, 0
  %v2604 = vsel %vm217, %v2597, 0
  %2606 = vmatprep.subr.mxu0 0.0
  %2607 = vmatpush1.xpose.msra.mxu0 %v2602
  %2608 = vmatprep.subr.mxu0 0.0
  %2609 = vmatpush1.xpose.msra.mxu0 %v2604
  %2610 = vmatprep.subr.mxu0 0.0
  %2611 = vmatpush1.xpose.msra.mxu0 0.0
  %2612 = vmatprep.subr.mxu0 0.0
  %2613 = vmatpush1.xpose.msra.mxu0 0.0
  %2614 = vmatprep.subr.mxu0 0.0
  %2615 = vmatpush1.xpose.msra.mxu0 0.0
  %2616 = vmatprep.subr.mxu0 0.0
  %2617 = vmatpush1.xpose.msra.mxu0 0.0
  %2618 = vmatprep.subr.mxu0 0.0
  %2619 = vmatpush1.xpose.msra.mxu0 0.0
  %2620 = vmatprep.subr.mxu0 0.0
  %2621 = vmatpush1.xpose.msra.mxu0 0.0
  %2622 = vmatprep.subr.mxu0 0.0
  %2623 = vmatpush1.xpose.msra.mxu0 0.0
  %2624 = vmatprep.subr.mxu0 0.0
  %2625 = vmatpush1.xpose.msra.mxu0 0.0
  %2626 = vmatprep.subr.mxu0 0.0
  %2627 = vmatpush1.xpose.msra.mxu0 0.0
  %2628 = vmatprep.subr.mxu0 0.0
  %2629 = vmatpush1.xpose.msra.mxu0 0.0
  %2630 = vmatprep.subr.mxu0 0.0
  %2631 = vmatpush1.xpose.msra.mxu0 0.0
  %2632 = vmatprep.subr.mxu0 0.0
  %2633 = vmatpush1.xpose.msra.mxu0 0.0
  %2634 = vmatprep.subr.mxu0 0.0
  %2635 = vmatpush1.xpose.msra.mxu0 0.0
  %2636 = vmatprep.subr.mxu0 0.0
  %2637 = vmatpush1.xpose.msra.mxu0 0.0
  %2638 = vmatprep.subr.mxu0 0.0
  %2639 = vmatpush1.xpose.msra.mxu0 0.0
  %2640 = vmatprep.subr.mxu0 0.0
  %2641 = vmatpush1.xpose.msra.mxu0 0.0
  %2642 = vmatprep.subr.mxu0 0.0
  %2643 = vmatpush1.xpose.msra.mxu0 0.0
  %2644 = vmatprep.subr.mxu0 0.0
  %2645 = vmatpush1.xpose.msra.mxu0 0.0
  %2646 = vmatprep.subr.mxu0 0.0
  %2647 = vmatpush1.xpose.msra.mxu0 0.0
  %2648 = vmatprep.subr.mxu0 0.0
  %2649 = vmatpush1.xpose.msra.mxu0 0.0
  %2650 = vmatprep.subr.mxu0 0.0
  %2651 = vmatpush1.xpose.msra.mxu0 0.0
  %2652 = vmatprep.subr.mxu0 0.0
  %2653 = vmatpush1.xpose.msra.mxu0 0.0
  %2654 = vmatprep.subr.mxu0 0.0
  %2655 = vmatpush1.xpose.msra.mxu0 0.0
  %2656 = vmatprep.subr.mxu0 0.0
  %2657 = vmatpush1.xpose.msra.mxu0 0.0
  %2658 = vmatprep.subr.mxu0 0.0
  %2659 = vmatpush1.xpose.msra.mxu0 0.0
  %2660 = vmatprep.subr.mxu0 0.0
  %2661 = vmatpush1.xpose.msra.mxu0 0.0
  %2662 = vmatprep.subr.mxu0 0.0
  %2663 = vmatpush1.xpose.msra.mxu0 0.0
  %2664 = vmatprep.subr.mxu0 0.0
  %2665 = vmatpush1.xpose.msra.mxu0 0.0
  %2666 = vmatprep.subr.mxu0 0.0
  %2667 = vmatpush1.xpose.msra.mxu0 0.0
  %2668 = vmatprep.subr.mxu0 0.0
  %2669 = vmatpush1.xpose.msra.mxu0 0.0
  %2670 = vmatprep.mubr.f32.mxu0 0.0
  %2671 = vmatmul.mubr.f32.gmra.mrb[0].mxu0 %v2598
  %v2672 = vpop.f32.mrb[0].mxu0
  %v2673 = vadd.f32 %v113, %v2672
  %v2674 = vpop.f32.mrb[0].mxu0
  %2675 = vmatprep.mubr.f32.mxu0 0.0
  %2676 = vmatmul.mubr.f32.gmra.mrb[0].mxu0 %v2600
  %v2677 = vpop.f32.mrb[0].mxu0
  %v2678 = vadd.f32 %v114, %v2677
  %v2679 = vpop.f32.mrb[0].mxu0
  %2680 = vdwg.mxu0
  %v2681 = vsel %vm301, %v2673, -inf
  %2682 = vmax.xlane.f32.xlu0 %v2681
  %v2683 = vpop.xlane.xlu0 %2682
  %v2684 = vsel %vm301, %v2678, -inf
  %2685 = vmax.xlane.f32.xlu0 %v2684
  %v2686 = vpop.xlane.xlu0 %2685
  %v2687 = vsub.f32 %v2673, %v2683
  %v2688 = vsub.f32 %v2678, %v2686
  %v2689 = vmul.f32 %v2687, 1.442695
  %v2690 = vpow.pop %v2689
  %v2691 = vmul.f32 %v2688, 1.442695
  %v2692 = vpow.pop %v2691
  %v2693 = vsel %vm301, %v2690, 0.0
  %2694 = vadd.xlane.f32.xlu0 %v2693
  %v2695 = vpop.xlane.xlu0 %2694
  %v2696 = vsel %vm301, %v2692, 0.0
  %2697 = vadd.xlane.f32.xlu0 %v2696
  %v2698 = vpop.xlane.xlu0 %2697
  %v2699 = vrcp.pop %v2695
  %v2700 = vrcp.pop %v2698
  %v2701 = vmul.f32 %v2690, %v2699
  %v2702 = vmul.f32 %v2692, %v2700
  %2703 = vrot.lane.b32.xlu0 %v1734, 40
  %v2704 = vpop.permute.xlu0 %2703
  %2705 = vrot.lane.b32.xlu0 %v1739, 40
  %v2706 = vpop.permute.xlu0 %2705
  %v2710 = vsel %vm301, %v2701, 0
  %v2713 = vsel %vm301, %v2702, 0
  %2715 = vmatprep.subr.mxu0 0.0
  %2716 = vmatpush1.msra.mxu0 %v2704
  %2717 = vmatprep.subr.mxu0 0.0
  %2718 = vmatpush1.msra.mxu0 %v2706
  %2719 = vmatprep.subr.mxu0 0.0
  %2720 = vmatpush1.msra.mxu0 0.0
  %2721 = vmatprep.subr.mxu0 0.0
  %2722 = vmatpush1.msra.mxu0 0.0
  %2723 = vmatprep.subr.mxu0 0.0
  %2724 = vmatpush1.msra.mxu0 0.0
  %2725 = vmatprep.subr.mxu0 0.0
  %2726 = vmatpush1.msra.mxu0 0.0
  %2727 = vmatprep.subr.mxu0 0.0
  %2728 = vmatpush1.msra.mxu0 0.0
  %2729 = vmatprep.subr.mxu0 0.0
  %2730 = vmatpush1.msra.mxu0 0.0
  %2731 = vmatprep.subr.mxu0 0.0
  %2732 = vmatpush1.msra.mxu0 0.0
  %2733 = vmatprep.subr.mxu0 0.0
  %2734 = vmatpush1.msra.mxu0 0.0
  %2735 = vmatprep.subr.mxu0 0.0
  %2736 = vmatpush1.msra.mxu0 0.0
  %2737 = vmatprep.subr.mxu0 0.0
  %2738 = vmatpush1.msra.mxu0 0.0
  %2739 = vmatprep.subr.mxu0 0.0
  %2740 = vmatpush1.msra.mxu0 0.0
  %2741 = vmatprep.subr.mxu0 0.0
  %2742 = vmatpush1.msra.mxu0 0.0
  %2743 = vmatprep.subr.mxu0 0.0
  %2744 = vmatpush1.msra.mxu0 0.0
  %2745 = vmatprep.subr.mxu0 0.0
  %2746 = vmatpush1.msra.mxu0 0.0
  %2747 = vmatprep.subr.mxu0 0.0
  %2748 = vmatpush1.msra.mxu0 0.0
  %2749 = vmatprep.subr.mxu0 0.0
  %2750 = vmatpush1.msra.mxu0 0.0
  %2751 = vmatprep.subr.mxu0 0.0
  %2752 = vmatpush1.msra.mxu0 0.0
  %2753 = vmatprep.subr.mxu0 0.0
  %2754 = vmatpush1.msra.mxu0 0.0
  %2755 = vmatprep.subr.mxu0 0.0
  %2756 = vmatpush1.msra.mxu0 0.0
  %2757 = vmatprep.subr.mxu0 0.0
  %2758 = vmatpush1.msra.mxu0 0.0
  %2759 = vmatprep.subr.mxu0 0.0
  %2760 = vmatpush1.msra.mxu0 0.0
  %2761 = vmatprep.subr.mxu0 0.0
  %2762 = vmatpush1.msra.mxu0 0.0
  %2763 = vmatprep.subr.mxu0 0.0
  %2764 = vmatpush1.msra.mxu0 0.0
  %2765 = vmatprep.subr.mxu0 0.0
  %2766 = vmatpush1.msra.mxu0 0.0
  %2767 = vmatprep.subr.mxu0 0.0
  %2768 = vmatpush1.msra.mxu0 0.0
  %2769 = vmatprep.subr.mxu0 0.0
  %2770 = vmatpush1.msra.mxu0 0.0
  %2771 = vmatprep.subr.mxu0 0.0
  %2772 = vmatpush1.msra.mxu0 0.0
  %2773 = vmatprep.subr.mxu0 0.0
  %2774 = vmatpush1.msra.mxu0 0.0
  %2775 = vmatprep.subr.mxu0 0.0
  %2776 = vmatpush1.msra.mxu0 0.0
  %2777 = vmatprep.subr.mxu0 0.0
  %2778 = vmatpush1.msra.mxu0 0.0
  %2779 = vmatprep.mubr.f32.mxu0 0.0
  %2780 = vmatmul.mubr.f32.gmra.mrb[0].mxu0 %v2710
  %v2781 = vpop.f32.mrb[0].mxu0
  %v2782 = vadd.f32 0.0, %v2781
  %v2783 = vpop.f32.mrb[0].mxu0
  %2784 = vmatprep.mubr.f32.mxu0 0.0
  %2785 = vmatmul.mubr.f32.gmra.mrb[0].mxu0 %v2713
  %v2786 = vpop.f32.mrb[0].mxu0
  %v2787 = vadd.f32 0.0, %v2786
  %v2788 = vpop.f32.mrb[0].mxu0
  %2789 = vdwg.mxu0
  %v2791 = vsel %vm217, %v2782, 0
  %v2794 = vsel %vm217, %v2787, 0
  %2796 = vmatprep.subr.mxu0 0.0
  %2797 = vmatpush1.msra.mxu0 %v1746
  %2798 = vmatprep.subr.mxu0 0.0
  %2799 = vmatpush1.msra.mxu0 0.0
  %2800 = vmatprep.subr.mxu0 0.0
  %2801 = vmatpush1.msra.mxu0 0.0
  %2802 = vmatprep.subr.mxu0 0.0
  %2803 = vmatpush1.msra.mxu0 0.0
  %2804 = vmatprep.subr.mxu0 0.0
  %2805 = vmatpush1.msra.mxu0 0.0
  %2806 = vmatprep.subr.mxu0 0.0
  %2807 = vmatpush1.msra.mxu0 0.0
  %2808 = vmatprep.subr.mxu0 0.0
  %2809 = vmatpush1.msra.mxu0 0.0
  %2810 = vmatprep.subr.mxu0 0.0
  %2811 = vmatpush1.msra.mxu0 0.0
  %2812 = vmatprep.subr.mxu0 0.0
  %2813 = vmatpush1.msra.mxu0 0.0
  %2814 = vmatprep.subr.mxu0 0.0
  %2815 = vmatpush1.msra.mxu0 0.0
  %2816 = vmatprep.subr.mxu0 0.0
  %2817 = vmatpush1.msra.mxu0 0.0
  %2818 = vmatprep.subr.mxu0 0.0
  %2819 = vmatpush1.msra.mxu0 0.0
  %2820 = vmatprep.subr.mxu0 0.0
  %2821 = vmatpush1.msra.mxu0 0.0
  %2822 = vmatprep.subr.mxu0 0.0
  %2823 = vmatpush1.msra.mxu0 0.0
  %2824 = vmatprep.subr.mxu0 0.0
  %2825 = vmatpush1.msra.mxu0 0.0
  %2826 = vmatprep.subr.mxu0 0.0
  %2827 = vmatpush1.msra.mxu0 0.0
  %2828 = vmatprep.subr.mxu0 0.0
  %2829 = vmatpush1.msra.mxu0 0.0
  %2830 = vmatprep.subr.mxu0 0.0
  %2831 = vmatpush1.msra.mxu0 0.0
  %2832 = vmatprep.subr.mxu0 0.0
  %2833 = vmatpush1.msra.mxu0 0.0
  %2834 = vmatprep.subr.mxu0 0.0
  %2835 = vmatpush1.msra.mxu0 0.0
  %2836 = vmatprep.subr.mxu0 0.0
  %2837 = vmatpush1.msra.mxu0 0.0
  %2838 = vmatprep.subr.mxu0 0.0
  %2839 = vmatpush1.msra.mxu0 0.0
  %2840 = vmatprep.subr.mxu0 0.0
  %2841 = vmatpush1.msra.mxu0 0.0
  %2842 = vmatprep.subr.mxu0 0.0
  %2843 = vmatpush1.msra.mxu0 0.0
  %2844 = vmatprep.subr.mxu0 0.0
  %2845 = vmatpush1.msra.mxu0 0.0
  %2846 = vmatprep.subr.mxu0 0.0
  %2847 = vmatpush1.msra.mxu0 0.0
  %2848 = vmatprep.subr.mxu0 0.0
  %2849 = vmatpush1.msra.mxu0 0.0
  %2850 = vmatprep.subr.mxu0 0.0
  %2851 = vmatpush1.msra.mxu0 0.0
  %2852 = vmatprep.subr.mxu0 0.0
  %2853 = vmatpush1.msra.mxu0 0.0
  %2854 = vmatprep.subr.mxu0 0.0
  %2855 = vmatpush1.msra.mxu0 0.0
  %2856 = vmatprep.subr.mxu0 0.0
  %2857 = vmatpush1.msra.mxu0 0.0
  %2858 = vmatprep.subr.mxu0 0.0
  %2859 = vmatpush1.msra.mxu0 0.0
  %2860 = vmatprep.mubr.f32.mxu0 0.0
  %2861 = vmatmul.mubr.f32.gmra.mrb[0].mxu0 %v2791
  %v2862 = vpop.f32.mrb[0].mxu0
  %v2863 = vadd.f32 0.0, %v2862
  %v2864 = vpop.f32.mrb[0].mxu0
  %2865 = vmatprep.mubr.f32.mxu0 0.0
  %2866 = vmatmul.mubr.f32.gmra.mrb[0].mxu0 %v2794
  %v2867 = vpop.f32.mrb[0].mxu0
  %v2868 = vadd.f32 0.0, %v2867
  %v2869 = vpop.f32.mrb[0].mxu0
  %2870 = vdwg.mxu0
  %v2871 = vadd.f32 %v2588, %v2863
  %v2872 = vadd.f32 %v2589, %v2868
  %s2873 = scalar_lea.vmem %s7, 1
  %v2874 = vld [vmem:[%s2873] sm:$0x1]
  %v2876 = vlaneseq
  %v2877 = vshrl.u32 %v2876, 7
  %v2878 = vsub.s32 0, %v2877
  %v2879 = vrot.slane %v2874, %v2878
  %v2881 = vadd.f32 %v2871, %v2879
  %v2882 = vadd.f32 %v2872, %v2879
  %v2883 = vadd.f32 %v2881, %v1646
  %v2884 = vadd.f32 %v2882, %v1647
  %s2885 = scalar_lea.vmem %s8, 1
  %v2886 = vld [vmem:[%s2885] sm:$0x1]
  %s2887 = scalar_lea.vmem %s9, 1
  %v2888 = vld [vmem:[%s2887] sm:$0x1]
  %v2889 = vsel %vm69, %v2883, 0.0
  %2890 = vadd.xlane.f32.xlu0 %v2889
  %v2891 = vpop.xlane.xlu0 %2890
  %v2892 = vsel %vm69, %v2884, 0.0
  %2893 = vadd.xlane.f32.xlu0 %v2892
  %v2894 = vpop.xlane.xlu0 %2893
  %v2895 = vmul.f32 %v2891, %v76
  %v2896 = vmul.f32 %v2894, %v76
  %v2897 = vsub.f32 %v2883, %v2895
  %v2898 = vsub.f32 %v2884, %v2896
  %v2899 = vmul.f32 %v2897, %v2897
  %v2900 = vmul.f32 %v2898, %v2898
  %v2901 = vsel %vm69, %v2899, 0.0
  %2902 = vadd.xlane.f32.xlu0 %v2901
  %v2903 = vpop.xlane.xlu0 %2902
  %v2904 = vsel %vm69, %v2900, 0.0
  %2905 = vadd.xlane.f32.xlu0 %v2904
  %v2906 = vpop.xlane.xlu0 %2905
  %v2907 = vmul.f32 %v2903, %v76
  %v2908 = vmul.f32 %v2906, %v76
  %v2909 = vadd.f32 %v2907, 1e-12
  %v2910 = vadd.f32 %v2908, 1e-12
  %v2911 = vrsqrt.pop %v2909
  %v2912 = vrsqrt.pop %v2910
  %v2913 = vmul.f32 %v2897, %v2911
  %v2914 = vmul.f32 %v2898, %v2912
  %v2916 = vlaneseq
  %v2917 = vshrl.u32 %v2916, 7
  %v2918 = vsub.s32 0, %v2917
  %v2919 = vrot.slane %v2886, %v2918
  %v2921 = vmul.f32 %v2913, %v2919
  %v2922 = vmul.f32 %v2914, %v2919
  %v2924 = vlaneseq
  %v2925 = vshrl.u32 %v2924, 7
  %v2926 = vsub.s32 0, %v2925
  %v2927 = vrot.slane %v2888, %v2926
  %v2929 = vadd.f32 %v2921, %v2927
  %v2930 = vadd.f32 %v2922, %v2927
  %s2931 = scalar_lea.vmem %s10, 32
  %v2932 = vld [vmem:[%s2931] sm:$0xff]
  %v2933 = vld [vmem:[%s2931 + $0x8] sm:$0xff]
  %v2934 = vld [vmem:[%s2931 + $0x10] sm:$0xff]
  %v2935 = vld [vmem:[%s2931 + $0x18] sm:$0xff]
  %s2936 = scalar_lea.vmem %s11, 1
  %v2937 = vld [vmem:[%s2936] sm:$0x1]
  %v2939 = vlaneseq
  %v2940 = vshrl.u32 %v2939, 7
  %v2941 = vsub.s32 0, %v2940
  %v2942 = vrot.slane %v2937, %v2941
  %v2945 = vsel %vm69, %v2929, 0
  %v2948 = vsel %vm69, %v2930, 0
  %2950 = vmatprep.subr.mxu0 0.0
  %2951 = vmatpush1.msra.mxu0 %v2932
  %2952 = vmatprep.subr.mxu0 0.0
  %2953 = vmatpush1.msra.mxu0 %v2933
  %2954 = vmatprep.subr.mxu0 0.0
  %2955 = vmatpush1.msra.mxu0 %v2934
  %2956 = vmatprep.subr.mxu0 0.0
  %2957 = vmatpush1.msra.mxu0 %v2935
  %2958 = vmatprep.subr.mxu0 0.0
  %2959 = vmatpush1.msra.mxu0 0.0
  %2960 = vmatprep.subr.mxu0 0.0
  %2961 = vmatpush1.msra.mxu0 0.0
  %2962 = vmatprep.subr.mxu0 0.0
  %2963 = vmatpush1.msra.mxu0 0.0
  %2964 = vmatprep.subr.mxu0 0.0
  %2965 = vmatpush1.msra.mxu0 0.0
  %2966 = vmatprep.subr.mxu0 0.0
  %2967 = vmatpush1.msra.mxu0 0.0
  %2968 = vmatprep.subr.mxu0 0.0
  %2969 = vmatpush1.msra.mxu0 0.0
  %2970 = vmatprep.subr.mxu0 0.0
  %2971 = vmatpush1.msra.mxu0 0.0
  %2972 = vmatprep.subr.mxu0 0.0
  %2973 = vmatpush1.msra.mxu0 0.0
  %2974 = vmatprep.subr.mxu0 0.0
  %2975 = vmatpush1.msra.mxu0 0.0
  %2976 = vmatprep.subr.mxu0 0.0
  %2977 = vmatpush1.msra.mxu0 0.0
  %2978 = vmatprep.subr.mxu0 0.0
  %2979 = vmatpush1.msra.mxu0 0.0
  %2980 = vmatprep.subr.mxu0 0.0
  %2981 = vmatpush1.msra.mxu0 0.0
  %2982 = vmatprep.subr.mxu0 0.0
  %2983 = vmatpush1.msra.mxu0 0.0
  %2984 = vmatprep.subr.mxu0 0.0
  %2985 = vmatpush1.msra.mxu0 0.0
  %2986 = vmatprep.subr.mxu0 0.0
  %2987 = vmatpush1.msra.mxu0 0.0
  %2988 = vmatprep.subr.mxu0 0.0
  %2989 = vmatpush1.msra.mxu0 0.0
  %2990 = vmatprep.subr.mxu0 0.0
  %2991 = vmatpush1.msra.mxu0 0.0
  %2992 = vmatprep.subr.mxu0 0.0
  %2993 = vmatpush1.msra.mxu0 0.0
  %2994 = vmatprep.subr.mxu0 0.0
  %2995 = vmatpush1.msra.mxu0 0.0
  %2996 = vmatprep.subr.mxu0 0.0
  %2997 = vmatpush1.msra.mxu0 0.0
  %2998 = vmatprep.subr.mxu0 0.0
  %2999 = vmatpush1.msra.mxu0 0.0
  %3000 = vmatprep.subr.mxu0 0.0
  %3001 = vmatpush1.msra.mxu0 0.0
  %3002 = vmatprep.subr.mxu0 0.0
  %3003 = vmatpush1.msra.mxu0 0.0
  %3004 = vmatprep.subr.mxu0 0.0
  %3005 = vmatpush1.msra.mxu0 0.0
  %3006 = vmatprep.subr.mxu0 0.0
  %3007 = vmatpush1.msra.mxu0 0.0
  %3008 = vmatprep.subr.mxu0 0.0
  %3009 = vmatpush1.msra.mxu0 0.0
  %3010 = vmatprep.subr.mxu0 0.0
  %3011 = vmatpush1.msra.mxu0 0.0
  %3012 = vmatprep.subr.mxu0 0.0
  %3013 = vmatpush1.msra.mxu0 0.0
  %3014 = vmatprep.mubr.f32.mxu0 0.0
  %3015 = vmatmul.mubr.f32.gmra.mrb[0].mxu0 %v2945
  %v3016 = vpop.f32.mrb[0].mxu0
  %v3017 = vadd.f32 %v2942, %v3016
  %v3018 = vpop.f32.mrb[0].mxu0
  %3019 = vmatprep.mubr.f32.mxu0 0.0
  %3020 = vmatmul.mubr.f32.gmra.mrb[0].mxu0 %v2948
  %v3021 = vpop.f32.mrb[0].mxu0
  %v3022 = vadd.f32 %v2942, %v3021
  %v3023 = vpop.f32.mrb[0].mxu0
  %3024 = vdwg.mxu0
  %v3025 = vmul.f32 %v3017, 0.5
  %v3026 = vmul.f32 %v3022, 0.5
  %v3027 = vmul.f32 %v3017, 0.044715
  %v3028 = vmul.f32 %v3022, 0.044715
  %v3029 = vmul.f32 %v3027, %v3017
  %v3030 = vmul.f32 %v3028, %v3022
  %v3031 = vmul.f32 %v3029, %v3017
  %v3032 = vmul.f32 %v3030, %v3022
  %v3033 = vadd.f32 %v3017, %v3031
  %v3034 = vadd.f32 %v3022, %v3032
  %v3035 = vmul.f32 %v3033, 0.7978846
  %v3036 = vmul.f32 %v3034, 0.7978846
  %v3037 = vtanh.pop %v3035
  %v3038 = vtanh.pop %v3036
  %v3039 = vadd.f32 %v3037, 1.0
  %v3040 = vadd.f32 %v3038, 1.0
  %v3041 = vmul.f32 %v3025, %v3039
  %v3042 = vmul.f32 %v3026, %v3040
  %s3043 = scalar_lea.vmem %s12, 128
  %v3044 = vld [vmem:[%s3043] sm:$0xff]
  %v3045 = vld [vmem:[%s3043 + $0x8] sm:$0xff]
  %v3046 = vld [vmem:[%s3043 + $0x10] sm:$0xff]
  %v3047 = vld [vmem:[%s3043 + $0x18] sm:$0xff]
  %v3048 = vld [vmem:[%s3043 + $0x20] sm:$0xff]
  %v3049 = vld [vmem:[%s3043 + $0x28] sm:$0xff]
  %v3050 = vld [vmem:[%s3043 + $0x30] sm:$0xff]
  %v3051 = vld [vmem:[%s3043 + $0x38] sm:$0xff]
  %v3052 = vld [vmem:[%s3043 + $0x40] sm:$0xff]
  %v3053 = vld [vmem:[%s3043 + $0x48] sm:$0xff]
  %v3054 = vld [vmem:[%s3043 + $0x50] sm:$0xff]
  %v3055 = vld [vmem:[%s3043 + $0x58] sm:$0xff]
  %v3056 = vld [vmem:[%s3043 + $0x60] sm:$0xff]
  %v3057 = vld [vmem:[%s3043 + $0x68] sm:$0xff]
  %v3058 = vld [vmem:[%s3043 + $0x70] sm:$0xff]
  %v3059 = vld [vmem:[%s3043 + $0x78] sm:$0xff]
  %s3060 = scalar_lea.vmem %s13, 1
  %v3061 = vld [vmem:[%s3060] sm:$0x1]
  %v3063 = vlaneseq
  %v3064 = vshrl.u32 %v3063, 7
  %v3065 = vsub.s32 0, %v3064
  %v3066 = vrot.slane %v3061, %v3065
  %3068 = vmatprep.subr.mxu0 0.0
  %3069 = vmatpush1.msra.mxu0 %v3044
  %3070 = vmatprep.subr.mxu0 0.0
  %3071 = vmatpush1.msra.mxu0 %v3045
  %3072 = vmatprep.subr.mxu0 0.0
  %3073 = vmatpush1.msra.mxu0 %v3046
  %3074 = vmatprep.subr.mxu0 0.0
  %3075 = vmatpush1.msra.mxu0 %v3047
  %3076 = vmatprep.subr.mxu0 0.0
  %3077 = vmatpush1.msra.mxu0 %v3048
  %3078 = vmatprep.subr.mxu0 0.0
  %3079 = vmatpush1.msra.mxu0 %v3049
  %3080 = vmatprep.subr.mxu0 0.0
  %3081 = vmatpush1.msra.mxu0 %v3050
  %3082 = vmatprep.subr.mxu0 0.0
  %3083 = vmatpush1.msra.mxu0 %v3051
  %3084 = vmatprep.subr.mxu0 0.0
  %3085 = vmatpush1.msra.mxu0 %v3052
  %3086 = vmatprep.subr.mxu0 0.0
  %3087 = vmatpush1.msra.mxu0 %v3053
  %3088 = vmatprep.subr.mxu0 0.0
  %3089 = vmatpush1.msra.mxu0 %v3054
  %3090 = vmatprep.subr.mxu0 0.0
  %3091 = vmatpush1.msra.mxu0 %v3055
  %3092 = vmatprep.subr.mxu0 0.0
  %3093 = vmatpush1.msra.mxu0 %v3056
  %3094 = vmatprep.subr.mxu0 0.0
  %3095 = vmatpush1.msra.mxu0 %v3057
  %3096 = vmatprep.subr.mxu0 0.0
  %3097 = vmatpush1.msra.mxu0 %v3058
  %3098 = vmatprep.subr.mxu0 0.0
  %3099 = vmatpush1.msra.mxu0 %v3059
  %3100 = vmatprep.subr.mxu0 0.0
  %3101 = vmatpush1.msra.mxu0 0.0
  %3102 = vmatprep.subr.mxu0 0.0
  %3103 = vmatpush1.msra.mxu0 0.0
  %3104 = vmatprep.subr.mxu0 0.0
  %3105 = vmatpush1.msra.mxu0 0.0
  %3106 = vmatprep.subr.mxu0 0.0
  %3107 = vmatpush1.msra.mxu0 0.0
  %3108 = vmatprep.subr.mxu0 0.0
  %3109 = vmatpush1.msra.mxu0 0.0
  %3110 = vmatprep.subr.mxu0 0.0
  %3111 = vmatpush1.msra.mxu0 0.0
  %3112 = vmatprep.subr.mxu0 0.0
  %3113 = vmatpush1.msra.mxu0 0.0
  %3114 = vmatprep.subr.mxu0 0.0
  %3115 = vmatpush1.msra.mxu0 0.0
  %3116 = vmatprep.subr.mxu0 0.0
  %3117 = vmatpush1.msra.mxu0 0.0
  %3118 = vmatprep.subr.mxu0 0.0
  %3119 = vmatpush1.msra.mxu0 0.0
  %3120 = vmatprep.subr.mxu0 0.0
  %3121 = vmatpush1.msra.mxu0 0.0
  %3122 = vmatprep.subr.mxu0 0.0
  %3123 = vmatpush1.msra.mxu0 0.0
  %3124 = vmatprep.subr.mxu0 0.0
  %3125 = vmatpush1.msra.mxu0 0.0
  %3126 = vmatprep.subr.mxu0 0.0
  %3127 = vmatpush1.msra.mxu0 0.0
  %3128 = vmatprep.subr.mxu0 0.0
  %3129 = vmatpush1.msra.mxu0 0.0
  %3130 = vmatprep.subr.mxu0 0.0
  %3131 = vmatpush1.msra.mxu0 0.0
  %3132 = vmatprep.mubr.f32.mxu0 0.0
  %3133 = vmatmul.mubr.f32.gmra.mrb[0].mxu0 %v3041
  %v3134 = vpop.f32.mrb[0].mxu0
  %v3135 = vadd.f32 %v3066, %v3134
  %v3136 = vpop.f32.mrb[0].mxu0
  %3137 = vmatprep.mubr.f32.mxu0 0.0
  %3138 = vmatmul.mubr.f32.gmra.mrb[0].mxu0 %v3042
  %v3139 = vpop.f32.mrb[0].mxu0
  %v3140 = vadd.f32 %v3066, %v3139
  %v3141 = vpop.f32.mrb[0].mxu0
  %3142 = vdwg.mxu0
  %v3143 = vadd.f32 %v3135, %v2929
  %v3144 = vadd.f32 %v3140, %v2930
  %s3145 = scalar_lea.vmem %s14, 1
  %v3146 = vld [vmem:[%s3145] sm:$0x1]
  %s3147 = scalar_lea.vmem %s15, 1
  %v3148 = vld [vmem:[%s3147] sm:$0x1]
  %v3149 = vsel %vm69, %v3143, 0.0
  %3150 = vadd.xlane.f32.xlu0 %v3149
  %v3151 = vpop.xlane.xlu0 %3150
  %v3152 = vsel %vm69, %v3144, 0.0
  %3153 = vadd.xlane.f32.xlu0 %v3152
  %v3154 = vpop.xlane.xlu0 %3153
  %v3155 = vmul.f32 %v3151, %v76
  %v3156 = vmul.f32 %v3154, %v76
  %v3157 = vsub.f32 %v3143, %v3155
  %v3158 = vsub.f32 %v3144, %v3156
  %v3159 = vmul.f32 %v3157, %v3157
  %v3160 = vmul.f32 %v3158, %v3158
  %v3161 = vsel %vm69, %v3159, 0.0
  %3162 = vadd.xlane.f32.xlu0 %v3161
  %v3163 = vpop.xlane.xlu0 %3162
  %v3164 = vsel %vm69, %v3160, 0.0
  %3165 = vadd.xlane.f32.xlu0 %v3164
  %v3166 = vpop.xlane.xlu0 %3165
  %v3167 = vmul.f32 %v3163, %v76
  %v3168 = vmul.f32 %v3166, %v76
  %v3169 = vadd.f32 %v3167, 1e-12
  %v3170 = vadd.f32 %v3168, 1e-12
  %v3171 = vrsqrt.pop %v3169
  %v3172 = vrsqrt.pop %v3170
  %v3173 = vmul.f32 %v3157, %v3171
  %v3174 = vmul.f32 %v3158, %v3172
  %v3176 = vlaneseq
  %v3177 = vshrl.u32 %v3176, 7
  %v3178 = vsub.s32 0, %v3177
  %v3179 = vrot.slane %v3146, %v3178
  %v3181 = vmul.f32 %v3173, %v3179
  %v3182 = vmul.f32 %v3174, %v3179
  %v3184 = vlaneseq
  %v3185 = vshrl.u32 %v3184, 7
  %v3186 = vsub.s32 0, %v3185
  %v3187 = vrot.slane %v3148, %v3186
  %v3189 = vadd.f32 %v3181, %v3187
  %v3190 = vadd.f32 %v3182, %v3187
  %v3191 = vld [vmem:[%s16] sm:$0xff]
  %v3192 = vld [vmem:[%s16 + $0x8] sm:$0xff]
  %v3193 = vld [vmem:[%s16 + $0x10] sm:$0xff]
  %v3194 = vld [vmem:[%s16 + $0x18] sm:$0xff]
  %v3195 = vld [vmem:[%s17] sm:$0x1]
  %v3197 = vlaneseq
  %v3198 = vshrl.u32 %v3197, 7
  %v3199 = vsub.s32 0, %v3198
  %v3200 = vrot.slane %v3195, %v3199
  %v3203 = vsel %vm69, %v3189, 0
  %v3206 = vsel %vm69, %v3190, 0
  %3208 = vmatprep.subr.mxu0 0.0
  %3209 = vmatpush1.msra.mxu0 %v3191
  %3210 = vmatprep.subr.mxu0 0.0
  %3211 = vmatpush1.msra.mxu0 %v3192
  %3212 = vmatprep.subr.mxu0 0.0
  %3213 = vmatpush1.msra.mxu0 %v3193
  %3214 = vmatprep.subr.mxu0 0.0
  %3215 = vmatpush1.msra.mxu0 %v3194
  %3216 = vmatprep.subr.mxu0 0.0
  %3217 = vmatpush1.msra.mxu0 0.0
  %3218 = vmatprep.subr.mxu0 0.0
  %3219 = vmatpush1.msra.mxu0 0.0
  %3220 = vmatprep.subr.mxu0 0.0
  %3221 = vmatpush1.msra.mxu0 0.0
  %3222 = vmatprep.subr.mxu0 0.0
  %3223 = vmatpush1.msra.mxu0 0.0
  %3224 = vmatprep.subr.mxu0 0.0
  %3225 = vmatpush1.msra.mxu0 0.0
  %3226 = vmatprep.subr.mxu0 0.0
  %3227 = vmatpush1.msra.mxu0 0.0
  %3228 = vmatprep.subr.mxu0 0.0
  %3229 = vmatpush1.msra.mxu0 0.0
  %3230 = vmatprep.subr.mxu0 0.0
  %3231 = vmatpush1.msra.mxu0 0.0
  %3232 = vmatprep.subr.mxu0 0.0
  %3233 = vmatpush1.msra.mxu0 0.0
  %3234 = vmatprep.subr.mxu0 0.0
  %3235 = vmatpush1.msra.mxu0 0.0
  %3236 = vmatprep.subr.mxu0 0.0
  %3237 = vmatpush1.msra.mxu0 0.0
  %3238 = vmatprep.subr.mxu0 0.0
  %3239 = vmatpush1.msra.mxu0 0.0
  %3240 = vmatprep.subr.mxu0 0.0
  %3241 = vmatpush1.msra.mxu0 0.0
  %3242 = vmatprep.subr.mxu0 0.0
  %3243 = vmatpush1.msra.mxu0 0.0
  %3244 = vmatprep.subr.mxu0 0.0
  %3245 = vmatpush1.msra.mxu0 0.0
  %3246 = vmatprep.subr.mxu0 0.0
  %3247 = vmatpush1.msra.mxu0 0.0
  %3248 = vmatprep.subr.mxu0 0.0
  %3249 = vmatpush1.msra.mxu0 0.0
  %3250 = vmatprep.subr.mxu0 0.0
  %3251 = vmatpush1.msra.mxu0 0.0
  %3252 = vmatprep.subr.mxu0 0.0
  %3253 = vmatpush1.msra.mxu0 0.0
  %3254 = vmatprep.subr.mxu0 0.0
  %3255 = vmatpush1.msra.mxu0 0.0
  %3256 = vmatprep.subr.mxu0 0.0
  %3257 = vmatpush1.msra.mxu0 0.0
  %3258 = vmatprep.subr.mxu0 0.0
  %3259 = vmatpush1.msra.mxu0 0.0
  %3260 = vmatprep.subr.mxu0 0.0
  %3261 = vmatpush1.msra.mxu0 0.0
  %3262 = vmatprep.subr.mxu0 0.0
  %3263 = vmatpush1.msra.mxu0 0.0
  %3264 = vmatprep.subr.mxu0 0.0
  %3265 = vmatpush1.msra.mxu0 0.0
  %3266 = vmatprep.subr.mxu0 0.0
  %3267 = vmatpush1.msra.mxu0 0.0
  %3268 = vmatprep.subr.mxu0 0.0
  %3269 = vmatpush1.msra.mxu0 0.0
  %3270 = vmatprep.subr.mxu0 0.0
  %3271 = vmatpush1.msra.mxu0 0.0
  %3272 = vmatprep.mubr.f32.mxu0 0.0
  %3273 = vmatmul.mubr.f32.gmra.mrb[0].mxu0 %v3203
  %v3274 = vpop.f32.mrb[0].mxu0
  %v3275 = vadd.f32 %v3200, %v3274
  %v3276 = vpop.f32.mrb[0].mxu0
  %3277 = vmatprep.mubr.f32.mxu0 0.0
  %3278 = vmatmul.mubr.f32.gmra.mrb[0].mxu0 %v3206
  %v3279 = vpop.f32.mrb[0].mxu0
  %v3280 = vadd.f32 %v3200, %v3279
  %v3281 = vpop.f32.mrb[0].mxu0
  %3282 = vdwg.mxu0
  %v3283 = vtanh.pop %v3275
  %v3284 = vtanh.pop %v3280
  %v3285 = vld [vmem:[%s18] sm:$0xff]
  %v3286 = vld [vmem:[%s18 + $0x8] sm:$0xff]
  %v3287 = vld [vmem:[%s18 + $0x10] sm:$0xff]
  %v3288 = vld [vmem:[%s18 + $0x18] sm:$0xff]
  %v3289 = vld [vmem:[%s19] sm:$0x1]
  %v3291 = vlaneseq
  %v3292 = vshrl.u32 %v3291, 7
  %v3293 = vsub.s32 0, %v3292
  %v3294 = vrot.slane %v3289, %v3293
  %v3297 = vsel %vm69, %v3283, 0
  %v3300 = vsel %vm69, %v3284, 0
  %3302 = vmatprep.subr.mxu0 0.0
  %3303 = vmatpush1.msra.mxu0 %v3285
  %3304 = vmatprep.subr.mxu0 0.0
  %3305 = vmatpush1.msra.mxu0 %v3286
  %3306 = vmatprep.subr.mxu0 0.0
  %3307 = vmatpush1.msra.mxu0 %v3287
  %3308 = vmatprep.subr.mxu0 0.0
  %3309 = vmatpush1.msra.mxu0 %v3288
  %3310 = vmatprep.subr.mxu0 0.0
  %3311 = vmatpush1.msra.mxu0 0.0
  %3312 = vmatprep.subr.mxu0 0.0
  %3313 = vmatpush1.msra.mxu0 0.0
  %3314 = vmatprep.subr.mxu0 0.0
  %3315 = vmatpush1.msra.mxu0 0.0
  %3316 = vmatprep.subr.mxu0 0.0
  %3317 = vmatpush1.msra.mxu0 0.0
  %3318 = vmatprep.subr.mxu0 0.0
  %3319 = vmatpush1.msra.mxu0 0.0
  %3320 = vmatprep.subr.mxu0 0.0
  %3321 = vmatpush1.msra.mxu0 0.0
  %3322 = vmatprep.subr.mxu0 0.0
  %3323 = vmatpush1.msra.mxu0 0.0
  %3324 = vmatprep.subr.mxu0 0.0
  %3325 = vmatpush1.msra.mxu0 0.0
  %3326 = vmatprep.subr.mxu0 0.0
  %3327 = vmatpush1.msra.mxu0 0.0
  %3328 = vmatprep.subr.mxu0 0.0
  %3329 = vmatpush1.msra.mxu0 0.0
  %3330 = vmatprep.subr.mxu0 0.0
  %3331 = vmatpush1.msra.mxu0 0.0
  %3332 = vmatprep.subr.mxu0 0.0
  %3333 = vmatpush1.msra.mxu0 0.0
  %3334 = vmatprep.subr.mxu0 0.0
  %3335 = vmatpush1.msra.mxu0 0.0
  %3336 = vmatprep.subr.mxu0 0.0
  %3337 = vmatpush1.msra.mxu0 0.0
  %3338 = vmatprep.subr.mxu0 0.0
  %3339 = vmatpush1.msra.mxu0 0.0
  %3340 = vmatprep.subr.mxu0 0.0
  %3341 = vmatpush1.msra.mxu0 0.0
  %3342 = vmatprep.subr.mxu0 0.0
  %3343 = vmatpush1.msra.mxu0 0.0
  %3344 = vmatprep.subr.mxu0 0.0
  %3345 = vmatpush1.msra.mxu0 0.0
  %3346 = vmatprep.subr.mxu0 0.0
  %3347 = vmatpush1.msra.mxu0 0.0
  %3348 = vmatprep.subr.mxu0 0.0
  %3349 = vmatpush1.msra.mxu0 0.0
  %3350 = vmatprep.subr.mxu0 0.0
  %3351 = vmatpush1.msra.mxu0 0.0
  %3352 = vmatprep.subr.mxu0 0.0
  %3353 = vmatpush1.msra.mxu0 0.0
  %3354 = vmatprep.subr.mxu0 0.0
  %3355 = vmatpush1.msra.mxu0 0.0
  %3356 = vmatprep.subr.mxu0 0.0
  %3357 = vmatpush1.msra.mxu0 0.0
  %3358 = vmatprep.subr.mxu0 0.0
  %3359 = vmatpush1.msra.mxu0 0.0
  %3360 = vmatprep.subr.mxu0 0.0
  %3361 = vmatpush1.msra.mxu0 0.0
  %3362 = vmatprep.subr.mxu0 0.0
  %3363 = vmatpush1.msra.mxu0 0.0
  %3364 = vmatprep.subr.mxu0 0.0
  %3365 = vmatpush1.msra.mxu0 0.0
  %3366 = vmatprep.mubr.f32.mxu0 0.0
  %3367 = vmatmul.mubr.f32.gmra.mrb[0].mxu0 %v3297
  %v3368 = vpop.f32.mrb[0].mxu0
  %v3369 = vadd.f32 %v3294, %v3368
  %v3370 = vpop.f32.mrb[0].mxu0
  %3371 = vmatprep.mubr.f32.mxu0 0.0
  %3372 = vmatmul.mubr.f32.gmra.mrb[0].mxu0 %v3300
  %v3373 = vpop.f32.mrb[0].mxu0
  %v3374 = vadd.f32 %v3294, %v3373
  %v3375 = vpop.f32.mrb[0].mxu0
  %3376 = vdwg.mxu0
  %3377 = vst [vmem:[%s20] sm:$0xff] %v3369
  %3378 = vst [vmem:[%s20 + $0x8] sm:$0xff] %v3374
  // Predicated region
  $region82: #{classifier_forward.1} parent=0 // pred_check
    _
  $region83: #{classifier_forward.1} parent=0 // pred_check_branch
    %3380 = sbr.rel (0) target = $region85
  $region84: #{classifier_forward.1} parent=0 // pred_region
    _
  $region85: #{classifier_forward.1} parent=0 // pred_fallthru
    _
  // Predicated region
  $region86: #{classifier_forward.1} parent=0 // pred_check
    _
  $region87: #{classifier_forward.1} parent=0 // pred_check_branch
    %3382 = sbr.rel (0) target = $region89
  $region88: #{classifier_forward.1} parent=0 // pred_region
    _
  $region89: #{classifier_forward.1} parent=0 // pred_fallthru
    _

</llo_original>
